<compile_context>
chip_gen: v7x
topology: tpu7x:2x2x1
jax: 0.10.0
libtpu: 0.0.40
codegen_flags: <defaults>
</compile_context>

<pallas_src>
import jax
import jax.numpy as jnp
from jax.experimental import pallas as pl
from jax.experimental.pallas import tpu as pltpu

# ---- small synthetic BERT config (stand-in for bert-base-chinese) ----
VOCAB = 128
HIDDEN = 64
N_LAYERS = 2
N_HEADS = 4
HEAD_DIM = HIDDEN // N_HEADS
INTERMEDIATE = 128
MAX_POS = 32
TYPE_VOCAB = 2
N_CLASSES = 36
FC_PAD = 128            # lane-dense classifier output; slice to 36 in JAX
LN_EPS = 1e-12
INIT_RANGE = 0.02
NEG_INF = -1e9


# ============================ fused encoder kernel ============================

def _encoder_kernel(emb_ref, bias_ref, eg_ref, eb_ref,
                    qkvw_ref, qkvb_ref, ow_ref, ob_ref,
                    l1g_ref, l1b_ref, iw_ref, ib_ref,
                    fw_ref, fb_ref, l2g_ref, l2b_ref,
                    fcw_ref, fcb_ref, out_ref):
    """Whole encoder + classifier in one grid step; everything VMEM-resident."""
    M = emb_ref.shape[0]

    def ln(x, g, b):
        mean = jnp.mean(x, axis=-1, keepdims=True)
        xc = x - mean
        var = jnp.mean(xc * xc, axis=-1, keepdims=True)
        return xc * jax.lax.rsqrt(var + LN_EPS) * g + b

    def mm(x, w):
        # f32 activations -> bf16, bf16 weights (pre-cast in JAX), f32 MXU accumulation
        return jnp.dot(x.astype(jnp.bfloat16), w, preferred_element_type=jnp.float32)

    bias = bias_ref[...]                                    # (M, M) additive mask
    scale = jnp.float32(1.0 / (HEAD_DIM ** 0.5))

    # embedding LayerNorm (embedding dropout p=0.1 -> identity in eval mode)
    h = ln(emb_ref[...], eg_ref[...], eb_ref[...])          # (M, H) f32

    for l in range(N_LAYERS):                               # static unrolled loop
        # ---- fused QKV projection: (M, H) @ (H, 3H) ----
        qkv = mm(h, qkvw_ref[l]) + qkvb_ref[l]              # (M, 3H) f32
        ow_l = ow_ref[l]                                    # (H, H) bf16

        # ---- self-attention, all batch*heads in this one grid step ----
        # Each head's context is pushed straight through its slice of the output
        # projection into a single f32 accumulator (no concatenate / lane shuffles).
        acc = jnp.zeros((M, HIDDEN), jnp.float32)
        for hh in range(N_HEADS):
            qh = qkv[:, hh * HEAD_DIM:(hh + 1) * HEAD_DIM]
            kh = qkv[:, HIDDEN + hh * HEAD_DIM:HIDDEN + (hh + 1) * HEAD_DIM]
            vh = qkv[:, 2 * HIDDEN + hh * HEAD_DIM:2 * HIDDEN + (hh + 1) * HEAD_DIM]
            s = jax.lax.dot_general(
                qh.astype(jnp.bfloat16), kh.astype(jnp.bfloat16),
                dimension_numbers=(((1,), (1,)), ((), ())),
                preferred_element_type=jnp.float32)         # (M, M)
            s = s * scale + bias                            # batch-block + padding mask
            mx = jnp.max(s, axis=-1, keepdims=True)
            p = jnp.exp(s - mx)
            inv = pl.reciprocal(jnp.sum(p, axis=-1, keepdims=True), approx=True)
            p = p * inv
            ctx_h = jnp.dot(p.astype(jnp.bfloat16), vh.astype(jnp.bfloat16),
                            preferred_element_type=jnp.float32)          # (M, Dh)
            acc = acc + jnp.dot(ctx_h.astype(jnp.bfloat16),
                                ow_l[hh * HEAD_DIM:(hh + 1) * HEAD_DIM, :],
                                preferred_element_type=jnp.float32)      # (M, H)

        attn_out = acc + ob_ref[l]
        h = ln(attn_out + h, l1g_ref[l], l1b_ref[l])        # attn dropout -> identity

        # ---- feed-forward ----
        inter = mm(h, iw_ref[l]) + ib_ref[l]                # (M, I) f32
        # TODO(synk): HF BERT uses exact erf-GELU; tanh approximation used here.
        c = jnp.float32(0.7978845608028654)                 # sqrt(2/pi)
        inter = 0.5 * inter * (1.0 + jnp.tanh(c * (inter + 0.044715 * inter * inter * inter)))
        ffn = mm(inter, fw_ref[l]) + fb_ref[l]
        h = ln(ffn + h, l2g_ref[l], l2b_ref[l])             # ffn dropout -> identity

    # classifier head (dropout p=0.1 -> identity in eval); lane-dense padded to 128
    out_ref[...] = (mm(h, fcw_ref[...]) + fcb_ref[...]).astype(out_ref.dtype)


# ============================ parameters ============================

def init_params(key):
    ks = jax.random.split(key, 8)

    def nrm(k, shape):
        return jax.random.normal(k, shape, jnp.float32) * INIT_RANGE

    bf = jnp.bfloat16
    p = {
        "word_emb": nrm(ks[0], (VOCAB, HIDDEN)),
        "pos_emb": nrm(ks[1], (MAX_POS, HIDDEN)),
        "type_emb": nrm(ks[2], (TYPE_VOCAB, HIDDEN)),
        "emb_ln_g": jnp.ones((1, HIDDEN), jnp.float32),
        "emb_ln_b": jnp.zeros((1, HIDDEN), jnp.float32),
        # per-layer matmul weights stacked on a leading layer axis, pre-cast to bf16
        # (half the VMEM footprint, no per-use in-kernel weight casts)
        "qkv_w": nrm(ks[3], (N_LAYERS, HIDDEN, 3 * HIDDEN)).astype(bf),   # fused q|k|v
        "qkv_b": jnp.zeros((N_LAYERS, 1, 3 * HIDDEN), jnp.float32),
        "o_w": nrm(ks[4], (N_LAYERS, HIDDEN, HIDDEN)).astype(bf),
        "o_b": jnp.zeros((N_LAYERS, 1, HIDDEN), jnp.float32),
        "ln1_g": jnp.ones((N_LAYERS, 1, HIDDEN), jnp.float32),
        "ln1_b": jnp.zeros((N_LAYERS, 1, HIDDEN), jnp.float32),
        "i_w": nrm(ks[5], (N_LAYERS, HIDDEN, INTERMEDIATE)).astype(bf),
        "i_b": jnp.zeros((N_LAYERS, 1, INTERMEDIATE), jnp.float32),
        "f_w": nrm(ks[6], (N_LAYERS, INTERMEDIATE, HIDDEN)).astype(bf),
        "f_b": jnp.zeros((N_LAYERS, 1, HIDDEN), jnp.float32),
        "ln2_g": jnp.ones((N_LAYERS, 1, HIDDEN), jnp.float32),
        "ln2_b": jnp.zeros((N_LAYERS, 1, HIDDEN), jnp.float32),
    }
    # Linear(hidden_size, 36): weight ~ N(0, initializer_range), bias zero;
    # padded to 128 output lanes for unmasked lane-dense stores (extra lanes zero).
    fc_w = nrm(ks[7], (HIDDEN, N_CLASSES))
    p["fc_w_pad"] = (jnp.zeros((HIDDEN, FC_PAD), jnp.float32)
                     .at[:, :N_CLASSES].set(fc_w)).astype(bf)
    p["fc_b_pad"] = jnp.zeros((1, FC_PAD), jnp.float32)
    return p


# ============================ forward pass ============================

def baseline_forward(params, ids, mask):
    """ids, mask: (B, S) int32. Returns logits (B, 36)."""
    B, S = ids.shape
    M = B * S

    # --- embeddings (gather is JAX glue; sums are tiny elementwise ops) ---
    word = params["word_emb"][ids]                          # (B, S, H)
    pos = params["pos_emb"][:S]                             # (S, H)
    tok = params["type_emb"][0]                             # (H,)  token_type_ids = 0
    emb = (word + pos[None, :, :] + tok[None, None, :]).reshape(M, HIDDEN)
    emb = emb.astype(jnp.float32)

    # Combined additive attention bias over the flattened (B*S) token axis:
    # 0 where (same batch AND key token unmasked), -1e9 otherwise. The batch
    # block-diagonal keeps sequences from attending across batch entries.
    batch_idx = jnp.arange(M) // S
    valid = mask.reshape(M) > 0
    allowed = (batch_idx[:, None] == batch_idx[None, :]) & valid[None, :]
    attn_bias = jnp.where(allowed, 0.0, NEG_INF).astype(jnp.float32)
    # NOTE: a fully-padded sequence would get a uniform softmax row (meaningless
    # but finite); fine for CLS-only usage.

    inputs = (emb, attn_bias,
              params["emb_ln_g"], params["emb_ln_b"],
              params["qkv_w"], params["qkv_b"],
              params["o_w"], params["o_b"],
              params["ln1_g"], params["ln1_b"],
              params["i_w"], params["i_b"],
              params["f_w"], params["f_b"],
              params["ln2_g"], params["ln2_b"],
              params["fc_w_pad"], params["fc_b_pad"])

    def full_spec(a):
        nd = a.ndim
        return pl.BlockSpec(a.shape, lambda i, _nd=nd: (0,) * _nd)

    out = pl.pallas_call(
        _encoder_kernel,
        out_shape=jax.ShapeDtypeStruct((M, FC_PAD), jnp.float32),
        grid=(1,),
        in_specs=[full_spec(a) for a in inputs],
        out_specs=pl.BlockSpec((M, FC_PAD), lambda i: (0, 0)),
        compiler_params=pltpu.CompilerParams(
            dimension_semantics=("arbitrary",)),
    )(*inputs)

    # Every token row went through the classifier; keep only CLS rows and the
    # 36 real classes (matches out[0][:, 0, :] -> dropout -> fc of the spec).
    logits = out.reshape(B, S, FC_PAD)[:, 0, :N_CLASSES]    # (B, 36)
    return logits


# ============================ demo ============================

if __name__ == "__main__":
    key = jax.random.PRNGKey(0)
    pkey, ikey = jax.random.split(key)
    params = init_params(pkey)

    B, S = 2, 8
    ids = jax.random.randint(ikey, (B, S), 0, VOCAB, dtype=jnp.int32)
    mask = jnp.ones((B, S), jnp.int32)
    mask = mask.at[1, 6:].set(0)  # some padding in the second sequence

    fwd = jax.jit(baseline_forward)
    logits = fwd(params, ids, mask)
    jax.block_until_ready(logits)
    assert logits.shape == (B, N_CLASSES)
    assert bool(jnp.all(jnp.isfinite(logits)))
    print("KERNEL_OK")
</pallas_src>

<mosaic_0001>
module attributes {stable_mosaic.version = 11 : i64} {
  func.func @_encoder_kernel(%arg0: i32, %arg1: memref<16x64xf32, #tpu.memory_space<vmem>>, %arg2: memref<16x16xf32, #tpu.memory_space<vmem>>, %arg3: memref<1x64xf32, #tpu.memory_space<vmem>>, %arg4: memref<1x64xf32, #tpu.memory_space<vmem>>, %arg5: memref<2x64x192xbf16, #tpu.memory_space<vmem>>, %arg6: memref<2x1x192xf32, #tpu.memory_space<vmem>>, %arg7: memref<2x64x64xbf16, #tpu.memory_space<vmem>>, %arg8: memref<2x1x64xf32, #tpu.memory_space<vmem>>, %arg9: memref<2x1x64xf32, #tpu.memory_space<vmem>>, %arg10: memref<2x1x64xf32, #tpu.memory_space<vmem>>, %arg11: memref<2x64x128xbf16, #tpu.memory_space<vmem>>, %arg12: memref<2x1x128xf32, #tpu.memory_space<vmem>>, %arg13: memref<2x128x64xbf16, #tpu.memory_space<vmem>>, %arg14: memref<2x1x64xf32, #tpu.memory_space<vmem>>, %arg15: memref<2x1x64xf32, #tpu.memory_space<vmem>>, %arg16: memref<2x1x64xf32, #tpu.memory_space<vmem>>, %arg17: memref<64x128xbf16, #tpu.memory_space<vmem>>, %arg18: memref<1x128xf32, #tpu.memory_space<vmem>>, %arg19: memref<16x128xf32, #tpu.memory_space<vmem>>) attributes {dimension_semantics = [#tpu.dimension_semantics<arbitrary>], iteration_bounds = array<i64: 1>, scalar_prefetch = 0 : i64, scratch_operands = 0 : i64, tpu.core_type = #tpu.core_type<tc>, window_params = [{pipeline_mode = #tpu.pipeline_mode<synchronous>, transform_indices = @transform_0, window_bounds = array<i64: 16, 64>}, {pipeline_mode = #tpu.pipeline_mode<synchronous>, transform_indices = @transform_1, window_bounds = array<i64: 16, 16>}, {pipeline_mode = #tpu.pipeline_mode<synchronous>, transform_indices = @transform_2, window_bounds = array<i64: 1, 64>}, {pipeline_mode = #tpu.pipeline_mode<synchronous>, transform_indices = @transform_3, window_bounds = array<i64: 1, 64>}, {pipeline_mode = #tpu.pipeline_mode<synchronous>, transform_indices = @transform_4, window_bounds = array<i64: 2, 64, 192>}, {pipeline_mode = #tpu.pipeline_mode<synchronous>, transform_indices = @transform_5, window_bounds = array<i64: 2, 1, 192>}, {pipeline_mode = #tpu.pipeline_mode<synchronous>, transform_indices = @transform_6, window_bounds = array<i64: 2, 64, 64>}, {pipeline_mode = #tpu.pipeline_mode<synchronous>, transform_indices = @transform_7, window_bounds = array<i64: 2, 1, 64>}, {pipeline_mode = #tpu.pipeline_mode<synchronous>, transform_indices = @transform_8, window_bounds = array<i64: 2, 1, 64>}, {pipeline_mode = #tpu.pipeline_mode<synchronous>, transform_indices = @transform_9, window_bounds = array<i64: 2, 1, 64>}, {pipeline_mode = #tpu.pipeline_mode<synchronous>, transform_indices = @transform_10, window_bounds = array<i64: 2, 64, 128>}, {pipeline_mode = #tpu.pipeline_mode<synchronous>, transform_indices = @transform_11, window_bounds = array<i64: 2, 1, 128>}, {pipeline_mode = #tpu.pipeline_mode<synchronous>, transform_indices = @transform_12, window_bounds = array<i64: 2, 128, 64>}, {pipeline_mode = #tpu.pipeline_mode<synchronous>, transform_indices = @transform_13, window_bounds = array<i64: 2, 1, 64>}, {pipeline_mode = #tpu.pipeline_mode<synchronous>, transform_indices = @transform_14, window_bounds = array<i64: 2, 1, 64>}, {pipeline_mode = #tpu.pipeline_mode<synchronous>, transform_indices = @transform_15, window_bounds = array<i64: 2, 1, 64>}, {pipeline_mode = #tpu.pipeline_mode<synchronous>, transform_indices = @transform_16, window_bounds = array<i64: 64, 128>}, {pipeline_mode = #tpu.pipeline_mode<synchronous>, transform_indices = @transform_17, window_bounds = array<i64: 1, 128>}, {pipeline_mode = #tpu.pipeline_mode<synchronous>, transform_indices = @transform_18, window_bounds = array<i64: 16, 128>}]} {
    %c0 = arith.constant 0 : index
    %c0_0 = arith.constant 0 : index
    %0 = vector.load %arg2[%c0, %c0_0] : memref<16x16xf32, #tpu.memory_space<vmem>>, vector<16x16xf32>
    %c0_1 = arith.constant 0 : index
    %c0_2 = arith.constant 0 : index
    %1 = vector.load %arg1[%c0_1, %c0_2] : memref<16x64xf32, #tpu.memory_space<vmem>>, vector<16x64xf32>
    %c0_3 = arith.constant 0 : index
    %c0_4 = arith.constant 0 : index
    %2 = vector.load %arg3[%c0_3, %c0_4] : memref<1x64xf32, #tpu.memory_space<vmem>>, vector<1x64xf32>
    %c0_5 = arith.constant 0 : index
    %c0_6 = arith.constant 0 : index
    %3 = vector.load %arg4[%c0_5, %c0_6] : memref<1x64xf32, #tpu.memory_space<vmem>>, vector<1x64xf32>
    %cst = arith.constant dense<0.000000e+00> : vector<16xf32>
    %4 = vector.multi_reduction <add>, %1, %cst [1] : vector<16x64xf32> to vector<16xf32>
    %5 = vector.shape_cast %4 : vector<16xf32> to vector<16x1xf32>
    %cst_7 = arith.constant 6.400000e+01 : f32
    %6 = vector.broadcast %cst_7 : f32 to vector<16x1xf32>
    %7 = arith.divf %5, %6 : vector<16x1xf32>
    %8 = vector.broadcast %7 : vector<16x1xf32> to vector<16x64xf32>
    %9 = arith.subf %1, %8 : vector<16x64xf32>
    %10 = arith.mulf %9, %9 : vector<16x64xf32>
    %cst_8 = arith.constant dense<0.000000e+00> : vector<16xf32>
    %11 = vector.multi_reduction <add>, %10, %cst_8 [1] : vector<16x64xf32> to vector<16xf32>
    %12 = vector.shape_cast %11 : vector<16xf32> to vector<16x1xf32>
    %cst_9 = arith.constant 6.400000e+01 : f32
    %13 = vector.broadcast %cst_9 : f32 to vector<16x1xf32>
    %14 = arith.divf %12, %13 : vector<16x1xf32>
    %cst_10 = arith.constant 9.99999996E-13 : f32
    %15 = vector.broadcast %cst_10 : f32 to vector<16x1xf32>
    %16 = arith.addf %14, %15 : vector<16x1xf32>
    %17 = math.rsqrt %16 : vector<16x1xf32>
    %18 = vector.broadcast %17 : vector<16x1xf32> to vector<16x64xf32>
    %19 = arith.mulf %9, %18 : vector<16x64xf32>
    %20 = vector.broadcast %2 : vector<1x64xf32> to vector<16x64xf32>
    %21 = arith.mulf %19, %20 : vector<16x64xf32>
    %22 = vector.broadcast %3 : vector<1x64xf32> to vector<16x64xf32>
    %23 = arith.addf %21, %22 : vector<16x64xf32>
    %c0_11 = arith.constant 0 : index
    %c0_12 = arith.constant 0 : index
    %c0_13 = arith.constant 0 : index
    %24 = vector.load %arg5[%c0_11, %c0_12, %c0_13] : memref<2x64x192xbf16, #tpu.memory_space<vmem>>, vector<1x64x192xbf16>
    %25 = vector.shape_cast %24 : vector<1x64x192xbf16> to vector<64x192xbf16>
    %26 = arith.truncf %23 : vector<16x64xf32> to vector<16x64xbf16>
    %cst_14 = arith.constant dense<0.000000e+00> : vector<16x192xf32>
    %27 = tpu.matmul %26, %25, %cst_14 {dimension_numbers = #tpu.dot_dimension_numbers<[1], [0], [0], [1], [0, 0, 1, 1], [], []>} : vector<16x64xbf16>, vector<64x192xbf16>, vector<16x192xf32> -> vector<16x192xf32>
    %c0_15 = arith.constant 0 : index
    %c0_16 = arith.constant 0 : index
    %c0_17 = arith.constant 0 : index
    %28 = vector.load %arg6[%c0_15, %c0_16, %c0_17] : memref<2x1x192xf32, #tpu.memory_space<vmem>>, vector<1x1x192xf32>
    %29 = vector.shape_cast %28 : vector<1x1x192xf32> to vector<1x192xf32>
    %30 = vector.broadcast %29 : vector<1x192xf32> to vector<16x192xf32>
    %31 = arith.addf %27, %30 : vector<16x192xf32>
    %c0_18 = arith.constant 0 : index
    %c0_19 = arith.constant 0 : index
    %c0_20 = arith.constant 0 : index
    %32 = vector.load %arg7[%c0_18, %c0_19, %c0_20] : memref<2x64x64xbf16, #tpu.memory_space<vmem>>, vector<1x64x64xbf16>
    %33 = vector.shape_cast %32 : vector<1x64x64xbf16> to vector<64x64xbf16>
    %cst_21 = arith.constant 0.000000e+00 : f32
    %34 = vector.broadcast %cst_21 : f32 to vector<16x64xf32>
    %35 = vector.extract_strided_slice %31 {offsets = [0, 0], sizes = [16, 16], strides = [1, 1]} : vector<16x192xf32> to vector<16x16xf32>
    %36 = vector.extract_strided_slice %31 {offsets = [0, 64], sizes = [16, 16], strides = [1, 1]} : vector<16x192xf32> to vector<16x16xf32>
    %37 = vector.extract_strided_slice %31 {offsets = [0, 128], sizes = [16, 16], strides = [1, 1]} : vector<16x192xf32> to vector<16x16xf32>
    %38 = arith.truncf %35 : vector<16x16xf32> to vector<16x16xbf16>
    %39 = arith.truncf %36 : vector<16x16xf32> to vector<16x16xbf16>
    %cst_22 = arith.constant dense<0.000000e+00> : vector<16x16xf32>
    %40 = tpu.matmul %38, %39, %cst_22 {dimension_numbers = #tpu.dot_dimension_numbers<[1], [1], [0], [0], [0, 0, 1, 0], [], []>} : vector<16x16xbf16>, vector<16x16xbf16>, vector<16x16xf32> -> vector<16x16xf32>
    %cst_23 = arith.constant 2.500000e-01 : f32
    %41 = vector.broadcast %cst_23 : f32 to vector<16x16xf32>
    %42 = arith.mulf %40, %41 : vector<16x16xf32>
    %43 = arith.addf %42, %0 : vector<16x16xf32>
    %cst_24 = arith.constant dense<0xFF800000> : vector<16xf32>
    %44 = vector.multi_reduction <maximumf>, %43, %cst_24 [1] : vector<16x16xf32> to vector<16xf32>
    %45 = vector.shape_cast %44 : vector<16xf32> to vector<16x1xf32>
    %46 = vector.broadcast %45 : vector<16x1xf32> to vector<16x16xf32>
    %47 = arith.subf %43, %46 : vector<16x16xf32>
    %48 = math.exp %47 : vector<16x16xf32>
    %cst_25 = arith.constant dense<0.000000e+00> : vector<16xf32>
    %49 = vector.multi_reduction <add>, %48, %cst_25 [1] : vector<16x16xf32> to vector<16xf32>
    %50 = vector.shape_cast %49 : vector<16xf32> to vector<16x1xf32>
    %51 = tpu.reciprocal %50 {approx = true} : vector<16x1xf32> -> vector<16x1xf32>
    %52 = vector.broadcast %51 : vector<16x1xf32> to vector<16x16xf32>
    %53 = arith.mulf %48, %52 : vector<16x16xf32>
    %54 = arith.truncf %53 : vector<16x16xf32> to vector<16x16xbf16>
    %55 = arith.truncf %37 : vector<16x16xf32> to vector<16x16xbf16>
    %cst_26 = arith.constant dense<0.000000e+00> : vector<16x16xf32>
    %56 = tpu.matmul %54, %55, %cst_26 {dimension_numbers = #tpu.dot_dimension_numbers<[1], [0], [0], [1], [0, 0, 1, 1], [], []>} : vector<16x16xbf16>, vector<16x16xbf16>, vector<16x16xf32> -> vector<16x16xf32>
    %57 = arith.truncf %56 : vector<16x16xf32> to vector<16x16xbf16>
    %58 = vector.extract_strided_slice %33 {offsets = [0, 0], sizes = [16, 64], strides = [1, 1]} : vector<64x64xbf16> to vector<16x64xbf16>
    %cst_27 = arith.constant dense<0.000000e+00> : vector<16x64xf32>
    %59 = tpu.matmul %57, %58, %cst_27 {dimension_numbers = #tpu.dot_dimension_numbers<[1], [0], [0], [1], [0, 0, 1, 1], [], []>} : vector<16x16xbf16>, vector<16x64xbf16>, vector<16x64xf32> -> vector<16x64xf32>
    %60 = arith.addf %34, %59 : vector<16x64xf32>
    %61 = vector.extract_strided_slice %31 {offsets = [0, 16], sizes = [16, 16], strides = [1, 1]} : vector<16x192xf32> to vector<16x16xf32>
    %62 = vector.extract_strided_slice %31 {offsets = [0, 80], sizes = [16, 16], strides = [1, 1]} : vector<16x192xf32> to vector<16x16xf32>
    %63 = vector.extract_strided_slice %31 {offsets = [0, 144], sizes = [16, 16], strides = [1, 1]} : vector<16x192xf32> to vector<16x16xf32>
    %64 = arith.truncf %61 : vector<16x16xf32> to vector<16x16xbf16>
    %65 = arith.truncf %62 : vector<16x16xf32> to vector<16x16xbf16>
    %cst_28 = arith.constant dense<0.000000e+00> : vector<16x16xf32>
    %66 = tpu.matmul %64, %65, %cst_28 {dimension_numbers = #tpu.dot_dimension_numbers<[1], [1], [0], [0], [0, 0, 1, 0], [], []>} : vector<16x16xbf16>, vector<16x16xbf16>, vector<16x16xf32> -> vector<16x16xf32>
    %cst_29 = arith.constant 2.500000e-01 : f32
    %67 = vector.broadcast %cst_29 : f32 to vector<16x16xf32>
    %68 = arith.mulf %66, %67 : vector<16x16xf32>
    %69 = arith.addf %68, %0 : vector<16x16xf32>
    %cst_30 = arith.constant dense<0xFF800000> : vector<16xf32>
    %70 = vector.multi_reduction <maximumf>, %69, %cst_30 [1] : vector<16x16xf32> to vector<16xf32>
    %71 = vector.shape_cast %70 : vector<16xf32> to vector<16x1xf32>
    %72 = vector.broadcast %71 : vector<16x1xf32> to vector<16x16xf32>
    %73 = arith.subf %69, %72 : vector<16x16xf32>
    %74 = math.exp %73 : vector<16x16xf32>
    %cst_31 = arith.constant dense<0.000000e+00> : vector<16xf32>
    %75 = vector.multi_reduction <add>, %74, %cst_31 [1] : vector<16x16xf32> to vector<16xf32>
    %76 = vector.shape_cast %75 : vector<16xf32> to vector<16x1xf32>
    %77 = tpu.reciprocal %76 {approx = true} : vector<16x1xf32> -> vector<16x1xf32>
    %78 = vector.broadcast %77 : vector<16x1xf32> to vector<16x16xf32>
    %79 = arith.mulf %74, %78 : vector<16x16xf32>
    %80 = arith.truncf %79 : vector<16x16xf32> to vector<16x16xbf16>
    %81 = arith.truncf %63 : vector<16x16xf32> to vector<16x16xbf16>
    %cst_32 = arith.constant dense<0.000000e+00> : vector<16x16xf32>
    %82 = tpu.matmul %80, %81, %cst_32 {dimension_numbers = #tpu.dot_dimension_numbers<[1], [0], [0], [1], [0, 0, 1, 1], [], []>} : vector<16x16xbf16>, vector<16x16xbf16>, vector<16x16xf32> -> vector<16x16xf32>
    %83 = arith.truncf %82 : vector<16x16xf32> to vector<16x16xbf16>
    %84 = vector.extract_strided_slice %33 {offsets = [16, 0], sizes = [16, 64], strides = [1, 1]} : vector<64x64xbf16> to vector<16x64xbf16>
    %cst_33 = arith.constant dense<0.000000e+00> : vector<16x64xf32>
    %85 = tpu.matmul %83, %84, %cst_33 {dimension_numbers = #tpu.dot_dimension_numbers<[1], [0], [0], [1], [0, 0, 1, 1], [], []>} : vector<16x16xbf16>, vector<16x64xbf16>, vector<16x64xf32> -> vector<16x64xf32>
    %86 = arith.addf %60, %85 : vector<16x64xf32>
    %87 = vector.extract_strided_slice %31 {offsets = [0, 32], sizes = [16, 16], strides = [1, 1]} : vector<16x192xf32> to vector<16x16xf32>
    %88 = vector.extract_strided_slice %31 {offsets = [0, 96], sizes = [16, 16], strides = [1, 1]} : vector<16x192xf32> to vector<16x16xf32>
    %89 = vector.extract_strided_slice %31 {offsets = [0, 160], sizes = [16, 16], strides = [1, 1]} : vector<16x192xf32> to vector<16x16xf32>
    %90 = arith.truncf %87 : vector<16x16xf32> to vector<16x16xbf16>
    %91 = arith.truncf %88 : vector<16x16xf32> to vector<16x16xbf16>
    %cst_34 = arith.constant dense<0.000000e+00> : vector<16x16xf32>
    %92 = tpu.matmul %90, %91, %cst_34 {dimension_numbers = #tpu.dot_dimension_numbers<[1], [1], [0], [0], [0, 0, 1, 0], [], []>} : vector<16x16xbf16>, vector<16x16xbf16>, vector<16x16xf32> -> vector<16x16xf32>
    %cst_35 = arith.constant 2.500000e-01 : f32
    %93 = vector.broadcast %cst_35 : f32 to vector<16x16xf32>
    %94 = arith.mulf %92, %93 : vector<16x16xf32>
    %95 = arith.addf %94, %0 : vector<16x16xf32>
    %cst_36 = arith.constant dense<0xFF800000> : vector<16xf32>
    %96 = vector.multi_reduction <maximumf>, %95, %cst_36 [1] : vector<16x16xf32> to vector<16xf32>
    %97 = vector.shape_cast %96 : vector<16xf32> to vector<16x1xf32>
    %98 = vector.broadcast %97 : vector<16x1xf32> to vector<16x16xf32>
    %99 = arith.subf %95, %98 : vector<16x16xf32>
    %100 = math.exp %99 : vector<16x16xf32>
    %cst_37 = arith.constant dense<0.000000e+00> : vector<16xf32>
    %101 = vector.multi_reduction <add>, %100, %cst_37 [1] : vector<16x16xf32> to vector<16xf32>
    %102 = vector.shape_cast %101 : vector<16xf32> to vector<16x1xf32>
    %103 = tpu.reciprocal %102 {approx = true} : vector<16x1xf32> -> vector<16x1xf32>
    %104 = vector.broadcast %103 : vector<16x1xf32> to vector<16x16xf32>
    %105 = arith.mulf %100, %104 : vector<16x16xf32>
    %106 = arith.truncf %105 : vector<16x16xf32> to vector<16x16xbf16>
    %107 = arith.truncf %89 : vector<16x16xf32> to vector<16x16xbf16>
    %cst_38 = arith.constant dense<0.000000e+00> : vector<16x16xf32>
    %108 = tpu.matmul %106, %107, %cst_38 {dimension_numbers = #tpu.dot_dimension_numbers<[1], [0], [0], [1], [0, 0, 1, 1], [], []>} : vector<16x16xbf16>, vector<16x16xbf16>, vector<16x16xf32> -> vector<16x16xf32>
    %109 = arith.truncf %108 : vector<16x16xf32> to vector<16x16xbf16>
    %110 = vector.extract_strided_slice %33 {offsets = [32, 0], sizes = [16, 64], strides = [1, 1]} : vector<64x64xbf16> to vector<16x64xbf16>
    %cst_39 = arith.constant dense<0.000000e+00> : vector<16x64xf32>
    %111 = tpu.matmul %109, %110, %cst_39 {dimension_numbers = #tpu.dot_dimension_numbers<[1], [0], [0], [1], [0, 0, 1, 1], [], []>} : vector<16x16xbf16>, vector<16x64xbf16>, vector<16x64xf32> -> vector<16x64xf32>
    %112 = arith.addf %86, %111 : vector<16x64xf32>
    %113 = vector.extract_strided_slice %31 {offsets = [0, 48], sizes = [16, 16], strides = [1, 1]} : vector<16x192xf32> to vector<16x16xf32>
    %114 = vector.extract_strided_slice %31 {offsets = [0, 112], sizes = [16, 16], strides = [1, 1]} : vector<16x192xf32> to vector<16x16xf32>
    %115 = vector.extract_strided_slice %31 {offsets = [0, 176], sizes = [16, 16], strides = [1, 1]} : vector<16x192xf32> to vector<16x16xf32>
    %116 = arith.truncf %113 : vector<16x16xf32> to vector<16x16xbf16>
    %117 = arith.truncf %114 : vector<16x16xf32> to vector<16x16xbf16>
    %cst_40 = arith.constant dense<0.000000e+00> : vector<16x16xf32>
    %118 = tpu.matmul %116, %117, %cst_40 {dimension_numbers = #tpu.dot_dimension_numbers<[1], [1], [0], [0], [0, 0, 1, 0], [], []>} : vector<16x16xbf16>, vector<16x16xbf16>, vector<16x16xf32> -> vector<16x16xf32>
    %cst_41 = arith.constant 2.500000e-01 : f32
    %119 = vector.broadcast %cst_41 : f32 to vector<16x16xf32>
    %120 = arith.mulf %118, %119 : vector<16x16xf32>
    %121 = arith.addf %120, %0 : vector<16x16xf32>
    %cst_42 = arith.constant dense<0xFF800000> : vector<16xf32>
    %122 = vector.multi_reduction <maximumf>, %121, %cst_42 [1] : vector<16x16xf32> to vector<16xf32>
    %123 = vector.shape_cast %122 : vector<16xf32> to vector<16x1xf32>
    %124 = vector.broadcast %123 : vector<16x1xf32> to vector<16x16xf32>
    %125 = arith.subf %121, %124 : vector<16x16xf32>
    %126 = math.exp %125 : vector<16x16xf32>
    %cst_43 = arith.constant dense<0.000000e+00> : vector<16xf32>
    %127 = vector.multi_reduction <add>, %126, %cst_43 [1] : vector<16x16xf32> to vector<16xf32>
    %128 = vector.shape_cast %127 : vector<16xf32> to vector<16x1xf32>
    %129 = tpu.reciprocal %128 {approx = true} : vector<16x1xf32> -> vector<16x1xf32>
    %130 = vector.broadcast %129 : vector<16x1xf32> to vector<16x16xf32>
    %131 = arith.mulf %126, %130 : vector<16x16xf32>
    %132 = arith.truncf %131 : vector<16x16xf32> to vector<16x16xbf16>
    %133 = arith.truncf %115 : vector<16x16xf32> to vector<16x16xbf16>
    %cst_44 = arith.constant dense<0.000000e+00> : vector<16x16xf32>
    %134 = tpu.matmul %132, %133, %cst_44 {dimension_numbers = #tpu.dot_dimension_numbers<[1], [0], [0], [1], [0, 0, 1, 1], [], []>} : vector<16x16xbf16>, vector<16x16xbf16>, vector<16x16xf32> -> vector<16x16xf32>
    %135 = arith.truncf %134 : vector<16x16xf32> to vector<16x16xbf16>
    %136 = vector.extract_strided_slice %33 {offsets = [48, 0], sizes = [16, 64], strides = [1, 1]} : vector<64x64xbf16> to vector<16x64xbf16>
    %cst_45 = arith.constant dense<0.000000e+00> : vector<16x64xf32>
    %137 = tpu.matmul %135, %136, %cst_45 {dimension_numbers = #tpu.dot_dimension_numbers<[1], [0], [0], [1], [0, 0, 1, 1], [], []>} : vector<16x16xbf16>, vector<16x64xbf16>, vector<16x64xf32> -> vector<16x64xf32>
    %138 = arith.addf %112, %137 : vector<16x64xf32>
    %c0_46 = arith.constant 0 : index
    %c0_47 = arith.constant 0 : index
    %c0_48 = arith.constant 0 : index
    %139 = vector.load %arg8[%c0_46, %c0_47, %c0_48] : memref<2x1x64xf32, #tpu.memory_space<vmem>>, vector<1x1x64xf32>
    %140 = vector.shape_cast %139 : vector<1x1x64xf32> to vector<1x64xf32>
    %141 = vector.broadcast %140 : vector<1x64xf32> to vector<16x64xf32>
    %142 = arith.addf %138, %141 : vector<16x64xf32>
    %143 = arith.addf %142, %23 : vector<16x64xf32>
    %c0_49 = arith.constant 0 : index
    %c0_50 = arith.constant 0 : index
    %c0_51 = arith.constant 0 : index
    %144 = vector.load %arg9[%c0_49, %c0_50, %c0_51] : memref<2x1x64xf32, #tpu.memory_space<vmem>>, vector<1x1x64xf32>
    %145 = vector.shape_cast %144 : vector<1x1x64xf32> to vector<1x64xf32>
    %c0_52 = arith.constant 0 : index
    %c0_53 = arith.constant 0 : index
    %c0_54 = arith.constant 0 : index
    %146 = vector.load %arg10[%c0_52, %c0_53, %c0_54] : memref<2x1x64xf32, #tpu.memory_space<vmem>>, vector<1x1x64xf32>
    %147 = vector.shape_cast %146 : vector<1x1x64xf32> to vector<1x64xf32>
    %cst_55 = arith.constant dense<0.000000e+00> : vector<16xf32>
    %148 = vector.multi_reduction <add>, %143, %cst_55 [1] : vector<16x64xf32> to vector<16xf32>
    %149 = vector.shape_cast %148 : vector<16xf32> to vector<16x1xf32>
    %cst_56 = arith.constant 6.400000e+01 : f32
    %150 = vector.broadcast %cst_56 : f32 to vector<16x1xf32>
    %151 = arith.divf %149, %150 : vector<16x1xf32>
    %152 = vector.broadcast %151 : vector<16x1xf32> to vector<16x64xf32>
    %153 = arith.subf %143, %152 : vector<16x64xf32>
    %154 = arith.mulf %153, %153 : vector<16x64xf32>
    %cst_57 = arith.constant dense<0.000000e+00> : vector<16xf32>
    %155 = vector.multi_reduction <add>, %154, %cst_57 [1] : vector<16x64xf32> to vector<16xf32>
    %156 = vector.shape_cast %155 : vector<16xf32> to vector<16x1xf32>
    %cst_58 = arith.constant 6.400000e+01 : f32
    %157 = vector.broadcast %cst_58 : f32 to vector<16x1xf32>
    %158 = arith.divf %156, %157 : vector<16x1xf32>
    %cst_59 = arith.constant 9.99999996E-13 : f32
    %159 = vector.broadcast %cst_59 : f32 to vector<16x1xf32>
    %160 = arith.addf %158, %159 : vector<16x1xf32>
    %161 = math.rsqrt %160 : vector<16x1xf32>
    %162 = vector.broadcast %161 : vector<16x1xf32> to vector<16x64xf32>
    %163 = arith.mulf %153, %162 : vector<16x64xf32>
    %164 = vector.broadcast %145 : vector<1x64xf32> to vector<16x64xf32>
    %165 = arith.mulf %163, %164 : vector<16x64xf32>
    %166 = vector.broadcast %147 : vector<1x64xf32> to vector<16x64xf32>
    %167 = arith.addf %165, %166 : vector<16x64xf32>
    %c0_60 = arith.constant 0 : index
    %c0_61 = arith.constant 0 : index
    %c0_62 = arith.constant 0 : index
    %168 = vector.load %arg11[%c0_60, %c0_61, %c0_62] : memref<2x64x128xbf16, #tpu.memory_space<vmem>>, vector<1x64x128xbf16>
    %169 = vector.shape_cast %168 : vector<1x64x128xbf16> to vector<64x128xbf16>
    %170 = arith.truncf %167 : vector<16x64xf32> to vector<16x64xbf16>
    %cst_63 = arith.constant dense<0.000000e+00> : vector<16x128xf32>
    %171 = tpu.matmul %170, %169, %cst_63 {dimension_numbers = #tpu.dot_dimension_numbers<[1], [0], [0], [1], [0, 0, 1, 1], [], []>} : vector<16x64xbf16>, vector<64x128xbf16>, vector<16x128xf32> -> vector<16x128xf32>
    %c0_64 = arith.constant 0 : index
    %c0_65 = arith.constant 0 : index
    %c0_66 = arith.constant 0 : index
    %172 = vector.load %arg12[%c0_64, %c0_65, %c0_66] : memref<2x1x128xf32, #tpu.memory_space<vmem>>, vector<1x1x128xf32>
    %173 = vector.shape_cast %172 : vector<1x1x128xf32> to vector<1x128xf32>
    %174 = vector.broadcast %173 : vector<1x128xf32> to vector<16x128xf32>
    %175 = arith.addf %171, %174 : vector<16x128xf32>
    %cst_67 = arith.constant 5.000000e-01 : f32
    %176 = vector.broadcast %cst_67 : f32 to vector<16x128xf32>
    %177 = arith.mulf %176, %175 : vector<16x128xf32>
    %cst_68 = arith.constant 4.471500e-02 : f32
    %178 = vector.broadcast %cst_68 : f32 to vector<16x128xf32>
    %179 = arith.mulf %178, %175 : vector<16x128xf32>
    %180 = arith.mulf %179, %175 : vector<16x128xf32>
    %181 = arith.mulf %180, %175 : vector<16x128xf32>
    %182 = arith.addf %175, %181 : vector<16x128xf32>
    %cst_69 = arith.constant 0.797884583 : f32
    %183 = vector.broadcast %cst_69 : f32 to vector<16x128xf32>
    %184 = arith.mulf %183, %182 : vector<16x128xf32>
    %185 = math.tanh %184 : vector<16x128xf32>
    %cst_70 = arith.constant 1.000000e+00 : f32
    %186 = vector.broadcast %cst_70 : f32 to vector<16x128xf32>
    %187 = arith.addf %186, %185 : vector<16x128xf32>
    %188 = arith.mulf %177, %187 : vector<16x128xf32>
    %c0_71 = arith.constant 0 : index
    %c0_72 = arith.constant 0 : index
    %c0_73 = arith.constant 0 : index
    %189 = vector.load %arg13[%c0_71, %c0_72, %c0_73] : memref<2x128x64xbf16, #tpu.memory_space<vmem>>, vector<1x128x64xbf16>
    %190 = vector.shape_cast %189 : vector<1x128x64xbf16> to vector<128x64xbf16>
    %191 = arith.truncf %188 : vector<16x128xf32> to vector<16x128xbf16>
    %cst_74 = arith.constant dense<0.000000e+00> : vector<16x64xf32>
    %192 = tpu.matmul %191, %190, %cst_74 {dimension_numbers = #tpu.dot_dimension_numbers<[1], [0], [0], [1], [0, 0, 1, 1], [], []>} : vector<16x128xbf16>, vector<128x64xbf16>, vector<16x64xf32> -> vector<16x64xf32>
    %c0_75 = arith.constant 0 : index
    %c0_76 = arith.constant 0 : index
    %c0_77 = arith.constant 0 : index
    %193 = vector.load %arg14[%c0_75, %c0_76, %c0_77] : memref<2x1x64xf32, #tpu.memory_space<vmem>>, vector<1x1x64xf32>
    %194 = vector.shape_cast %193 : vector<1x1x64xf32> to vector<1x64xf32>
    %195 = vector.broadcast %194 : vector<1x64xf32> to vector<16x64xf32>
    %196 = arith.addf %192, %195 : vector<16x64xf32>
    %197 = arith.addf %196, %167 : vector<16x64xf32>
    %c0_78 = arith.constant 0 : index
    %c0_79 = arith.constant 0 : index
    %c0_80 = arith.constant 0 : index
    %198 = vector.load %arg15[%c0_78, %c0_79, %c0_80] : memref<2x1x64xf32, #tpu.memory_space<vmem>>, vector<1x1x64xf32>
    %199 = vector.shape_cast %198 : vector<1x1x64xf32> to vector<1x64xf32>
    %c0_81 = arith.constant 0 : index
    %c0_82 = arith.constant 0 : index
    %c0_83 = arith.constant 0 : index
    %200 = vector.load %arg16[%c0_81, %c0_82, %c0_83] : memref<2x1x64xf32, #tpu.memory_space<vmem>>, vector<1x1x64xf32>
    %201 = vector.shape_cast %200 : vector<1x1x64xf32> to vector<1x64xf32>
    %cst_84 = arith.constant dense<0.000000e+00> : vector<16xf32>
    %202 = vector.multi_reduction <add>, %197, %cst_84 [1] : vector<16x64xf32> to vector<16xf32>
    %203 = vector.shape_cast %202 : vector<16xf32> to vector<16x1xf32>
    %cst_85 = arith.constant 6.400000e+01 : f32
    %204 = vector.broadcast %cst_85 : f32 to vector<16x1xf32>
    %205 = arith.divf %203, %204 : vector<16x1xf32>
    %206 = vector.broadcast %205 : vector<16x1xf32> to vector<16x64xf32>
    %207 = arith.subf %197, %206 : vector<16x64xf32>
    %208 = arith.mulf %207, %207 : vector<16x64xf32>
    %cst_86 = arith.constant dense<0.000000e+00> : vector<16xf32>
    %209 = vector.multi_reduction <add>, %208, %cst_86 [1] : vector<16x64xf32> to vector<16xf32>
    %210 = vector.shape_cast %209 : vector<16xf32> to vector<16x1xf32>
    %cst_87 = arith.constant 6.400000e+01 : f32
    %211 = vector.broadcast %cst_87 : f32 to vector<16x1xf32>
    %212 = arith.divf %210, %211 : vector<16x1xf32>
    %cst_88 = arith.constant 9.99999996E-13 : f32
    %213 = vector.broadcast %cst_88 : f32 to vector<16x1xf32>
    %214 = arith.addf %212, %213 : vector<16x1xf32>
    %215 = math.rsqrt %214 : vector<16x1xf32>
    %216 = vector.broadcast %215 : vector<16x1xf32> to vector<16x64xf32>
    %217 = arith.mulf %207, %216 : vector<16x64xf32>
    %218 = vector.broadcast %199 : vector<1x64xf32> to vector<16x64xf32>
    %219 = arith.mulf %217, %218 : vector<16x64xf32>
    %220 = vector.broadcast %201 : vector<1x64xf32> to vector<16x64xf32>
    %221 = arith.addf %219, %220 : vector<16x64xf32>
    %c1 = arith.constant 1 : index
    %c0_89 = arith.constant 0 : index
    %c0_90 = arith.constant 0 : index
    %222 = vector.load %arg5[%c1, %c0_89, %c0_90] : memref<2x64x192xbf16, #tpu.memory_space<vmem>>, vector<1x64x192xbf16>
    %223 = vector.shape_cast %222 : vector<1x64x192xbf16> to vector<64x192xbf16>
    %224 = arith.truncf %221 : vector<16x64xf32> to vector<16x64xbf16>
    %cst_91 = arith.constant dense<0.000000e+00> : vector<16x192xf32>
    %225 = tpu.matmul %224, %223, %cst_91 {dimension_numbers = #tpu.dot_dimension_numbers<[1], [0], [0], [1], [0, 0, 1, 1], [], []>} : vector<16x64xbf16>, vector<64x192xbf16>, vector<16x192xf32> -> vector<16x192xf32>
    %c1_92 = arith.constant 1 : index
    %c0_93 = arith.constant 0 : index
    %c0_94 = arith.constant 0 : index
    %226 = vector.load %arg6[%c1_92, %c0_93, %c0_94] : memref<2x1x192xf32, #tpu.memory_space<vmem>>, vector<1x1x192xf32>
    %227 = vector.shape_cast %226 : vector<1x1x192xf32> to vector<1x192xf32>
    %228 = vector.broadcast %227 : vector<1x192xf32> to vector<16x192xf32>
    %229 = arith.addf %225, %228 : vector<16x192xf32>
    %c1_95 = arith.constant 1 : index
    %c0_96 = arith.constant 0 : index
    %c0_97 = arith.constant 0 : index
    %230 = vector.load %arg7[%c1_95, %c0_96, %c0_97] : memref<2x64x64xbf16, #tpu.memory_space<vmem>>, vector<1x64x64xbf16>
    %231 = vector.shape_cast %230 : vector<1x64x64xbf16> to vector<64x64xbf16>
    %cst_98 = arith.constant 0.000000e+00 : f32
    %232 = vector.broadcast %cst_98 : f32 to vector<16x64xf32>
    %233 = vector.extract_strided_slice %229 {offsets = [0, 0], sizes = [16, 16], strides = [1, 1]} : vector<16x192xf32> to vector<16x16xf32>
    %234 = vector.extract_strided_slice %229 {offsets = [0, 64], sizes = [16, 16], strides = [1, 1]} : vector<16x192xf32> to vector<16x16xf32>
    %235 = vector.extract_strided_slice %229 {offsets = [0, 128], sizes = [16, 16], strides = [1, 1]} : vector<16x192xf32> to vector<16x16xf32>
    %236 = arith.truncf %233 : vector<16x16xf32> to vector<16x16xbf16>
    %237 = arith.truncf %234 : vector<16x16xf32> to vector<16x16xbf16>
    %cst_99 = arith.constant dense<0.000000e+00> : vector<16x16xf32>
    %238 = tpu.matmul %236, %237, %cst_99 {dimension_numbers = #tpu.dot_dimension_numbers<[1], [1], [0], [0], [0, 0, 1, 0], [], []>} : vector<16x16xbf16>, vector<16x16xbf16>, vector<16x16xf32> -> vector<16x16xf32>
    %cst_100 = arith.constant 2.500000e-01 : f32
    %239 = vector.broadcast %cst_100 : f32 to vector<16x16xf32>
    %240 = arith.mulf %238, %239 : vector<16x16xf32>
    %241 = arith.addf %240, %0 : vector<16x16xf32>
    %cst_101 = arith.constant dense<0xFF800000> : vector<16xf32>
    %242 = vector.multi_reduction <maximumf>, %241, %cst_101 [1] : vector<16x16xf32> to vector<16xf32>
    %243 = vector.shape_cast %242 : vector<16xf32> to vector<16x1xf32>
    %244 = vector.broadcast %243 : vector<16x1xf32> to vector<16x16xf32>
    %245 = arith.subf %241, %244 : vector<16x16xf32>
    %246 = math.exp %245 : vector<16x16xf32>
    %cst_102 = arith.constant dense<0.000000e+00> : vector<16xf32>
    %247 = vector.multi_reduction <add>, %246, %cst_102 [1] : vector<16x16xf32> to vector<16xf32>
    %248 = vector.shape_cast %247 : vector<16xf32> to vector<16x1xf32>
    %249 = tpu.reciprocal %248 {approx = true} : vector<16x1xf32> -> vector<16x1xf32>
    %250 = vector.broadcast %249 : vector<16x1xf32> to vector<16x16xf32>
    %251 = arith.mulf %246, %250 : vector<16x16xf32>
    %252 = arith.truncf %251 : vector<16x16xf32> to vector<16x16xbf16>
    %253 = arith.truncf %235 : vector<16x16xf32> to vector<16x16xbf16>
    %cst_103 = arith.constant dense<0.000000e+00> : vector<16x16xf32>
    %254 = tpu.matmul %252, %253, %cst_103 {dimension_numbers = #tpu.dot_dimension_numbers<[1], [0], [0], [1], [0, 0, 1, 1], [], []>} : vector<16x16xbf16>, vector<16x16xbf16>, vector<16x16xf32> -> vector<16x16xf32>
    %255 = arith.truncf %254 : vector<16x16xf32> to vector<16x16xbf16>
    %256 = vector.extract_strided_slice %231 {offsets = [0, 0], sizes = [16, 64], strides = [1, 1]} : vector<64x64xbf16> to vector<16x64xbf16>
    %cst_104 = arith.constant dense<0.000000e+00> : vector<16x64xf32>
    %257 = tpu.matmul %255, %256, %cst_104 {dimension_numbers = #tpu.dot_dimension_numbers<[1], [0], [0], [1], [0, 0, 1, 1], [], []>} : vector<16x16xbf16>, vector<16x64xbf16>, vector<16x64xf32> -> vector<16x64xf32>
    %258 = arith.addf %232, %257 : vector<16x64xf32>
    %259 = vector.extract_strided_slice %229 {offsets = [0, 16], sizes = [16, 16], strides = [1, 1]} : vector<16x192xf32> to vector<16x16xf32>
    %260 = vector.extract_strided_slice %229 {offsets = [0, 80], sizes = [16, 16], strides = [1, 1]} : vector<16x192xf32> to vector<16x16xf32>
    %261 = vector.extract_strided_slice %229 {offsets = [0, 144], sizes = [16, 16], strides = [1, 1]} : vector<16x192xf32> to vector<16x16xf32>
    %262 = arith.truncf %259 : vector<16x16xf32> to vector<16x16xbf16>
    %263 = arith.truncf %260 : vector<16x16xf32> to vector<16x16xbf16>
    %cst_105 = arith.constant dense<0.000000e+00> : vector<16x16xf32>
    %264 = tpu.matmul %262, %263, %cst_105 {dimension_numbers = #tpu.dot_dimension_numbers<[1], [1], [0], [0], [0, 0, 1, 0], [], []>} : vector<16x16xbf16>, vector<16x16xbf16>, vector<16x16xf32> -> vector<16x16xf32>
    %cst_106 = arith.constant 2.500000e-01 : f32
    %265 = vector.broadcast %cst_106 : f32 to vector<16x16xf32>
    %266 = arith.mulf %264, %265 : vector<16x16xf32>
    %267 = arith.addf %266, %0 : vector<16x16xf32>
    %cst_107 = arith.constant dense<0xFF800000> : vector<16xf32>
    %268 = vector.multi_reduction <maximumf>, %267, %cst_107 [1] : vector<16x16xf32> to vector<16xf32>
    %269 = vector.shape_cast %268 : vector<16xf32> to vector<16x1xf32>
    %270 = vector.broadcast %269 : vector<16x1xf32> to vector<16x16xf32>
    %271 = arith.subf %267, %270 : vector<16x16xf32>
    %272 = math.exp %271 : vector<16x16xf32>
    %cst_108 = arith.constant dense<0.000000e+00> : vector<16xf32>
    %273 = vector.multi_reduction <add>, %272, %cst_108 [1] : vector<16x16xf32> to vector<16xf32>
    %274 = vector.shape_cast %273 : vector<16xf32> to vector<16x1xf32>
    %275 = tpu.reciprocal %274 {approx = true} : vector<16x1xf32> -> vector<16x1xf32>
    %276 = vector.broadcast %275 : vector<16x1xf32> to vector<16x16xf32>
    %277 = arith.mulf %272, %276 : vector<16x16xf32>
    %278 = arith.truncf %277 : vector<16x16xf32> to vector<16x16xbf16>
    %279 = arith.truncf %261 : vector<16x16xf32> to vector<16x16xbf16>
    %cst_109 = arith.constant dense<0.000000e+00> : vector<16x16xf32>
    %280 = tpu.matmul %278, %279, %cst_109 {dimension_numbers = #tpu.dot_dimension_numbers<[1], [0], [0], [1], [0, 0, 1, 1], [], []>} : vector<16x16xbf16>, vector<16x16xbf16>, vector<16x16xf32> -> vector<16x16xf32>
    %281 = arith.truncf %280 : vector<16x16xf32> to vector<16x16xbf16>
    %282 = vector.extract_strided_slice %231 {offsets = [16, 0], sizes = [16, 64], strides = [1, 1]} : vector<64x64xbf16> to vector<16x64xbf16>
    %cst_110 = arith.constant dense<0.000000e+00> : vector<16x64xf32>
    %283 = tpu.matmul %281, %282, %cst_110 {dimension_numbers = #tpu.dot_dimension_numbers<[1], [0], [0], [1], [0, 0, 1, 1], [], []>} : vector<16x16xbf16>, vector<16x64xbf16>, vector<16x64xf32> -> vector<16x64xf32>
    %284 = arith.addf %258, %283 : vector<16x64xf32>
    %285 = vector.extract_strided_slice %229 {offsets = [0, 32], sizes = [16, 16], strides = [1, 1]} : vector<16x192xf32> to vector<16x16xf32>
    %286 = vector.extract_strided_slice %229 {offsets = [0, 96], sizes = [16, 16], strides = [1, 1]} : vector<16x192xf32> to vector<16x16xf32>
    %287 = vector.extract_strided_slice %229 {offsets = [0, 160], sizes = [16, 16], strides = [1, 1]} : vector<16x192xf32> to vector<16x16xf32>
    %288 = arith.truncf %285 : vector<16x16xf32> to vector<16x16xbf16>
    %289 = arith.truncf %286 : vector<16x16xf32> to vector<16x16xbf16>
    %cst_111 = arith.constant dense<0.000000e+00> : vector<16x16xf32>
    %290 = tpu.matmul %288, %289, %cst_111 {dimension_numbers = #tpu.dot_dimension_numbers<[1], [1], [0], [0], [0, 0, 1, 0], [], []>} : vector<16x16xbf16>, vector<16x16xbf16>, vector<16x16xf32> -> vector<16x16xf32>
    %cst_112 = arith.constant 2.500000e-01 : f32
    %291 = vector.broadcast %cst_112 : f32 to vector<16x16xf32>
    %292 = arith.mulf %290, %291 : vector<16x16xf32>
    %293 = arith.addf %292, %0 : vector<16x16xf32>
    %cst_113 = arith.constant dense<0xFF800000> : vector<16xf32>
    %294 = vector.multi_reduction <maximumf>, %293, %cst_113 [1] : vector<16x16xf32> to vector<16xf32>
    %295 = vector.shape_cast %294 : vector<16xf32> to vector<16x1xf32>
    %296 = vector.broadcast %295 : vector<16x1xf32> to vector<16x16xf32>
    %297 = arith.subf %293, %296 : vector<16x16xf32>
    %298 = math.exp %297 : vector<16x16xf32>
    %cst_114 = arith.constant dense<0.000000e+00> : vector<16xf32>
    %299 = vector.multi_reduction <add>, %298, %cst_114 [1] : vector<16x16xf32> to vector<16xf32>
    %300 = vector.shape_cast %299 : vector<16xf32> to vector<16x1xf32>
    %301 = tpu.reciprocal %300 {approx = true} : vector<16x1xf32> -> vector<16x1xf32>
    %302 = vector.broadcast %301 : vector<16x1xf32> to vector<16x16xf32>
    %303 = arith.mulf %298, %302 : vector<16x16xf32>
    %304 = arith.truncf %303 : vector<16x16xf32> to vector<16x16xbf16>
    %305 = arith.truncf %287 : vector<16x16xf32> to vector<16x16xbf16>
    %cst_115 = arith.constant dense<0.000000e+00> : vector<16x16xf32>
    %306 = tpu.matmul %304, %305, %cst_115 {dimension_numbers = #tpu.dot_dimension_numbers<[1], [0], [0], [1], [0, 0, 1, 1], [], []>} : vector<16x16xbf16>, vector<16x16xbf16>, vector<16x16xf32> -> vector<16x16xf32>
    %307 = arith.truncf %306 : vector<16x16xf32> to vector<16x16xbf16>
    %308 = vector.extract_strided_slice %231 {offsets = [32, 0], sizes = [16, 64], strides = [1, 1]} : vector<64x64xbf16> to vector<16x64xbf16>
    %cst_116 = arith.constant dense<0.000000e+00> : vector<16x64xf32>
    %309 = tpu.matmul %307, %308, %cst_116 {dimension_numbers = #tpu.dot_dimension_numbers<[1], [0], [0], [1], [0, 0, 1, 1], [], []>} : vector<16x16xbf16>, vector<16x64xbf16>, vector<16x64xf32> -> vector<16x64xf32>
    %310 = arith.addf %284, %309 : vector<16x64xf32>
    %311 = vector.extract_strided_slice %229 {offsets = [0, 48], sizes = [16, 16], strides = [1, 1]} : vector<16x192xf32> to vector<16x16xf32>
    %312 = vector.extract_strided_slice %229 {offsets = [0, 112], sizes = [16, 16], strides = [1, 1]} : vector<16x192xf32> to vector<16x16xf32>
    %313 = vector.extract_strided_slice %229 {offsets = [0, 176], sizes = [16, 16], strides = [1, 1]} : vector<16x192xf32> to vector<16x16xf32>
    %314 = arith.truncf %311 : vector<16x16xf32> to vector<16x16xbf16>
    %315 = arith.truncf %312 : vector<16x16xf32> to vector<16x16xbf16>
    %cst_117 = arith.constant dense<0.000000e+00> : vector<16x16xf32>
    %316 = tpu.matmul %314, %315, %cst_117 {dimension_numbers = #tpu.dot_dimension_numbers<[1], [1], [0], [0], [0, 0, 1, 0], [], []>} : vector<16x16xbf16>, vector<16x16xbf16>, vector<16x16xf32> -> vector<16x16xf32>
    %cst_118 = arith.constant 2.500000e-01 : f32
    %317 = vector.broadcast %cst_118 : f32 to vector<16x16xf32>
    %318 = arith.mulf %316, %317 : vector<16x16xf32>
    %319 = arith.addf %318, %0 : vector<16x16xf32>
    %cst_119 = arith.constant dense<0xFF800000> : vector<16xf32>
    %320 = vector.multi_reduction <maximumf>, %319, %cst_119 [1] : vector<16x16xf32> to vector<16xf32>
    %321 = vector.shape_cast %320 : vector<16xf32> to vector<16x1xf32>
    %322 = vector.broadcast %321 : vector<16x1xf32> to vector<16x16xf32>
    %323 = arith.subf %319, %322 : vector<16x16xf32>
    %324 = math.exp %323 : vector<16x16xf32>
    %cst_120 = arith.constant dense<0.000000e+00> : vector<16xf32>
    %325 = vector.multi_reduction <add>, %324, %cst_120 [1] : vector<16x16xf32> to vector<16xf32>
    %326 = vector.shape_cast %325 : vector<16xf32> to vector<16x1xf32>
    %327 = tpu.reciprocal %326 {approx = true} : vector<16x1xf32> -> vector<16x1xf32>
    %328 = vector.broadcast %327 : vector<16x1xf32> to vector<16x16xf32>
    %329 = arith.mulf %324, %328 : vector<16x16xf32>
    %330 = arith.truncf %329 : vector<16x16xf32> to vector<16x16xbf16>
    %331 = arith.truncf %313 : vector<16x16xf32> to vector<16x16xbf16>
    %cst_121 = arith.constant dense<0.000000e+00> : vector<16x16xf32>
    %332 = tpu.matmul %330, %331, %cst_121 {dimension_numbers = #tpu.dot_dimension_numbers<[1], [0], [0], [1], [0, 0, 1, 1], [], []>} : vector<16x16xbf16>, vector<16x16xbf16>, vector<16x16xf32> -> vector<16x16xf32>
    %333 = arith.truncf %332 : vector<16x16xf32> to vector<16x16xbf16>
    %334 = vector.extract_strided_slice %231 {offsets = [48, 0], sizes = [16, 64], strides = [1, 1]} : vector<64x64xbf16> to vector<16x64xbf16>
    %cst_122 = arith.constant dense<0.000000e+00> : vector<16x64xf32>
    %335 = tpu.matmul %333, %334, %cst_122 {dimension_numbers = #tpu.dot_dimension_numbers<[1], [0], [0], [1], [0, 0, 1, 1], [], []>} : vector<16x16xbf16>, vector<16x64xbf16>, vector<16x64xf32> -> vector<16x64xf32>
    %336 = arith.addf %310, %335 : vector<16x64xf32>
    %c1_123 = arith.constant 1 : index
    %c0_124 = arith.constant 0 : index
    %c0_125 = arith.constant 0 : index
    %337 = vector.load %arg8[%c1_123, %c0_124, %c0_125] : memref<2x1x64xf32, #tpu.memory_space<vmem>>, vector<1x1x64xf32>
    %338 = vector.shape_cast %337 : vector<1x1x64xf32> to vector<1x64xf32>
    %339 = vector.broadcast %338 : vector<1x64xf32> to vector<16x64xf32>
    %340 = arith.addf %336, %339 : vector<16x64xf32>
    %341 = arith.addf %340, %221 : vector<16x64xf32>
    %c1_126 = arith.constant 1 : index
    %c0_127 = arith.constant 0 : index
    %c0_128 = arith.constant 0 : index
    %342 = vector.load %arg9[%c1_126, %c0_127, %c0_128] : memref<2x1x64xf32, #tpu.memory_space<vmem>>, vector<1x1x64xf32>
    %343 = vector.shape_cast %342 : vector<1x1x64xf32> to vector<1x64xf32>
    %c1_129 = arith.constant 1 : index
    %c0_130 = arith.constant 0 : index
    %c0_131 = arith.constant 0 : index
    %344 = vector.load %arg10[%c1_129, %c0_130, %c0_131] : memref<2x1x64xf32, #tpu.memory_space<vmem>>, vector<1x1x64xf32>
    %345 = vector.shape_cast %344 : vector<1x1x64xf32> to vector<1x64xf32>
    %cst_132 = arith.constant dense<0.000000e+00> : vector<16xf32>
    %346 = vector.multi_reduction <add>, %341, %cst_132 [1] : vector<16x64xf32> to vector<16xf32>
    %347 = vector.shape_cast %346 : vector<16xf32> to vector<16x1xf32>
    %cst_133 = arith.constant 6.400000e+01 : f32
    %348 = vector.broadcast %cst_133 : f32 to vector<16x1xf32>
    %349 = arith.divf %347, %348 : vector<16x1xf32>
    %350 = vector.broadcast %349 : vector<16x1xf32> to vector<16x64xf32>
    %351 = arith.subf %341, %350 : vector<16x64xf32>
    %352 = arith.mulf %351, %351 : vector<16x64xf32>
    %cst_134 = arith.constant dense<0.000000e+00> : vector<16xf32>
    %353 = vector.multi_reduction <add>, %352, %cst_134 [1] : vector<16x64xf32> to vector<16xf32>
    %354 = vector.shape_cast %353 : vector<16xf32> to vector<16x1xf32>
    %cst_135 = arith.constant 6.400000e+01 : f32
    %355 = vector.broadcast %cst_135 : f32 to vector<16x1xf32>
    %356 = arith.divf %354, %355 : vector<16x1xf32>
    %cst_136 = arith.constant 9.99999996E-13 : f32
    %357 = vector.broadcast %cst_136 : f32 to vector<16x1xf32>
    %358 = arith.addf %356, %357 : vector<16x1xf32>
    %359 = math.rsqrt %358 : vector<16x1xf32>
    %360 = vector.broadcast %359 : vector<16x1xf32> to vector<16x64xf32>
    %361 = arith.mulf %351, %360 : vector<16x64xf32>
    %362 = vector.broadcast %343 : vector<1x64xf32> to vector<16x64xf32>
    %363 = arith.mulf %361, %362 : vector<16x64xf32>
    %364 = vector.broadcast %345 : vector<1x64xf32> to vector<16x64xf32>
    %365 = arith.addf %363, %364 : vector<16x64xf32>
    %c1_137 = arith.constant 1 : index
    %c0_138 = arith.constant 0 : index
    %c0_139 = arith.constant 0 : index
    %366 = vector.load %arg11[%c1_137, %c0_138, %c0_139] : memref<2x64x128xbf16, #tpu.memory_space<vmem>>, vector<1x64x128xbf16>
    %367 = vector.shape_cast %366 : vector<1x64x128xbf16> to vector<64x128xbf16>
    %368 = arith.truncf %365 : vector<16x64xf32> to vector<16x64xbf16>
    %cst_140 = arith.constant dense<0.000000e+00> : vector<16x128xf32>
    %369 = tpu.matmul %368, %367, %cst_140 {dimension_numbers = #tpu.dot_dimension_numbers<[1], [0], [0], [1], [0, 0, 1, 1], [], []>} : vector<16x64xbf16>, vector<64x128xbf16>, vector<16x128xf32> -> vector<16x128xf32>
    %c1_141 = arith.constant 1 : index
    %c0_142 = arith.constant 0 : index
    %c0_143 = arith.constant 0 : index
    %370 = vector.load %arg12[%c1_141, %c0_142, %c0_143] : memref<2x1x128xf32, #tpu.memory_space<vmem>>, vector<1x1x128xf32>
    %371 = vector.shape_cast %370 : vector<1x1x128xf32> to vector<1x128xf32>
    %372 = vector.broadcast %371 : vector<1x128xf32> to vector<16x128xf32>
    %373 = arith.addf %369, %372 : vector<16x128xf32>
    %cst_144 = arith.constant 5.000000e-01 : f32
    %374 = vector.broadcast %cst_144 : f32 to vector<16x128xf32>
    %375 = arith.mulf %374, %373 : vector<16x128xf32>
    %cst_145 = arith.constant 4.471500e-02 : f32
    %376 = vector.broadcast %cst_145 : f32 to vector<16x128xf32>
    %377 = arith.mulf %376, %373 : vector<16x128xf32>
    %378 = arith.mulf %377, %373 : vector<16x128xf32>
    %379 = arith.mulf %378, %373 : vector<16x128xf32>
    %380 = arith.addf %373, %379 : vector<16x128xf32>
    %cst_146 = arith.constant 0.797884583 : f32
    %381 = vector.broadcast %cst_146 : f32 to vector<16x128xf32>
    %382 = arith.mulf %381, %380 : vector<16x128xf32>
    %383 = math.tanh %382 : vector<16x128xf32>
    %cst_147 = arith.constant 1.000000e+00 : f32
    %384 = vector.broadcast %cst_147 : f32 to vector<16x128xf32>
    %385 = arith.addf %384, %383 : vector<16x128xf32>
    %386 = arith.mulf %375, %385 : vector<16x128xf32>
    %c1_148 = arith.constant 1 : index
    %c0_149 = arith.constant 0 : index
    %c0_150 = arith.constant 0 : index
    %387 = vector.load %arg13[%c1_148, %c0_149, %c0_150] : memref<2x128x64xbf16, #tpu.memory_space<vmem>>, vector<1x128x64xbf16>
    %388 = vector.shape_cast %387 : vector<1x128x64xbf16> to vector<128x64xbf16>
    %389 = arith.truncf %386 : vector<16x128xf32> to vector<16x128xbf16>
    %cst_151 = arith.constant dense<0.000000e+00> : vector<16x64xf32>
    %390 = tpu.matmul %389, %388, %cst_151 {dimension_numbers = #tpu.dot_dimension_numbers<[1], [0], [0], [1], [0, 0, 1, 1], [], []>} : vector<16x128xbf16>, vector<128x64xbf16>, vector<16x64xf32> -> vector<16x64xf32>
    %c1_152 = arith.constant 1 : index
    %c0_153 = arith.constant 0 : index
    %c0_154 = arith.constant 0 : index
    %391 = vector.load %arg14[%c1_152, %c0_153, %c0_154] : memref<2x1x64xf32, #tpu.memory_space<vmem>>, vector<1x1x64xf32>
    %392 = vector.shape_cast %391 : vector<1x1x64xf32> to vector<1x64xf32>
    %393 = vector.broadcast %392 : vector<1x64xf32> to vector<16x64xf32>
    %394 = arith.addf %390, %393 : vector<16x64xf32>
    %395 = arith.addf %394, %365 : vector<16x64xf32>
    %c1_155 = arith.constant 1 : index
    %c0_156 = arith.constant 0 : index
    %c0_157 = arith.constant 0 : index
    %396 = vector.load %arg15[%c1_155, %c0_156, %c0_157] : memref<2x1x64xf32, #tpu.memory_space<vmem>>, vector<1x1x64xf32>
    %397 = vector.shape_cast %396 : vector<1x1x64xf32> to vector<1x64xf32>
    %c1_158 = arith.constant 1 : index
    %c0_159 = arith.constant 0 : index
    %c0_160 = arith.constant 0 : index
    %398 = vector.load %arg16[%c1_158, %c0_159, %c0_160] : memref<2x1x64xf32, #tpu.memory_space<vmem>>, vector<1x1x64xf32>
    %399 = vector.shape_cast %398 : vector<1x1x64xf32> to vector<1x64xf32>
    %cst_161 = arith.constant dense<0.000000e+00> : vector<16xf32>
    %400 = vector.multi_reduction <add>, %395, %cst_161 [1] : vector<16x64xf32> to vector<16xf32>
    %401 = vector.shape_cast %400 : vector<16xf32> to vector<16x1xf32>
    %cst_162 = arith.constant 6.400000e+01 : f32
    %402 = vector.broadcast %cst_162 : f32 to vector<16x1xf32>
    %403 = arith.divf %401, %402 : vector<16x1xf32>
    %404 = vector.broadcast %403 : vector<16x1xf32> to vector<16x64xf32>
    %405 = arith.subf %395, %404 : vector<16x64xf32>
    %406 = arith.mulf %405, %405 : vector<16x64xf32>
    %cst_163 = arith.constant dense<0.000000e+00> : vector<16xf32>
    %407 = vector.multi_reduction <add>, %406, %cst_163 [1] : vector<16x64xf32> to vector<16xf32>
    %408 = vector.shape_cast %407 : vector<16xf32> to vector<16x1xf32>
    %cst_164 = arith.constant 6.400000e+01 : f32
    %409 = vector.broadcast %cst_164 : f32 to vector<16x1xf32>
    %410 = arith.divf %408, %409 : vector<16x1xf32>
    %cst_165 = arith.constant 9.99999996E-13 : f32
    %411 = vector.broadcast %cst_165 : f32 to vector<16x1xf32>
    %412 = arith.addf %410, %411 : vector<16x1xf32>
    %413 = math.rsqrt %412 : vector<16x1xf32>
    %414 = vector.broadcast %413 : vector<16x1xf32> to vector<16x64xf32>
    %415 = arith.mulf %405, %414 : vector<16x64xf32>
    %416 = vector.broadcast %397 : vector<1x64xf32> to vector<16x64xf32>
    %417 = arith.mulf %415, %416 : vector<16x64xf32>
    %418 = vector.broadcast %399 : vector<1x64xf32> to vector<16x64xf32>
    %419 = arith.addf %417, %418 : vector<16x64xf32>
    %c0_166 = arith.constant 0 : index
    %c0_167 = arith.constant 0 : index
    %420 = vector.load %arg17[%c0_166, %c0_167] : memref<64x128xbf16, #tpu.memory_space<vmem>>, vector<64x128xbf16>
    %421 = arith.truncf %419 : vector<16x64xf32> to vector<16x64xbf16>
    %cst_168 = arith.constant dense<0.000000e+00> : vector<16x128xf32>
    %422 = tpu.matmul %421, %420, %cst_168 {dimension_numbers = #tpu.dot_dimension_numbers<[1], [0], [0], [1], [0, 0, 1, 1], [], []>} : vector<16x64xbf16>, vector<64x128xbf16>, vector<16x128xf32> -> vector<16x128xf32>
    %c0_169 = arith.constant 0 : index
    %c0_170 = arith.constant 0 : index
    %423 = vector.load %arg18[%c0_169, %c0_170] : memref<1x128xf32, #tpu.memory_space<vmem>>, vector<1x128xf32>
    %424 = vector.broadcast %423 : vector<1x128xf32> to vector<16x128xf32>
    %425 = arith.addf %422, %424 : vector<16x128xf32>
    %c0_171 = arith.constant 0 : index
    %c0_172 = arith.constant 0 : index
    %426 = vector.load %arg19[%c0_171, %c0_172] : memref<16x128xf32, #tpu.memory_space<vmem>>, vector<16x128xf32>
    tpu.vector_store %arg19[%c0_171, %c0_172], %425 {strides = array<i32>} : memref<16x128xf32, #tpu.memory_space<vmem>>, vector<16x128xf32>,
    return
  }
  func.func @transform_0(%arg0: i32) -> (i32, i32) {
    %c0_i32 = arith.constant 0 : i32
    %c0_i32_0 = arith.constant 0 : i32
    %c0_i32_1 = arith.constant 0 : i32
    return %c0_i32, %c0_i32_0 : i32, i32
  }
  func.func @transform_1(%arg0: i32) -> (i32, i32) {
    %c0_i32 = arith.constant 0 : i32
    %c0_i32_0 = arith.constant 0 : i32
    %c0_i32_1 = arith.constant 0 : i32
    return %c0_i32, %c0_i32_0 : i32, i32
  }
  func.func @transform_2(%arg0: i32) -> (i32, i32) {
    %c0_i32 = arith.constant 0 : i32
    %c0_i32_0 = arith.constant 0 : i32
    %c0_i32_1 = arith.constant 0 : i32
    return %c0_i32, %c0_i32_0 : i32, i32
  }
  func.func @transform_3(%arg0: i32) -> (i32, i32) {
    %c0_i32 = arith.constant 0 : i32
    %c0_i32_0 = arith.constant 0 : i32
    %c0_i32_1 = arith.constant 0 : i32
    return %c0_i32, %c0_i32_0 : i32, i32
  }
  func.func @transform_4(%arg0: i32) -> (i32, i32, i32) {
    %c0_i32 = arith.constant 0 : i32
    %c0_i32_0 = arith.constant 0 : i32
    %c0_i32_1 = arith.constant 0 : i32
    %c0_i32_2 = arith.constant 0 : i32
    return %c0_i32, %c0_i32_0, %c0_i32_1 : i32, i32, i32
  }
  func.func @transform_5(%arg0: i32) -> (i32, i32, i32) {
    %c0_i32 = arith.constant 0 : i32
    %c0_i32_0 = arith.constant 0 : i32
    %c0_i32_1 = arith.constant 0 : i32
    %c0_i32_2 = arith.constant 0 : i32
    return %c0_i32, %c0_i32_0, %c0_i32_1 : i32, i32, i32
  }
  func.func @transform_6(%arg0: i32) -> (i32, i32, i32) {
    %c0_i32 = arith.constant 0 : i32
    %c0_i32_0 = arith.constant 0 : i32
    %c0_i32_1 = arith.constant 0 : i32
    %c0_i32_2 = arith.constant 0 : i32
    return %c0_i32, %c0_i32_0, %c0_i32_1 : i32, i32, i32
  }
  func.func @transform_7(%arg0: i32) -> (i32, i32, i32) {
    %c0_i32 = arith.constant 0 : i32
    %c0_i32_0 = arith.constant 0 : i32
    %c0_i32_1 = arith.constant 0 : i32
    %c0_i32_2 = arith.constant 0 : i32
    return %c0_i32, %c0_i32_0, %c0_i32_1 : i32, i32, i32
  }
  func.func @transform_8(%arg0: i32) -> (i32, i32, i32) {
    %c0_i32 = arith.constant 0 : i32
    %c0_i32_0 = arith.constant 0 : i32
    %c0_i32_1 = arith.constant 0 : i32
    %c0_i32_2 = arith.constant 0 : i32
    return %c0_i32, %c0_i32_0, %c0_i32_1 : i32, i32, i32
  }
  func.func @transform_9(%arg0: i32) -> (i32, i32, i32) {
    %c0_i32 = arith.constant 0 : i32
    %c0_i32_0 = arith.constant 0 : i32
    %c0_i32_1 = arith.constant 0 : i32
    %c0_i32_2 = arith.constant 0 : i32
    return %c0_i32, %c0_i32_0, %c0_i32_1 : i32, i32, i32
  }
  func.func @transform_10(%arg0: i32) -> (i32, i32, i32) {
    %c0_i32 = arith.constant 0 : i32
    %c0_i32_0 = arith.constant 0 : i32
    %c0_i32_1 = arith.constant 0 : i32
    %c0_i32_2 = arith.constant 0 : i32
    return %c0_i32, %c0_i32_0, %c0_i32_1 : i32, i32, i32
  }
  func.func @transform_11(%arg0: i32) -> (i32, i32, i32) {
    %c0_i32 = arith.constant 0 : i32
    %c0_i32_0 = arith.constant 0 : i32
    %c0_i32_1 = arith.constant 0 : i32
    %c0_i32_2 = arith.constant 0 : i32
    return %c0_i32, %c0_i32_0, %c0_i32_1 : i32, i32, i32
  }
  func.func @transform_12(%arg0: i32) -> (i32, i32, i32) {
    %c0_i32 = arith.constant 0 : i32
    %c0_i32_0 = arith.constant 0 : i32
    %c0_i32_1 = arith.constant 0 : i32
    %c0_i32_2 = arith.constant 0 : i32
    return %c0_i32, %c0_i32_0, %c0_i32_1 : i32, i32, i32
  }
  func.func @transform_13(%arg0: i32) -> (i32, i32, i32) {
    %c0_i32 = arith.constant 0 : i32
    %c0_i32_0 = arith.constant 0 : i32
    %c0_i32_1 = arith.constant 0 : i32
    %c0_i32_2 = arith.constant 0 : i32
    return %c0_i32, %c0_i32_0, %c0_i32_1 : i32, i32, i32
  }
  func.func @transform_14(%arg0: i32) -> (i32, i32, i32) {
    %c0_i32 = arith.constant 0 : i32
    %c0_i32_0 = arith.constant 0 : i32
    %c0_i32_1 = arith.constant 0 : i32
    %c0_i32_2 = arith.constant 0 : i32
    return %c0_i32, %c0_i32_0, %c0_i32_1 : i32, i32, i32
  }
  func.func @transform_15(%arg0: i32) -> (i32, i32, i32) {
    %c0_i32 = arith.constant 0 : i32
    %c0_i32_0 = arith.constant 0 : i32
    %c0_i32_1 = arith.constant 0 : i32
    %c0_i32_2 = arith.constant 0 : i32
    return %c0_i32, %c0_i32_0, %c0_i32_1 : i32, i32, i32
  }
  func.func @transform_16(%arg0: i32) -> (i32, i32) {
    %c0_i32 = arith.constant 0 : i32
    %c0_i32_0 = arith.constant 0 : i32
    %c0_i32_1 = arith.constant 0 : i32
    return %c0_i32, %c0_i32_0 : i32, i32
  }
  func.func @transform_17(%arg0: i32) -> (i32, i32) {
    %c0_i32 = arith.constant 0 : i32
    %c0_i32_0 = arith.constant 0 : i32
    %c0_i32_1 = arith.constant 0 : i32
    return %c0_i32, %c0_i32_0 : i32, i32
  }
  func.func @transform_18(%arg0: i32) -> (i32, i32) {
    %c0_i32 = arith.constant 0 : i32
    %c0_i32_0 = arith.constant 0 : i32
    %c0_i32_1 = arith.constant 0 : i32
    return %c0_i32, %c0_i32_0 : i32, i32
  }
}

</mosaic_0001>

<llo_original>
// kernel: baseline_forward.1
$region0: #{baseline_forward.1}
  #allocation0 [shape = 'u32[]', space=smem, size = 0x4, offset = 0x4, fixed_abs, tag = 'smem constant byte address 0x4 - core index']
  #allocation1 [shape = 'u32[144,128]{1,0:T(1,128)}', space=vmem, size = 0x12000, scoped, tag = 'internal scratch']
  %s0 = inlined_call_operand.vmem [shape: f32[16,64], index: 0, kind: input, shape index: {}]
  %s1 = inlined_call_operand.vmem [shape: f32[16,16], index: 1, kind: input, shape index: {}]
  %s2 = inlined_call_operand.vmem [shape: f32[1,64], index: 2, kind: input, shape index: {}]
  %s3 = inlined_call_operand.vmem [shape: f32[1,64], index: 3, kind: input, shape index: {}]
  %s4 = inlined_call_operand.vmem [shape: bf16[2,64,192], index: 4, kind: input, shape index: {}]
  %s5 = inlined_call_operand.vmem [shape: f32[2,1,192], index: 5, kind: input, shape index: {}]
  %s6 = inlined_call_operand.vmem [shape: bf16[2,64,64], index: 6, kind: input, shape index: {}]
  %s7 = inlined_call_operand.vmem [shape: f32[2,1,64], index: 7, kind: input, shape index: {}]
  %s8 = inlined_call_operand.vmem [shape: f32[2,1,64], index: 8, kind: input, shape index: {}]
  %s9 = inlined_call_operand.vmem [shape: f32[2,1,64], index: 9, kind: input, shape index: {}]
  %s10 = inlined_call_operand.vmem [shape: bf16[2,64,128], index: 10, kind: input, shape index: {}]
  %s11 = inlined_call_operand.vmem [shape: f32[2,1,128], index: 11, kind: input, shape index: {}]
  %s12 = inlined_call_operand.vmem [shape: bf16[2,128,64], index: 12, kind: input, shape index: {}]
  %s13 = inlined_call_operand.vmem [shape: f32[2,1,64], index: 13, kind: input, shape index: {}]
  %s14 = inlined_call_operand.vmem [shape: f32[2,1,64], index: 14, kind: input, shape index: {}]
  %s15 = inlined_call_operand.vmem [shape: f32[2,1,64], index: 15, kind: input, shape index: {}]
  %s16 = inlined_call_operand.vmem [shape: bf16[64,128], index: 16, kind: input, shape index: {}]
  %s17 = inlined_call_operand.vmem [shape: f32[1,128], index: 17, kind: input, shape index: {}]
  %s18 = inlined_call_operand.vmem [shape: f32[16,128], index: 18, kind: output, shape index: {}]
  %s19 = sld [smem:[#allocation0]]
  $region82: #{baseline_forward.1} parent=0
    _
  %s21 = ssub.s32 1, %s19
  %s22 = scalar_select 0, %s21, %s19
  // Predicated region
  $region2: #{baseline_forward.1} parent=0 // pred_check
    _
  $region3: #{baseline_forward.1} parent=0 // pred_check_branch
    %24 = sbr.rel (0) target = $region5
  $region4: #{baseline_forward.1} parent=0 // pred_region
    _
  $region5: #{baseline_forward.1} parent=0 // pred_fallthru
    _
  // Predicated region
  $region6: #{baseline_forward.1} parent=0 // pred_check
    _
  $region7: #{baseline_forward.1} parent=0 // pred_check_branch
    %26 = sbr.rel (0) target = $region9
  $region8: #{baseline_forward.1} parent=0 // pred_region
    _
  $region9: #{baseline_forward.1} parent=0 // pred_fallthru
    _
  // Predicated region
  $region10: #{baseline_forward.1} parent=0 // pred_check
    _
  $region11: #{baseline_forward.1} parent=0 // pred_check_branch
    %28 = sbr.rel (0) target = $region13
  $region12: #{baseline_forward.1} parent=0 // pred_region
    _
  $region13: #{baseline_forward.1} parent=0 // pred_fallthru
    _
  // Predicated region
  $region14: #{baseline_forward.1} parent=0 // pred_check
    _
  $region15: #{baseline_forward.1} parent=0 // pred_check_branch
    %30 = sbr.rel (0) target = $region17
  $region16: #{baseline_forward.1} parent=0 // pred_region
    _
  $region17: #{baseline_forward.1} parent=0 // pred_fallthru
    _
  // Predicated region
  $region18: #{baseline_forward.1} parent=0 // pred_check
    _
  $region19: #{baseline_forward.1} parent=0 // pred_check_branch
    %32 = sbr.rel (0) target = $region21
  $region20: #{baseline_forward.1} parent=0 // pred_region
    _
  $region21: #{baseline_forward.1} parent=0 // pred_fallthru
    _
  // Predicated region
  $region22: #{baseline_forward.1} parent=0 // pred_check
    _
  $region23: #{baseline_forward.1} parent=0 // pred_check_branch
    %34 = sbr.rel (0) target = $region25
  $region24: #{baseline_forward.1} parent=0 // pred_region
    _
  $region25: #{baseline_forward.1} parent=0 // pred_fallthru
    _
  // Predicated region
  $region26: #{baseline_forward.1} parent=0 // pred_check
    _
  $region27: #{baseline_forward.1} parent=0 // pred_check_branch
    %36 = sbr.rel (0) target = $region29
  $region28: #{baseline_forward.1} parent=0 // pred_region
    _
  $region29: #{baseline_forward.1} parent=0 // pred_fallthru
    _
  // Predicated region
  $region30: #{baseline_forward.1} parent=0 // pred_check
    _
  $region31: #{baseline_forward.1} parent=0 // pred_check_branch
    %38 = sbr.rel (0) target = $region33
  $region32: #{baseline_forward.1} parent=0 // pred_region
    _
  $region33: #{baseline_forward.1} parent=0 // pred_fallthru
    _
  // Predicated region
  $region34: #{baseline_forward.1} parent=0 // pred_check
    _
  $region35: #{baseline_forward.1} parent=0 // pred_check_branch
    %40 = sbr.rel (0) target = $region37
  $region36: #{baseline_forward.1} parent=0 // pred_region
    _
  $region37: #{baseline_forward.1} parent=0 // pred_fallthru
    _
  // Predicated region
  $region38: #{baseline_forward.1} parent=0 // pred_check
    _
  $region39: #{baseline_forward.1} parent=0 // pred_check_branch
    %42 = sbr.rel (0) target = $region41
  $region40: #{baseline_forward.1} parent=0 // pred_region
    _
  $region41: #{baseline_forward.1} parent=0 // pred_fallthru
    _
  // Predicated region
  $region42: #{baseline_forward.1} parent=0 // pred_check
    _
  $region43: #{baseline_forward.1} parent=0 // pred_check_branch
    %44 = sbr.rel (0) target = $region45
  $region44: #{baseline_forward.1} parent=0 // pred_region
    _
  $region45: #{baseline_forward.1} parent=0 // pred_fallthru
    _
  // Predicated region
  $region46: #{baseline_forward.1} parent=0 // pred_check
    _
  $region47: #{baseline_forward.1} parent=0 // pred_check_branch
    %46 = sbr.rel (0) target = $region49
  $region48: #{baseline_forward.1} parent=0 // pred_region
    _
  $region49: #{baseline_forward.1} parent=0 // pred_fallthru
    _
  // Predicated region
  $region50: #{baseline_forward.1} parent=0 // pred_check
    _
  $region51: #{baseline_forward.1} parent=0 // pred_check_branch
    %48 = sbr.rel (0) target = $region53
  $region52: #{baseline_forward.1} parent=0 // pred_region
    _
  $region53: #{baseline_forward.1} parent=0 // pred_fallthru
    _
  // Predicated region
  $region54: #{baseline_forward.1} parent=0 // pred_check
    _
  $region55: #{baseline_forward.1} parent=0 // pred_check_branch
    %50 = sbr.rel (0) target = $region57
  $region56: #{baseline_forward.1} parent=0 // pred_region
    _
  $region57: #{baseline_forward.1} parent=0 // pred_fallthru
    _
  // Predicated region
  $region58: #{baseline_forward.1} parent=0 // pred_check
    _
  $region59: #{baseline_forward.1} parent=0 // pred_check_branch
    %52 = sbr.rel (0) target = $region61
  $region60: #{baseline_forward.1} parent=0 // pred_region
    _
  $region61: #{baseline_forward.1} parent=0 // pred_fallthru
    _
  // Predicated region
  $region62: #{baseline_forward.1} parent=0 // pred_check
    _
  $region63: #{baseline_forward.1} parent=0 // pred_check_branch
    %54 = sbr.rel (0) target = $region65
  $region64: #{baseline_forward.1} parent=0 // pred_region
    _
  $region65: #{baseline_forward.1} parent=0 // pred_fallthru
    _
  // Predicated region
  $region66: #{baseline_forward.1} parent=0 // pred_check
    _
  $region67: #{baseline_forward.1} parent=0 // pred_check_branch
    %56 = sbr.rel (0) target = $region69
  $region68: #{baseline_forward.1} parent=0 // pred_region
    _
  $region69: #{baseline_forward.1} parent=0 // pred_fallthru
    _
  // Predicated region
  $region70: #{baseline_forward.1} parent=0 // pred_check
    _
  $region71: #{baseline_forward.1} parent=0 // pred_check_branch
    %58 = sbr.rel (0) target = $region73
  $region72: #{baseline_forward.1} parent=0 // pred_region
    _
  $region73: #{baseline_forward.1} parent=0 // pred_fallthru
    _
  %v60 = vld [vmem:[%s1] sm:$0xff]
  %v61 = vld [vmem:[%s1 + $0x8] sm:$0xff]
  %v62 = vld [vmem:[%s0] sm:$0xff]
  %v63 = vld [vmem:[%s0 + $0x8] sm:$0xff]
  %v64 = vld [vmem:[%s2] sm:$0x1]
  %v65 = vld [vmem:[%s3] sm:$0x1]
  %vm66 = vcmask 523264
  %v67 = vsel %vm66, %v62, 0.0
  %68 = vadd.xlane.f32.xlu0 %v67
  %v69 = vpop.xlane.xlu0 %68
  %v70 = vsel %vm66, %v63, 0.0
  %71 = vadd.xlane.f32.xlu0 %v70
  %v72 = vpop.xlane.xlu0 %71
  %v73 = vrcp.pop 64.0
  %v74 = vmul.f32 %v69, %v73
  %v75 = vmul.f32 %v72, %v73
  %v76 = vsub.f32 %v62, %v74
  %v77 = vsub.f32 %v63, %v75
  %v78 = vmul.f32 %v76, %v76
  %v79 = vmul.f32 %v77, %v77
  %v80 = vsel %vm66, %v78, 0.0
  %81 = vadd.xlane.f32.xlu0 %v80
  %v82 = vpop.xlane.xlu0 %81
  %v83 = vsel %vm66, %v79, 0.0
  %84 = vadd.xlane.f32.xlu0 %v83
  %v85 = vpop.xlane.xlu0 %84
  %v86 = vmul.f32 %v82, %v73
  %v87 = vmul.f32 %v85, %v73
  %v88 = vadd.f32 %v86, 1e-12
  %v89 = vadd.f32 %v87, 1e-12
  %v90 = vrsqrt.pop %v88
  %v91 = vrsqrt.pop %v89
  %v92 = vmul.f32 %v76, %v90
  %v93 = vmul.f32 %v77, %v91
  %v95 = vlaneseq
  %v96 = vshrl.u32 %v95, 7
  %v97 = vsub.s32 0, %v96
  %v98 = vrot.slane %v64, %v97
  %v100 = vmul.f32 %v92, %v98
  %v101 = vmul.f32 %v93, %v98
  %v103 = vlaneseq
  %v104 = vshrl.u32 %v103, 7
  %v105 = vsub.s32 0, %v104
  %v106 = vrot.slane %v65, %v105
  %v108 = vadd.f32 %v100, %v106
  %v109 = vadd.f32 %v101, %v106
  %v110 = vld [vmem:[%s4] sm:$0xff]
  %v111 = vld [vmem:[%s4 + $0x8] sm:$0xff]
  %v112 = vld [vmem:[%s4 + $0x10] sm:$0xff]
  %v113 = vld [vmem:[%s4 + $0x18] sm:$0xff]
  %v114 = vld [vmem:[%s4 + $0x20] sm:$0xff]
  %v115 = vld [vmem:[%s4 + $0x28] sm:$0xff]
  %v116 = vld [vmem:[%s4 + $0x30] sm:$0xff]
  %v117 = vld [vmem:[%s4 + $0x38] sm:$0xff]
  %v118 = vpack.c.bf16 %v109, %v108
  %v119 = vld [vmem:[%s5] sm:$0x3]
  %v121 = vlaneseq
  %v122 = vshrl.u32 %v121, 7
  %v123 = vsub.s32 0, %v122
  %v124 = vrot.slane %v119, %v123
  %v125 = vlaneseq
  %v126 = vshrl.u32 %v125, 7
  %v127 = vsub.s32 1, %v126
  %v128 = vrot.slane %v119, %v127
  %v139 = vunpack.c.l.b16 %v110
  %v140 = vunpack.c.h.b16 %v110
  %v141 = vunpack.c.l.b16 %v111
  %v142 = vunpack.c.h.b16 %v111
  %v143 = vunpack.c.l.b16 %v112
  %v144 = vunpack.c.h.b16 %v112
  %v145 = vunpack.c.l.b16 %v113
  %v146 = vunpack.c.h.b16 %v113
  %v147 = vunpack.c.l.b16 %v114
  %v148 = vunpack.c.h.b16 %v114
  %v149 = vunpack.c.l.b16 %v115
  %v150 = vunpack.c.h.b16 %v115
  %v151 = vunpack.c.l.b16 %v116
  %v152 = vunpack.c.h.b16 %v116
  %v153 = vunpack.c.l.b16 %v117
  %v154 = vunpack.c.h.b16 %v117
  %v155 = vpack.c.b16 %v141, %v139
  %v156 = vpack.c.b16 %v142, %v140
  %v157 = vpack.c.b16 %v145, %v143
  %v158 = vpack.c.b16 %v146, %v144
  %v159 = vpack.c.b16 %v149, %v147
  %v160 = vpack.c.b16 %v150, %v148
  %v161 = vpack.c.b16 %v153, %v151
  %v162 = vpack.c.b16 %v154, %v152
  %v172 = vsel %vm66, %v118, 0
  %174 = vmatprep.subr.bf16.mxu0 %v156
  %175 = vmatpush1.bf16.msra.mxu0 %v155
  %176 = vmatprep.subr.bf16.mxu0 %v158
  %177 = vmatpush1.bf16.msra.mxu0 %v157
  %178 = vmatprep.subr.bf16.mxu0 %v160
  %179 = vmatpush1.bf16.msra.mxu0 %v159
  %180 = vmatprep.subr.bf16.mxu0 %v162
  %181 = vmatpush1.bf16.msra.mxu0 %v161
  %182 = vmatprep.subr.bf16.mxu0 0
  %183 = vmatpush1.bf16.msra.mxu0 0
  %184 = vmatprep.subr.bf16.mxu0 0
  %185 = vmatpush1.bf16.msra.mxu0 0
  %186 = vmatprep.subr.bf16.mxu0 0
  %187 = vmatpush1.bf16.msra.mxu0 0
  %188 = vmatprep.subr.bf16.mxu0 0
  %189 = vmatpush1.bf16.msra.mxu0 0
  %190 = vmatprep.subr.bf16.mxu0 0
  %191 = vmatpush1.bf16.msra.mxu0 0
  %192 = vmatprep.subr.bf16.mxu0 0
  %193 = vmatpush1.bf16.msra.mxu0 0
  %194 = vmatprep.subr.bf16.mxu0 0
  %195 = vmatpush1.bf16.msra.mxu0 0
  %196 = vmatprep.subr.bf16.mxu0 0
  %197 = vmatpush1.bf16.msra.mxu0 0
  %198 = vmatprep.subr.bf16.mxu0 0
  %199 = vmatpush1.bf16.msra.mxu0 0
  %200 = vmatprep.subr.bf16.mxu0 0
  %201 = vmatpush1.bf16.msra.mxu0 0
  %202 = vmatprep.subr.bf16.mxu0 0
  %203 = vmatpush1.bf16.msra.mxu0 0
  %204 = vmatprep.subr.bf16.mxu0 0
  %205 = vmatpush1.bf16.msra.mxu0 0
  %206 = vmatprep.mubr.bf16.mxu0 0
  %207 = vmatmul.mubr.bf16.gmra.mrb[0].mxu0 %v172
  %v208 = vpop.f32.mrb[0].mxu0
  %v209 = vadd.f32 %v124, %v208
  %v210 = vpop.f32.mrb[0].mxu0
  %v211 = vadd.f32 %v128, %v210
  %v212 = vpop.f32.mrb[0].mxu0
  %v213 = vadd.f32 %v124, %v212
  %v214 = vpop.f32.mrb[0].mxu0
  %v215 = vadd.f32 %v128, %v214
  %216 = vdwg.mxu0
  %v217 = vld [vmem:[%s6] sm:$0xf]
  %v218 = vld [vmem:[%s6 + $0x4] sm:$0xf]
  %v219 = vld [vmem:[%s6 + $0x8] sm:$0xf]
  %v220 = vld [vmem:[%s6 + $0xc] sm:$0xf]
  %v221 = vld [vmem:[%s6 + $0x10] sm:$0xf]
  %v222 = vld [vmem:[%s6 + $0x14] sm:$0xf]
  %v223 = vld [vmem:[%s6 + $0x18] sm:$0xf]
  %v224 = vld [vmem:[%s6 + $0x1c] sm:$0xf]
  %v225 = vpack.c.bf16 %v213, %v209
  %227 = vrot.lane.b32.xlu0 %v225, 64
  %v228 = vpop.permute.xlu0 %227
  %vm229 = vcmask 130048
  %v231 = vsel %vm229, %v225, 0
  %v234 = vsel %vm229, %v228, 0
  %236 = vmatprep.subr.bf16.mxu0 0
  %237 = vmatpush1.bf16.xpose.msra.mxu0 %v234
  %238 = vmatprep.subr.bf16.mxu0 0
  %239 = vmatpush1.bf16.xpose.msra.mxu0 0
  %240 = vmatprep.subr.bf16.mxu0 0
  %241 = vmatpush1.bf16.xpose.msra.mxu0 0
  %242 = vmatprep.subr.bf16.mxu0 0
  %243 = vmatpush1.bf16.xpose.msra.mxu0 0
  %244 = vmatprep.subr.bf16.mxu0 0
  %245 = vmatpush1.bf16.xpose.msra.mxu0 0
  %246 = vmatprep.subr.bf16.mxu0 0
  %247 = vmatpush1.bf16.xpose.msra.mxu0 0
  %248 = vmatprep.subr.bf16.mxu0 0
  %249 = vmatpush1.bf16.xpose.msra.mxu0 0
  %250 = vmatprep.subr.bf16.mxu0 0
  %251 = vmatpush1.bf16.xpose.msra.mxu0 0
  %252 = vmatprep.subr.bf16.mxu0 0
  %253 = vmatpush1.bf16.xpose.msra.mxu0 0
  %254 = vmatprep.subr.bf16.mxu0 0
  %255 = vmatpush1.bf16.xpose.msra.mxu0 0
  %256 = vmatprep.subr.bf16.mxu0 0
  %257 = vmatpush1.bf16.xpose.msra.mxu0 0
  %258 = vmatprep.subr.bf16.mxu0 0
  %259 = vmatpush1.bf16.xpose.msra.mxu0 0
  %260 = vmatprep.subr.bf16.mxu0 0
  %261 = vmatpush1.bf16.xpose.msra.mxu0 0
  %262 = vmatprep.subr.bf16.mxu0 0
  %263 = vmatpush1.bf16.xpose.msra.mxu0 0
  %264 = vmatprep.subr.bf16.mxu0 0
  %265 = vmatpush1.bf16.xpose.msra.mxu0 0
  %266 = vmatprep.subr.bf16.mxu0 0
  %267 = vmatpush1.bf16.xpose.msra.mxu0 0
  %268 = vmatprep.mubr.bf16.mxu0 0
  %269 = vmatmul.mubr.bf16.gmra.mrb[0].mxu0 %v231
  %v270 = vpop.f32.mrb[0].mxu0
  %v271 = vadd.f32 0.0, %v270
  %v272 = vpop.f32.mrb[0].mxu0
  %v273 = vpop.f32.mrb[0].mxu0
  %v274 = vadd.f32 0.0, %v273
  %v275 = vpop.f32.mrb[0].mxu0
  %276 = vdwg.mxu0
  %v277 = vmul.f32 %v271, 0.25
  %v278 = vmul.f32 %v274, 0.25
  %v279 = vadd.f32 %v277, %v60
  %v280 = vadd.f32 %v278, %v61
  %v281 = vsel %vm229, %v279, -inf
  %282 = vmax.xlane.f32.xlu0 %v281
  %v283 = vpop.xlane.xlu0 %282
  %v284 = vsel %vm229, %v280, -inf
  %285 = vmax.xlane.f32.xlu0 %v284
  %v286 = vpop.xlane.xlu0 %285
  %v287 = vsub.f32 %v279, %v283
  %v288 = vsub.f32 %v280, %v286
  %v289 = vmul.f32 %v287, 1.442695
  %v290 = vpow.pop %v289
  %v291 = vmul.f32 %v288, 1.442695
  %v292 = vpow.pop %v291
  %v293 = vsel %vm229, %v290, 0.0
  %294 = vadd.xlane.f32.xlu0 %v293
  %v295 = vpop.xlane.xlu0 %294
  %v296 = vsel %vm229, %v292, 0.0
  %297 = vadd.xlane.f32.xlu0 %v296
  %v298 = vpop.xlane.xlu0 %297
  %v299 = vrcp.pop %v295
  %v300 = vrcp.pop %v298
  %v301 = vmul.f32 %v290, %v299
  %v302 = vmul.f32 %v292, %v300
  %v303 = vpack.c.bf16 %v302, %v301
  %v304 = vpack.c.bf16 %v215, %v211
  %v306 = vsel %vm229, %v303, 0
  %308 = vmatprep.subr.bf16.mxu0 0
  %309 = vmatpush1.bf16.msra.mxu0 %v304
  %310 = vmatprep.subr.bf16.mxu0 0
  %311 = vmatpush1.bf16.msra.mxu0 0
  %312 = vmatprep.subr.bf16.mxu0 0
  %313 = vmatpush1.bf16.msra.mxu0 0
  %314 = vmatprep.subr.bf16.mxu0 0
  %315 = vmatpush1.bf16.msra.mxu0 0
  %316 = vmatprep.subr.bf16.mxu0 0
  %317 = vmatpush1.bf16.msra.mxu0 0
  %318 = vmatprep.subr.bf16.mxu0 0
  %319 = vmatpush1.bf16.msra.mxu0 0
  %320 = vmatprep.subr.bf16.mxu0 0
  %321 = vmatpush1.bf16.msra.mxu0 0
  %322 = vmatprep.subr.bf16.mxu0 0
  %323 = vmatpush1.bf16.msra.mxu0 0
  %324 = vmatprep.subr.bf16.mxu0 0
  %325 = vmatpush1.bf16.msra.mxu0 0
  %326 = vmatprep.subr.bf16.mxu0 0
  %327 = vmatpush1.bf16.msra.mxu0 0
  %328 = vmatprep.subr.bf16.mxu0 0
  %329 = vmatpush1.bf16.msra.mxu0 0
  %330 = vmatprep.subr.bf16.mxu0 0
  %331 = vmatpush1.bf16.msra.mxu0 0
  %332 = vmatprep.subr.bf16.mxu0 0
  %333 = vmatpush1.bf16.msra.mxu0 0
  %334 = vmatprep.subr.bf16.mxu0 0
  %335 = vmatpush1.bf16.msra.mxu0 0
  %336 = vmatprep.subr.bf16.mxu0 0
  %337 = vmatpush1.bf16.msra.mxu0 0
  %338 = vmatprep.subr.bf16.mxu0 0
  %339 = vmatpush1.bf16.msra.mxu0 0
  %340 = vmatprep.mubr.bf16.mxu0 0
  %341 = vmatmul.mubr.bf16.gmra.mrb[0].mxu0 %v306
  %v342 = vpop.f32.mrb[0].mxu0
  %v343 = vadd.f32 0.0, %v342
  %v344 = vpop.f32.mrb[0].mxu0
  %v345 = vpop.f32.mrb[0].mxu0
  %v346 = vadd.f32 0.0, %v345
  %v347 = vpop.f32.mrb[0].mxu0
  %348 = vdwg.mxu0
  %v349 = vpack.c.bf16 %v346, %v343
  %350 = vrot.lane.b32.xlu0 %v225, 112
  %v351 = vpop.permute.xlu0 %350
  %352 = vrot.lane.b32.xlu0 %v225, 48
  %v353 = vpop.permute.xlu0 %352
  %v355 = vsel %vm229, %v351, 0
  %v358 = vsel %vm229, %v353, 0
  %360 = vmatprep.subr.bf16.mxu0 0
  %361 = vmatpush1.bf16.xpose.msra.mxu0 %v358
  %362 = vmatprep.subr.bf16.mxu0 0
  %363 = vmatpush1.bf16.xpose.msra.mxu0 0
  %364 = vmatprep.subr.bf16.mxu0 0
  %365 = vmatpush1.bf16.xpose.msra.mxu0 0
  %366 = vmatprep.subr.bf16.mxu0 0
  %367 = vmatpush1.bf16.xpose.msra.mxu0 0
  %368 = vmatprep.subr.bf16.mxu0 0
  %369 = vmatpush1.bf16.xpose.msra.mxu0 0
  %370 = vmatprep.subr.bf16.mxu0 0
  %371 = vmatpush1.bf16.xpose.msra.mxu0 0
  %372 = vmatprep.subr.bf16.mxu0 0
  %373 = vmatpush1.bf16.xpose.msra.mxu0 0
  %374 = vmatprep.subr.bf16.mxu0 0
  %375 = vmatpush1.bf16.xpose.msra.mxu0 0
  %376 = vmatprep.subr.bf16.mxu0 0
  %377 = vmatpush1.bf16.xpose.msra.mxu0 0
  %378 = vmatprep.subr.bf16.mxu0 0
  %379 = vmatpush1.bf16.xpose.msra.mxu0 0
  %380 = vmatprep.subr.bf16.mxu0 0
  %381 = vmatpush1.bf16.xpose.msra.mxu0 0
  %382 = vmatprep.subr.bf16.mxu0 0
  %383 = vmatpush1.bf16.xpose.msra.mxu0 0
  %384 = vmatprep.subr.bf16.mxu0 0
  %385 = vmatpush1.bf16.xpose.msra.mxu0 0
  %386 = vmatprep.subr.bf16.mxu0 0
  %387 = vmatpush1.bf16.xpose.msra.mxu0 0
  %388 = vmatprep.subr.bf16.mxu0 0
  %389 = vmatpush1.bf16.xpose.msra.mxu0 0
  %390 = vmatprep.subr.bf16.mxu0 0
  %391 = vmatpush1.bf16.xpose.msra.mxu0 0
  %392 = vmatprep.mubr.bf16.mxu0 0
  %393 = vmatmul.mubr.bf16.gmra.mrb[0].mxu0 %v355
  %v394 = vpop.f32.mrb[0].mxu0
  %v395 = vadd.f32 0.0, %v394
  %v396 = vpop.f32.mrb[0].mxu0
  %v397 = vpop.f32.mrb[0].mxu0
  %v398 = vadd.f32 0.0, %v397
  %v399 = vpop.f32.mrb[0].mxu0
  %400 = vdwg.mxu0
  %v401 = vmul.f32 %v395, 0.25
  %v402 = vmul.f32 %v398, 0.25
  %v403 = vadd.f32 %v401, %v60
  %v404 = vadd.f32 %v402, %v61
  %v405 = vsel %vm229, %v403, -inf
  %406 = vmax.xlane.f32.xlu0 %v405
  %v407 = vpop.xlane.xlu0 %406
  %v408 = vsel %vm229, %v404, -inf
  %409 = vmax.xlane.f32.xlu0 %v408
  %v410 = vpop.xlane.xlu0 %409
  %v411 = vsub.f32 %v403, %v407
  %v412 = vsub.f32 %v404, %v410
  %v413 = vmul.f32 %v411, 1.442695
  %v414 = vpow.pop %v413
  %v415 = vmul.f32 %v412, 1.442695
  %v416 = vpow.pop %v415
  %v417 = vsel %vm229, %v414, 0.0
  %418 = vadd.xlane.f32.xlu0 %v417
  %v419 = vpop.xlane.xlu0 %418
  %v420 = vsel %vm229, %v416, 0.0
  %421 = vadd.xlane.f32.xlu0 %v420
  %v422 = vpop.xlane.xlu0 %421
  %v423 = vrcp.pop %v419
  %v424 = vrcp.pop %v422
  %v425 = vmul.f32 %v414, %v423
  %v426 = vmul.f32 %v416, %v424
  %v427 = vpack.c.bf16 %v426, %v425
  %429 = vrot.lane.b32.xlu0 %v304, 112
  %v430 = vpop.permute.xlu0 %429
  %v433 = vsel %vm229, %v427, 0
  %435 = vmatprep.subr.bf16.mxu0 0
  %436 = vmatpush1.bf16.msra.mxu0 %v430
  %437 = vmatprep.subr.bf16.mxu0 0
  %438 = vmatpush1.bf16.msra.mxu0 0
  %439 = vmatprep.subr.bf16.mxu0 0
  %440 = vmatpush1.bf16.msra.mxu0 0
  %441 = vmatprep.subr.bf16.mxu0 0
  %442 = vmatpush1.bf16.msra.mxu0 0
  %443 = vmatprep.subr.bf16.mxu0 0
  %444 = vmatpush1.bf16.msra.mxu0 0
  %445 = vmatprep.subr.bf16.mxu0 0
  %446 = vmatpush1.bf16.msra.mxu0 0
  %447 = vmatprep.subr.bf16.mxu0 0
  %448 = vmatpush1.bf16.msra.mxu0 0
  %449 = vmatprep.subr.bf16.mxu0 0
  %450 = vmatpush1.bf16.msra.mxu0 0
  %451 = vmatprep.subr.bf16.mxu0 0
  %452 = vmatpush1.bf16.msra.mxu0 0
  %453 = vmatprep.subr.bf16.mxu0 0
  %454 = vmatpush1.bf16.msra.mxu0 0
  %455 = vmatprep.subr.bf16.mxu0 0
  %456 = vmatpush1.bf16.msra.mxu0 0
  %457 = vmatprep.subr.bf16.mxu0 0
  %458 = vmatpush1.bf16.msra.mxu0 0
  %459 = vmatprep.subr.bf16.mxu0 0
  %460 = vmatpush1.bf16.msra.mxu0 0
  %461 = vmatprep.subr.bf16.mxu0 0
  %462 = vmatpush1.bf16.msra.mxu0 0
  %463 = vmatprep.subr.bf16.mxu0 0
  %464 = vmatpush1.bf16.msra.mxu0 0
  %465 = vmatprep.subr.bf16.mxu0 0
  %466 = vmatpush1.bf16.msra.mxu0 0
  %467 = vmatprep.mubr.bf16.mxu0 0
  %468 = vmatmul.mubr.bf16.gmra.mrb[0].mxu0 %v433
  %v469 = vpop.f32.mrb[0].mxu0
  %v470 = vadd.f32 0.0, %v469
  %v471 = vpop.f32.mrb[0].mxu0
  %v472 = vpop.f32.mrb[0].mxu0
  %v473 = vadd.f32 0.0, %v472
  %v474 = vpop.f32.mrb[0].mxu0
  %475 = vdwg.mxu0
  %v476 = vpack.c.bf16 %v473, %v470
  %v479 = vunpack.c.l.b16 %v219
  %v480 = vunpack.c.l.b16 %v220
  %v481 = vpack.c.b16 %v480, %v479
  %v484 = vsel %vm229, %v476, 0
  %486 = vmatprep.subr.bf16.mxu0 0
  %487 = vmatpush1.bf16.msra.mxu0 %v481
  %488 = vmatprep.subr.bf16.mxu0 0
  %489 = vmatpush1.bf16.msra.mxu0 0
  %490 = vmatprep.subr.bf16.mxu0 0
  %491 = vmatpush1.bf16.msra.mxu0 0
  %492 = vmatprep.subr.bf16.mxu0 0
  %493 = vmatpush1.bf16.msra.mxu0 0
  %494 = vmatprep.subr.bf16.mxu0 0
  %495 = vmatpush1.bf16.msra.mxu0 0
  %496 = vmatprep.subr.bf16.mxu0 0
  %497 = vmatpush1.bf16.msra.mxu0 0
  %498 = vmatprep.subr.bf16.mxu0 0
  %499 = vmatpush1.bf16.msra.mxu0 0
  %500 = vmatprep.subr.bf16.mxu0 0
  %501 = vmatpush1.bf16.msra.mxu0 0
  %502 = vmatprep.subr.bf16.mxu0 0
  %503 = vmatpush1.bf16.msra.mxu0 0
  %504 = vmatprep.subr.bf16.mxu0 0
  %505 = vmatpush1.bf16.msra.mxu0 0
  %506 = vmatprep.subr.bf16.mxu0 0
  %507 = vmatpush1.bf16.msra.mxu0 0
  %508 = vmatprep.subr.bf16.mxu0 0
  %509 = vmatpush1.bf16.msra.mxu0 0
  %510 = vmatprep.subr.bf16.mxu0 0
  %511 = vmatpush1.bf16.msra.mxu0 0
  %512 = vmatprep.subr.bf16.mxu0 0
  %513 = vmatpush1.bf16.msra.mxu0 0
  %514 = vmatprep.subr.bf16.mxu0 0
  %515 = vmatpush1.bf16.msra.mxu0 0
  %516 = vmatprep.subr.bf16.mxu0 0
  %517 = vmatpush1.bf16.msra.mxu0 0
  %518 = vmatprep.mubr.bf16.mxu0 0
  %519 = vmatmul.mubr.bf16.gmra.mrb[0].mxu0 %v484
  %v520 = vpop.f32.mrb[0].mxu0
  %v521 = vadd.f32 0.0, %v520
  %v522 = vpop.f32.mrb[0].mxu0
  %v523 = vpop.f32.mrb[0].mxu0
  %v524 = vadd.f32 0.0, %v523
  %v525 = vpop.f32.mrb[0].mxu0
  %526 = vdwg.mxu0
  %v529 = vunpack.c.l.b16 %v217
  %v530 = vunpack.c.l.b16 %v218
  %v531 = vpack.c.b16 %v530, %v529
  %v534 = vsel %vm229, %v349, 0
  %536 = vmatprep.subr.bf16.mxu0 0
  %537 = vmatpush1.bf16.msra.mxu0 %v531
  %538 = vmatprep.subr.bf16.mxu0 0
  %539 = vmatpush1.bf16.msra.mxu0 0
  %540 = vmatprep.subr.bf16.mxu0 0
  %541 = vmatpush1.bf16.msra.mxu0 0
  %542 = vmatprep.subr.bf16.mxu0 0
  %543 = vmatpush1.bf16.msra.mxu0 0
  %544 = vmatprep.subr.bf16.mxu0 0
  %545 = vmatpush1.bf16.msra.mxu0 0
  %546 = vmatprep.subr.bf16.mxu0 0
  %547 = vmatpush1.bf16.msra.mxu0 0
  %548 = vmatprep.subr.bf16.mxu0 0
  %549 = vmatpush1.bf16.msra.mxu0 0
  %550 = vmatprep.subr.bf16.mxu0 0
  %551 = vmatpush1.bf16.msra.mxu0 0
  %552 = vmatprep.subr.bf16.mxu0 0
  %553 = vmatpush1.bf16.msra.mxu0 0
  %554 = vmatprep.subr.bf16.mxu0 0
  %555 = vmatpush1.bf16.msra.mxu0 0
  %556 = vmatprep.subr.bf16.mxu0 0
  %557 = vmatpush1.bf16.msra.mxu0 0
  %558 = vmatprep.subr.bf16.mxu0 0
  %559 = vmatpush1.bf16.msra.mxu0 0
  %560 = vmatprep.subr.bf16.mxu0 0
  %561 = vmatpush1.bf16.msra.mxu0 0
  %562 = vmatprep.subr.bf16.mxu0 0
  %563 = vmatpush1.bf16.msra.mxu0 0
  %564 = vmatprep.subr.bf16.mxu0 0
  %565 = vmatpush1.bf16.msra.mxu0 0
  %566 = vmatprep.subr.bf16.mxu0 0
  %567 = vmatpush1.bf16.msra.mxu0 0
  %568 = vmatprep.mubr.bf16.mxu0 0
  %569 = vmatmul.mubr.bf16.gmra.mrb[0].mxu0 %v534
  %v570 = vpop.f32.mrb[0].mxu0
  %v571 = vadd.f32 %v521, %v570
  %v572 = vpop.f32.mrb[0].mxu0
  %v573 = vpop.f32.mrb[0].mxu0
  %v574 = vadd.f32 %v524, %v573
  %v575 = vpop.f32.mrb[0].mxu0
  %576 = vdwg.mxu0
  %577 = vrot.lane.b32.xlu0 %v225, 96
  %v578 = vpop.permute.xlu0 %577
  %579 = vrot.lane.b32.xlu0 %v225, 32
  %v580 = vpop.permute.xlu0 %579
  %v582 = vsel %vm229, %v578, 0
  %v585 = vsel %vm229, %v580, 0
  %587 = vmatprep.subr.bf16.mxu0 0
  %588 = vmatpush1.bf16.xpose.msra.mxu0 %v585
  %589 = vmatprep.subr.bf16.mxu0 0
  %590 = vmatpush1.bf16.xpose.msra.mxu0 0
  %591 = vmatprep.subr.bf16.mxu0 0
  %592 = vmatpush1.bf16.xpose.msra.mxu0 0
  %593 = vmatprep.subr.bf16.mxu0 0
  %594 = vmatpush1.bf16.xpose.msra.mxu0 0
  %595 = vmatprep.subr.bf16.mxu0 0
  %596 = vmatpush1.bf16.xpose.msra.mxu0 0
  %597 = vmatprep.subr.bf16.mxu0 0
  %598 = vmatpush1.bf16.xpose.msra.mxu0 0
  %599 = vmatprep.subr.bf16.mxu0 0
  %600 = vmatpush1.bf16.xpose.msra.mxu0 0
  %601 = vmatprep.subr.bf16.mxu0 0
  %602 = vmatpush1.bf16.xpose.msra.mxu0 0
  %603 = vmatprep.subr.bf16.mxu0 0
  %604 = vmatpush1.bf16.xpose.msra.mxu0 0
  %605 = vmatprep.subr.bf16.mxu0 0
  %606 = vmatpush1.bf16.xpose.msra.mxu0 0
  %607 = vmatprep.subr.bf16.mxu0 0
  %608 = vmatpush1.bf16.xpose.msra.mxu0 0
  %609 = vmatprep.subr.bf16.mxu0 0
  %610 = vmatpush1.bf16.xpose.msra.mxu0 0
  %611 = vmatprep.subr.bf16.mxu0 0
  %612 = vmatpush1.bf16.xpose.msra.mxu0 0
  %613 = vmatprep.subr.bf16.mxu0 0
  %614 = vmatpush1.bf16.xpose.msra.mxu0 0
  %615 = vmatprep.subr.bf16.mxu0 0
  %616 = vmatpush1.bf16.xpose.msra.mxu0 0
  %617 = vmatprep.subr.bf16.mxu0 0
  %618 = vmatpush1.bf16.xpose.msra.mxu0 0
  %619 = vmatprep.mubr.bf16.mxu0 0
  %620 = vmatmul.mubr.bf16.gmra.mrb[0].mxu0 %v582
  %v621 = vpop.f32.mrb[0].mxu0
  %v622 = vadd.f32 0.0, %v621
  %v623 = vpop.f32.mrb[0].mxu0
  %v624 = vpop.f32.mrb[0].mxu0
  %v625 = vadd.f32 0.0, %v624
  %v626 = vpop.f32.mrb[0].mxu0
  %627 = vdwg.mxu0
  %v628 = vmul.f32 %v622, 0.25
  %v629 = vmul.f32 %v625, 0.25
  %v630 = vadd.f32 %v628, %v60
  %v631 = vadd.f32 %v629, %v61
  %v632 = vsel %vm229, %v630, -inf
  %633 = vmax.xlane.f32.xlu0 %v632
  %v634 = vpop.xlane.xlu0 %633
  %v635 = vsel %vm229, %v631, -inf
  %636 = vmax.xlane.f32.xlu0 %v635
  %v637 = vpop.xlane.xlu0 %636
  %v638 = vsub.f32 %v630, %v634
  %v639 = vsub.f32 %v631, %v637
  %v640 = vmul.f32 %v638, 1.442695
  %v641 = vpow.pop %v640
  %v642 = vmul.f32 %v639, 1.442695
  %v643 = vpow.pop %v642
  %v644 = vsel %vm229, %v641, 0.0
  %645 = vadd.xlane.f32.xlu0 %v644
  %v646 = vpop.xlane.xlu0 %645
  %v647 = vsel %vm229, %v643, 0.0
  %648 = vadd.xlane.f32.xlu0 %v647
  %v649 = vpop.xlane.xlu0 %648
  %v650 = vrcp.pop %v646
  %v651 = vrcp.pop %v649
  %v652 = vmul.f32 %v641, %v650
  %v653 = vmul.f32 %v643, %v651
  %v654 = vpack.c.bf16 %v653, %v652
  %655 = vrot.lane.b32.xlu0 %v304, 96
  %v656 = vpop.permute.xlu0 %655
  %v659 = vsel %vm229, %v654, 0
  %661 = vmatprep.subr.bf16.mxu0 0
  %662 = vmatpush1.bf16.msra.mxu0 %v656
  %663 = vmatprep.subr.bf16.mxu0 0
  %664 = vmatpush1.bf16.msra.mxu0 0
  %665 = vmatprep.subr.bf16.mxu0 0
  %666 = vmatpush1.bf16.msra.mxu0 0
  %667 = vmatprep.subr.bf16.mxu0 0
  %668 = vmatpush1.bf16.msra.mxu0 0
  %669 = vmatprep.subr.bf16.mxu0 0
  %670 = vmatpush1.bf16.msra.mxu0 0
  %671 = vmatprep.subr.bf16.mxu0 0
  %672 = vmatpush1.bf16.msra.mxu0 0
  %673 = vmatprep.subr.bf16.mxu0 0
  %674 = vmatpush1.bf16.msra.mxu0 0
  %675 = vmatprep.subr.bf16.mxu0 0
  %676 = vmatpush1.bf16.msra.mxu0 0
  %677 = vmatprep.subr.bf16.mxu0 0
  %678 = vmatpush1.bf16.msra.mxu0 0
  %679 = vmatprep.subr.bf16.mxu0 0
  %680 = vmatpush1.bf16.msra.mxu0 0
  %681 = vmatprep.subr.bf16.mxu0 0
  %682 = vmatpush1.bf16.msra.mxu0 0
  %683 = vmatprep.subr.bf16.mxu0 0
  %684 = vmatpush1.bf16.msra.mxu0 0
  %685 = vmatprep.subr.bf16.mxu0 0
  %686 = vmatpush1.bf16.msra.mxu0 0
  %687 = vmatprep.subr.bf16.mxu0 0
  %688 = vmatpush1.bf16.msra.mxu0 0
  %689 = vmatprep.subr.bf16.mxu0 0
  %690 = vmatpush1.bf16.msra.mxu0 0
  %691 = vmatprep.subr.bf16.mxu0 0
  %692 = vmatpush1.bf16.msra.mxu0 0
  %693 = vmatprep.mubr.bf16.mxu0 0
  %694 = vmatmul.mubr.bf16.gmra.mrb[0].mxu0 %v659
  %v695 = vpop.f32.mrb[0].mxu0
  %v696 = vadd.f32 0.0, %v695
  %v697 = vpop.f32.mrb[0].mxu0
  %v698 = vpop.f32.mrb[0].mxu0
  %v699 = vadd.f32 0.0, %v698
  %v700 = vpop.f32.mrb[0].mxu0
  %701 = vdwg.mxu0
  %v702 = vpack.c.bf16 %v699, %v696
  %v705 = vunpack.c.l.b16 %v221
  %v706 = vunpack.c.l.b16 %v222
  %v707 = vpack.c.b16 %v706, %v705
  %v710 = vsel %vm229, %v702, 0
  %712 = vmatprep.subr.bf16.mxu0 0
  %713 = vmatpush1.bf16.msra.mxu0 %v707
  %714 = vmatprep.subr.bf16.mxu0 0
  %715 = vmatpush1.bf16.msra.mxu0 0
  %716 = vmatprep.subr.bf16.mxu0 0
  %717 = vmatpush1.bf16.msra.mxu0 0
  %718 = vmatprep.subr.bf16.mxu0 0
  %719 = vmatpush1.bf16.msra.mxu0 0
  %720 = vmatprep.subr.bf16.mxu0 0
  %721 = vmatpush1.bf16.msra.mxu0 0
  %722 = vmatprep.subr.bf16.mxu0 0
  %723 = vmatpush1.bf16.msra.mxu0 0
  %724 = vmatprep.subr.bf16.mxu0 0
  %725 = vmatpush1.bf16.msra.mxu0 0
  %726 = vmatprep.subr.bf16.mxu0 0
  %727 = vmatpush1.bf16.msra.mxu0 0
  %728 = vmatprep.subr.bf16.mxu0 0
  %729 = vmatpush1.bf16.msra.mxu0 0
  %730 = vmatprep.subr.bf16.mxu0 0
  %731 = vmatpush1.bf16.msra.mxu0 0
  %732 = vmatprep.subr.bf16.mxu0 0
  %733 = vmatpush1.bf16.msra.mxu0 0
  %734 = vmatprep.subr.bf16.mxu0 0
  %735 = vmatpush1.bf16.msra.mxu0 0
  %736 = vmatprep.subr.bf16.mxu0 0
  %737 = vmatpush1.bf16.msra.mxu0 0
  %738 = vmatprep.subr.bf16.mxu0 0
  %739 = vmatpush1.bf16.msra.mxu0 0
  %740 = vmatprep.subr.bf16.mxu0 0
  %741 = vmatpush1.bf16.msra.mxu0 0
  %742 = vmatprep.subr.bf16.mxu0 0
  %743 = vmatpush1.bf16.msra.mxu0 0
  %744 = vmatprep.mubr.bf16.mxu0 0
  %745 = vmatmul.mubr.bf16.gmra.mrb[0].mxu0 %v710
  %v746 = vpop.f32.mrb[0].mxu0
  %v747 = vadd.f32 0.0, %v746
  %v748 = vpop.f32.mrb[0].mxu0
  %v749 = vpop.f32.mrb[0].mxu0
  %v750 = vadd.f32 0.0, %v749
  %v751 = vpop.f32.mrb[0].mxu0
  %752 = vdwg.mxu0
  %v753 = vadd.f32 %v571, %v747
  %v754 = vadd.f32 %v574, %v750
  %755 = vrot.lane.b32.xlu0 %v225, 80
  %v756 = vpop.permute.xlu0 %755
  %757 = vrot.lane.b32.xlu0 %v225, 16
  %v758 = vpop.permute.xlu0 %757
  %v760 = vsel %vm229, %v756, 0
  %v763 = vsel %vm229, %v758, 0
  %765 = vmatprep.subr.bf16.mxu0 0
  %766 = vmatpush1.bf16.xpose.msra.mxu0 %v763
  %767 = vmatprep.subr.bf16.mxu0 0
  %768 = vmatpush1.bf16.xpose.msra.mxu0 0
  %769 = vmatprep.subr.bf16.mxu0 0
  %770 = vmatpush1.bf16.xpose.msra.mxu0 0
  %771 = vmatprep.subr.bf16.mxu0 0
  %772 = vmatpush1.bf16.xpose.msra.mxu0 0
  %773 = vmatprep.subr.bf16.mxu0 0
  %774 = vmatpush1.bf16.xpose.msra.mxu0 0
  %775 = vmatprep.subr.bf16.mxu0 0
  %776 = vmatpush1.bf16.xpose.msra.mxu0 0
  %777 = vmatprep.subr.bf16.mxu0 0
  %778 = vmatpush1.bf16.xpose.msra.mxu0 0
  %779 = vmatprep.subr.bf16.mxu0 0
  %780 = vmatpush1.bf16.xpose.msra.mxu0 0
  %781 = vmatprep.subr.bf16.mxu0 0
  %782 = vmatpush1.bf16.xpose.msra.mxu0 0
  %783 = vmatprep.subr.bf16.mxu0 0
  %784 = vmatpush1.bf16.xpose.msra.mxu0 0
  %785 = vmatprep.subr.bf16.mxu0 0
  %786 = vmatpush1.bf16.xpose.msra.mxu0 0
  %787 = vmatprep.subr.bf16.mxu0 0
  %788 = vmatpush1.bf16.xpose.msra.mxu0 0
  %789 = vmatprep.subr.bf16.mxu0 0
  %790 = vmatpush1.bf16.xpose.msra.mxu0 0
  %791 = vmatprep.subr.bf16.mxu0 0
  %792 = vmatpush1.bf16.xpose.msra.mxu0 0
  %793 = vmatprep.subr.bf16.mxu0 0
  %794 = vmatpush1.bf16.xpose.msra.mxu0 0
  %795 = vmatprep.subr.bf16.mxu0 0
  %796 = vmatpush1.bf16.xpose.msra.mxu0 0
  %797 = vmatprep.mubr.bf16.mxu0 0
  %798 = vmatmul.mubr.bf16.gmra.mrb[0].mxu0 %v760
  %v799 = vpop.f32.mrb[0].mxu0
  %v800 = vadd.f32 0.0, %v799
  %v801 = vpop.f32.mrb[0].mxu0
  %v802 = vpop.f32.mrb[0].mxu0
  %v803 = vadd.f32 0.0, %v802
  %v804 = vpop.f32.mrb[0].mxu0
  %805 = vdwg.mxu0
  %v806 = vmul.f32 %v800, 0.25
  %v807 = vmul.f32 %v803, 0.25
  %v808 = vadd.f32 %v806, %v60
  %v809 = vadd.f32 %v807, %v61
  %v810 = vsel %vm229, %v808, -inf
  %811 = vmax.xlane.f32.xlu0 %v810
  %v812 = vpop.xlane.xlu0 %811
  %v813 = vsel %vm229, %v809, -inf
  %814 = vmax.xlane.f32.xlu0 %v813
  %v815 = vpop.xlane.xlu0 %814
  %v816 = vsub.f32 %v808, %v812
  %v817 = vsub.f32 %v809, %v815
  %v818 = vmul.f32 %v816, 1.442695
  %v819 = vpow.pop %v818
  %v820 = vmul.f32 %v817, 1.442695
  %v821 = vpow.pop %v820
  %v822 = vsel %vm229, %v819, 0.0
  %823 = vadd.xlane.f32.xlu0 %v822
  %v824 = vpop.xlane.xlu0 %823
  %v825 = vsel %vm229, %v821, 0.0
  %826 = vadd.xlane.f32.xlu0 %v825
  %v827 = vpop.xlane.xlu0 %826
  %v828 = vrcp.pop %v824
  %v829 = vrcp.pop %v827
  %v830 = vmul.f32 %v819, %v828
  %v831 = vmul.f32 %v821, %v829
  %v832 = vpack.c.bf16 %v831, %v830
  %833 = vrot.lane.b32.xlu0 %v304, 80
  %v834 = vpop.permute.xlu0 %833
  %v837 = vsel %vm229, %v832, 0
  %839 = vmatprep.subr.bf16.mxu0 0
  %840 = vmatpush1.bf16.msra.mxu0 %v834
  %841 = vmatprep.subr.bf16.mxu0 0
  %842 = vmatpush1.bf16.msra.mxu0 0
  %843 = vmatprep.subr.bf16.mxu0 0
  %844 = vmatpush1.bf16.msra.mxu0 0
  %845 = vmatprep.subr.bf16.mxu0 0
  %846 = vmatpush1.bf16.msra.mxu0 0
  %847 = vmatprep.subr.bf16.mxu0 0
  %848 = vmatpush1.bf16.msra.mxu0 0
  %849 = vmatprep.subr.bf16.mxu0 0
  %850 = vmatpush1.bf16.msra.mxu0 0
  %851 = vmatprep.subr.bf16.mxu0 0
  %852 = vmatpush1.bf16.msra.mxu0 0
  %853 = vmatprep.subr.bf16.mxu0 0
  %854 = vmatpush1.bf16.msra.mxu0 0
  %855 = vmatprep.subr.bf16.mxu0 0
  %856 = vmatpush1.bf16.msra.mxu0 0
  %857 = vmatprep.subr.bf16.mxu0 0
  %858 = vmatpush1.bf16.msra.mxu0 0
  %859 = vmatprep.subr.bf16.mxu0 0
  %860 = vmatpush1.bf16.msra.mxu0 0
  %861 = vmatprep.subr.bf16.mxu0 0
  %862 = vmatpush1.bf16.msra.mxu0 0
  %863 = vmatprep.subr.bf16.mxu0 0
  %864 = vmatpush1.bf16.msra.mxu0 0
  %865 = vmatprep.subr.bf16.mxu0 0
  %866 = vmatpush1.bf16.msra.mxu0 0
  %867 = vmatprep.subr.bf16.mxu0 0
  %868 = vmatpush1.bf16.msra.mxu0 0
  %869 = vmatprep.subr.bf16.mxu0 0
  %870 = vmatpush1.bf16.msra.mxu0 0
  %871 = vmatprep.mubr.bf16.mxu0 0
  %872 = vmatmul.mubr.bf16.gmra.mrb[0].mxu0 %v837
  %v873 = vpop.f32.mrb[0].mxu0
  %v874 = vadd.f32 0.0, %v873
  %v875 = vpop.f32.mrb[0].mxu0
  %v876 = vpop.f32.mrb[0].mxu0
  %v877 = vadd.f32 0.0, %v876
  %v878 = vpop.f32.mrb[0].mxu0
  %879 = vdwg.mxu0
  %v880 = vpack.c.bf16 %v877, %v874
  %v883 = vunpack.c.l.b16 %v223
  %v884 = vunpack.c.l.b16 %v224
  %v885 = vpack.c.b16 %v884, %v883
  %v888 = vsel %vm229, %v880, 0
  %890 = vmatprep.subr.bf16.mxu0 0
  %891 = vmatpush1.bf16.msra.mxu0 %v885
  %892 = vmatprep.subr.bf16.mxu0 0
  %893 = vmatpush1.bf16.msra.mxu0 0
  %894 = vmatprep.subr.bf16.mxu0 0
  %895 = vmatpush1.bf16.msra.mxu0 0
  %896 = vmatprep.subr.bf16.mxu0 0
  %897 = vmatpush1.bf16.msra.mxu0 0
  %898 = vmatprep.subr.bf16.mxu0 0
  %899 = vmatpush1.bf16.msra.mxu0 0
  %900 = vmatprep.subr.bf16.mxu0 0
  %901 = vmatpush1.bf16.msra.mxu0 0
  %902 = vmatprep.subr.bf16.mxu0 0
  %903 = vmatpush1.bf16.msra.mxu0 0
  %904 = vmatprep.subr.bf16.mxu0 0
  %905 = vmatpush1.bf16.msra.mxu0 0
  %906 = vmatprep.subr.bf16.mxu0 0
  %907 = vmatpush1.bf16.msra.mxu0 0
  %908 = vmatprep.subr.bf16.mxu0 0
  %909 = vmatpush1.bf16.msra.mxu0 0
  %910 = vmatprep.subr.bf16.mxu0 0
  %911 = vmatpush1.bf16.msra.mxu0 0
  %912 = vmatprep.subr.bf16.mxu0 0
  %913 = vmatpush1.bf16.msra.mxu0 0
  %914 = vmatprep.subr.bf16.mxu0 0
  %915 = vmatpush1.bf16.msra.mxu0 0
  %916 = vmatprep.subr.bf16.mxu0 0
  %917 = vmatpush1.bf16.msra.mxu0 0
  %918 = vmatprep.subr.bf16.mxu0 0
  %919 = vmatpush1.bf16.msra.mxu0 0
  %920 = vmatprep.subr.bf16.mxu0 0
  %921 = vmatpush1.bf16.msra.mxu0 0
  %922 = vmatprep.mubr.bf16.mxu0 0
  %923 = vmatmul.mubr.bf16.gmra.mrb[0].mxu0 %v888
  %v924 = vpop.f32.mrb[0].mxu0
  %v925 = vadd.f32 0.0, %v924
  %v926 = vpop.f32.mrb[0].mxu0
  %v927 = vpop.f32.mrb[0].mxu0
  %v928 = vadd.f32 0.0, %v927
  %v929 = vpop.f32.mrb[0].mxu0
  %930 = vdwg.mxu0
  %v931 = vadd.f32 %v753, %v925
  %v932 = vadd.f32 %v754, %v928
  %v933 = vld [vmem:[%s7] sm:$0x1]
  %v935 = vlaneseq
  %v936 = vshrl.u32 %v935, 7
  %v937 = vsub.s32 0, %v936
  %v938 = vrot.slane %v933, %v937
  %v940 = vadd.f32 %v931, %v938
  %v941 = vadd.f32 %v932, %v938
  %v942 = vadd.f32 %v940, %v108
  %v943 = vadd.f32 %v941, %v109
  %v944 = vld [vmem:[%s8] sm:$0x1]
  %v945 = vld [vmem:[%s9] sm:$0x1]
  %v946 = vsel %vm66, %v942, 0.0
  %947 = vadd.xlane.f32.xlu0 %v946
  %v948 = vpop.xlane.xlu0 %947
  %v949 = vsel %vm66, %v943, 0.0
  %950 = vadd.xlane.f32.xlu0 %v949
  %v951 = vpop.xlane.xlu0 %950
  %v952 = vmul.f32 %v948, %v73
  %v953 = vmul.f32 %v951, %v73
  %v954 = vsub.f32 %v942, %v952
  %v955 = vsub.f32 %v943, %v953
  %v956 = vmul.f32 %v954, %v954
  %v957 = vmul.f32 %v955, %v955
  %v958 = vsel %vm66, %v956, 0.0
  %959 = vadd.xlane.f32.xlu0 %v958
  %v960 = vpop.xlane.xlu0 %959
  %v961 = vsel %vm66, %v957, 0.0
  %962 = vadd.xlane.f32.xlu0 %v961
  %v963 = vpop.xlane.xlu0 %962
  %v964 = vmul.f32 %v960, %v73
  %v965 = vmul.f32 %v963, %v73
  %v966 = vadd.f32 %v964, 1e-12
  %v967 = vadd.f32 %v965, 1e-12
  %v968 = vrsqrt.pop %v966
  %v969 = vrsqrt.pop %v967
  %v970 = vmul.f32 %v954, %v968
  %v971 = vmul.f32 %v955, %v969
  %v973 = vlaneseq
  %v974 = vshrl.u32 %v973, 7
  %v975 = vsub.s32 0, %v974
  %v976 = vrot.slane %v944, %v975
  %v978 = vmul.f32 %v970, %v976
  %v979 = vmul.f32 %v971, %v976
  %v981 = vlaneseq
  %v982 = vshrl.u32 %v981, 7
  %v983 = vsub.s32 0, %v982
  %v984 = vrot.slane %v945, %v983
  %v986 = vadd.f32 %v978, %v984
  %v987 = vadd.f32 %v979, %v984
  %v988 = vld [vmem:[%s10] sm:$0xf]
  %v989 = vld [vmem:[%s10 + $0x4] sm:$0xf]
  %v990 = vld [vmem:[%s10 + $0x8] sm:$0xf]
  %v991 = vld [vmem:[%s10 + $0xc] sm:$0xf]
  %v992 = vld [vmem:[%s10 + $0x10] sm:$0xf]
  %v993 = vld [vmem:[%s10 + $0x14] sm:$0xf]
  %v994 = vld [vmem:[%s10 + $0x18] sm:$0xf]
  %v995 = vld [vmem:[%s10 + $0x1c] sm:$0xf]
  %v996 = vpack.c.bf16 %v987, %v986
  %v997 = vld [vmem:[%s11] sm:$0x1]
  %v999 = vlaneseq
  %v1000 = vshrl.u32 %v999, 7
  %v1001 = vsub.s32 0, %v1000
  %v1002 = vrot.slane %v997, %v1001
  %v1012 = vunpack.c.l.b16 %v988
  %v1013 = vunpack.c.l.b16 %v989
  %v1014 = vunpack.c.l.b16 %v990
  %v1015 = vunpack.c.l.b16 %v991
  %v1016 = vunpack.c.l.b16 %v992
  %v1017 = vunpack.c.l.b16 %v993
  %v1018 = vunpack.c.l.b16 %v994
  %v1019 = vunpack.c.l.b16 %v995
  %v1020 = vpack.c.b16 %v1013, %v1012
  %v1021 = vpack.c.b16 %v1015, %v1014
  %v1022 = vpack.c.b16 %v1017, %v1016
  %v1023 = vpack.c.b16 %v1019, %v1018
  %v1029 = vsel %vm66, %v996, 0
  %1031 = vmatprep.subr.bf16.mxu0 0
  %1032 = vmatpush1.bf16.msra.mxu0 %v1020
  %1033 = vmatprep.subr.bf16.mxu0 0
  %1034 = vmatpush1.bf16.msra.mxu0 %v1021
  %1035 = vmatprep.subr.bf16.mxu0 0
  %1036 = vmatpush1.bf16.msra.mxu0 %v1022
  %1037 = vmatprep.subr.bf16.mxu0 0
  %1038 = vmatpush1.bf16.msra.mxu0 %v1023
  %1039 = vmatprep.subr.bf16.mxu0 0
  %1040 = vmatpush1.bf16.msra.mxu0 0
  %1041 = vmatprep.subr.bf16.mxu0 0
  %1042 = vmatpush1.bf16.msra.mxu0 0
  %1043 = vmatprep.subr.bf16.mxu0 0
  %1044 = vmatpush1.bf16.msra.mxu0 0
  %1045 = vmatprep.subr.bf16.mxu0 0
  %1046 = vmatpush1.bf16.msra.mxu0 0
  %1047 = vmatprep.subr.bf16.mxu0 0
  %1048 = vmatpush1.bf16.msra.mxu0 0
  %1049 = vmatprep.subr.bf16.mxu0 0
  %1050 = vmatpush1.bf16.msra.mxu0 0
  %1051 = vmatprep.subr.bf16.mxu0 0
  %1052 = vmatpush1.bf16.msra.mxu0 0
  %1053 = vmatprep.subr.bf16.mxu0 0
  %1054 = vmatpush1.bf16.msra.mxu0 0
  %1055 = vmatprep.subr.bf16.mxu0 0
  %1056 = vmatpush1.bf16.msra.mxu0 0
  %1057 = vmatprep.subr.bf16.mxu0 0
  %1058 = vmatpush1.bf16.msra.mxu0 0
  %1059 = vmatprep.subr.bf16.mxu0 0
  %1060 = vmatpush1.bf16.msra.mxu0 0
  %1061 = vmatprep.subr.bf16.mxu0 0
  %1062 = vmatpush1.bf16.msra.mxu0 0
  %1063 = vmatprep.mubr.bf16.mxu0 0
  %1064 = vmatmul.mubr.bf16.gmra.mrb[0].mxu0 %v1029
  %v1065 = vpop.f32.mrb[0].mxu0
  %v1066 = vadd.f32 %v1002, %v1065
  %v1067 = vpop.f32.mrb[0].mxu0
  %v1068 = vpop.f32.mrb[0].mxu0
  %v1069 = vadd.f32 %v1002, %v1068
  %v1070 = vpop.f32.mrb[0].mxu0
  %1071 = vdwg.mxu0
  %v1072 = vmul.f32 %v1066, 0.5
  %v1073 = vmul.f32 %v1069, 0.5
  %v1074 = vmul.f32 %v1066, 0.044715
  %v1075 = vmul.f32 %v1069, 0.044715
  %v1076 = vmul.f32 %v1074, %v1066
  %v1077 = vmul.f32 %v1075, %v1069
  %v1078 = vmul.f32 %v1076, %v1066
  %v1079 = vmul.f32 %v1077, %v1069
  %v1080 = vadd.f32 %v1066, %v1078
  %v1081 = vadd.f32 %v1069, %v1079
  %v1082 = vmul.f32 %v1080, 0.7978846
  %v1083 = vmul.f32 %v1081, 0.7978846
  %v1084 = vtanh.pop %v1082
  %v1085 = vtanh.pop %v1083
  %v1086 = vadd.f32 %v1084, 1.0
  %v1087 = vadd.f32 %v1085, 1.0
  %v1088 = vmul.f32 %v1072, %v1086
  %v1089 = vmul.f32 %v1073, %v1087
  %v1090 = vld [vmem:[%s12] sm:$0xf]
  %v1091 = vld [vmem:[%s12 + $0x4] sm:$0xf]
  %v1092 = vld [vmem:[%s12 + $0x8] sm:$0xf]
  %v1093 = vld [vmem:[%s12 + $0xc] sm:$0xf]
  %v1094 = vld [vmem:[%s12 + $0x10] sm:$0xf]
  %v1095 = vld [vmem:[%s12 + $0x14] sm:$0xf]
  %v1096 = vld [vmem:[%s12 + $0x18] sm:$0xf]
  %v1097 = vld [vmem:[%s12 + $0x1c] sm:$0xf]
  %v1098 = vld [vmem:[%s12 + $0x20] sm:$0xf]
  %v1099 = vld [vmem:[%s12 + $0x24] sm:$0xf]
  %v1100 = vld [vmem:[%s12 + $0x28] sm:$0xf]
  %v1101 = vld [vmem:[%s12 + $0x2c] sm:$0xf]
  %v1102 = vld [vmem:[%s12 + $0x30] sm:$0xf]
  %v1103 = vld [vmem:[%s12 + $0x34] sm:$0xf]
  %v1104 = vld [vmem:[%s12 + $0x38] sm:$0xf]
  %v1105 = vld [vmem:[%s12 + $0x3c] sm:$0xf]
  %v1106 = vpack.c.bf16 %v1089, %v1088
  %v1107 = vld [vmem:[%s13] sm:$0x1]
  %v1109 = vlaneseq
  %v1110 = vshrl.u32 %v1109, 7
  %v1111 = vsub.s32 0, %v1110
  %v1112 = vrot.slane %v1107, %v1111
  %v1130 = vunpack.c.l.b16 %v1090
  %v1131 = vunpack.c.l.b16 %v1091
  %v1132 = vunpack.c.l.b16 %v1092
  %v1133 = vunpack.c.l.b16 %v1093
  %v1134 = vunpack.c.l.b16 %v1094
  %v1135 = vunpack.c.l.b16 %v1095
  %v1136 = vunpack.c.l.b16 %v1096
  %v1137 = vunpack.c.l.b16 %v1097
  %v1138 = vunpack.c.l.b16 %v1098
  %v1139 = vunpack.c.l.b16 %v1099
  %v1140 = vunpack.c.l.b16 %v1100
  %v1141 = vunpack.c.l.b16 %v1101
  %v1142 = vunpack.c.l.b16 %v1102
  %v1143 = vunpack.c.l.b16 %v1103
  %v1144 = vunpack.c.l.b16 %v1104
  %v1145 = vunpack.c.l.b16 %v1105
  %v1146 = vpack.c.b16 %v1131, %v1130
  %v1147 = vpack.c.b16 %v1133, %v1132
  %v1148 = vpack.c.b16 %v1135, %v1134
  %v1149 = vpack.c.b16 %v1137, %v1136
  %v1150 = vpack.c.b16 %v1139, %v1138
  %v1151 = vpack.c.b16 %v1141, %v1140
  %v1152 = vpack.c.b16 %v1143, %v1142
  %v1153 = vpack.c.b16 %v1145, %v1144
  %1162 = vmatprep.subr.bf16.mxu0 0
  %1163 = vmatpush1.bf16.msra.mxu0 %v1146
  %1164 = vmatprep.subr.bf16.mxu0 0
  %1165 = vmatpush1.bf16.msra.mxu0 %v1147
  %1166 = vmatprep.subr.bf16.mxu0 0
  %1167 = vmatpush1.bf16.msra.mxu0 %v1148
  %1168 = vmatprep.subr.bf16.mxu0 0
  %1169 = vmatpush1.bf16.msra.mxu0 %v1149
  %1170 = vmatprep.subr.bf16.mxu0 0
  %1171 = vmatpush1.bf16.msra.mxu0 %v1150
  %1172 = vmatprep.subr.bf16.mxu0 0
  %1173 = vmatpush1.bf16.msra.mxu0 %v1151
  %1174 = vmatprep.subr.bf16.mxu0 0
  %1175 = vmatpush1.bf16.msra.mxu0 %v1152
  %1176 = vmatprep.subr.bf16.mxu0 0
  %1177 = vmatpush1.bf16.msra.mxu0 %v1153
  %1178 = vmatprep.subr.bf16.mxu0 0
  %1179 = vmatpush1.bf16.msra.mxu0 0
  %1180 = vmatprep.subr.bf16.mxu0 0
  %1181 = vmatpush1.bf16.msra.mxu0 0
  %1182 = vmatprep.subr.bf16.mxu0 0
  %1183 = vmatpush1.bf16.msra.mxu0 0
  %1184 = vmatprep.subr.bf16.mxu0 0
  %1185 = vmatpush1.bf16.msra.mxu0 0
  %1186 = vmatprep.subr.bf16.mxu0 0
  %1187 = vmatpush1.bf16.msra.mxu0 0
  %1188 = vmatprep.subr.bf16.mxu0 0
  %1189 = vmatpush1.bf16.msra.mxu0 0
  %1190 = vmatprep.subr.bf16.mxu0 0
  %1191 = vmatpush1.bf16.msra.mxu0 0
  %1192 = vmatprep.subr.bf16.mxu0 0
  %1193 = vmatpush1.bf16.msra.mxu0 0
  %1194 = vmatprep.mubr.bf16.mxu0 0
  %1195 = vmatmul.mubr.bf16.gmra.mrb[0].mxu0 %v1106
  %v1196 = vpop.f32.mrb[0].mxu0
  %v1197 = vadd.f32 %v1112, %v1196
  %v1198 = vpop.f32.mrb[0].mxu0
  %v1199 = vpop.f32.mrb[0].mxu0
  %v1200 = vadd.f32 %v1112, %v1199
  %v1201 = vpop.f32.mrb[0].mxu0
  %1202 = vdwg.mxu0
  %v1203 = vadd.f32 %v1197, %v986
  %v1204 = vadd.f32 %v1200, %v987
  %v1205 = vld [vmem:[%s14] sm:$0x1]
  %v1206 = vld [vmem:[%s15] sm:$0x1]
  %v1207 = vsel %vm66, %v1203, 0.0
  %1208 = vadd.xlane.f32.xlu0 %v1207
  %v1209 = vpop.xlane.xlu0 %1208
  %v1210 = vsel %vm66, %v1204, 0.0
  %1211 = vadd.xlane.f32.xlu0 %v1210
  %v1212 = vpop.xlane.xlu0 %1211
  %v1213 = vmul.f32 %v1209, %v73
  %v1214 = vmul.f32 %v1212, %v73
  %v1215 = vsub.f32 %v1203, %v1213
  %v1216 = vsub.f32 %v1204, %v1214
  %v1217 = vmul.f32 %v1215, %v1215
  %v1218 = vmul.f32 %v1216, %v1216
  %v1219 = vsel %vm66, %v1217, 0.0
  %1220 = vadd.xlane.f32.xlu0 %v1219
  %v1221 = vpop.xlane.xlu0 %1220
  %v1222 = vsel %vm66, %v1218, 0.0
  %1223 = vadd.xlane.f32.xlu0 %v1222
  %v1224 = vpop.xlane.xlu0 %1223
  %v1225 = vmul.f32 %v1221, %v73
  %v1226 = vmul.f32 %v1224, %v73
  %v1227 = vadd.f32 %v1225, 1e-12
  %v1228 = vadd.f32 %v1226, 1e-12
  %v1229 = vrsqrt.pop %v1227
  %v1230 = vrsqrt.pop %v1228
  %v1231 = vmul.f32 %v1215, %v1229
  %v1232 = vmul.f32 %v1216, %v1230
  %v1234 = vlaneseq
  %v1235 = vshrl.u32 %v1234, 7
  %v1236 = vsub.s32 0, %v1235
  %v1237 = vrot.slane %v1205, %v1236
  %v1239 = vmul.f32 %v1231, %v1237
  %v1240 = vmul.f32 %v1232, %v1237
  %v1242 = vlaneseq
  %v1243 = vshrl.u32 %v1242, 7
  %v1244 = vsub.s32 0, %v1243
  %v1245 = vrot.slane %v1206, %v1244
  %v1247 = vadd.f32 %v1239, %v1245
  %v1248 = vadd.f32 %v1240, %v1245
  %s1249 = scalar_lea.vmem %s4, 64
  %v1250 = vld [vmem:[%s1249] sm:$0xff]
  %v1251 = vld [vmem:[%s1249 + $0x8] sm:$0xff]
  %v1252 = vld [vmem:[%s1249 + $0x10] sm:$0xff]
  %v1253 = vld [vmem:[%s1249 + $0x18] sm:$0xff]
  %v1254 = vld [vmem:[%s1249 + $0x20] sm:$0xff]
  %v1255 = vld [vmem:[%s1249 + $0x28] sm:$0xff]
  %v1256 = vld [vmem:[%s1249 + $0x30] sm:$0xff]
  %v1257 = vld [vmem:[%s1249 + $0x38] sm:$0xff]
  %v1258 = vpack.c.bf16 %v1248, %v1247
  %s1259 = scalar_lea.vmem %s5, 2
  %v1260 = vld [vmem:[%s1259] sm:$0x3]
  %v1262 = vlaneseq
  %v1263 = vshrl.u32 %v1262, 7
  %v1264 = vsub.s32 0, %v1263
  %v1265 = vrot.slane %v1260, %v1264
  %v1266 = vlaneseq
  %v1267 = vshrl.u32 %v1266, 7
  %v1268 = vsub.s32 1, %v1267
  %v1269 = vrot.slane %v1260, %v1268
  %v1280 = vunpack.c.l.b16 %v1250
  %v1281 = vunpack.c.h.b16 %v1250
  %v1282 = vunpack.c.l.b16 %v1251
  %v1283 = vunpack.c.h.b16 %v1251
  %v1284 = vunpack.c.l.b16 %v1252
  %v1285 = vunpack.c.h.b16 %v1252
  %v1286 = vunpack.c.l.b16 %v1253
  %v1287 = vunpack.c.h.b16 %v1253
  %v1288 = vunpack.c.l.b16 %v1254
  %v1289 = vunpack.c.h.b16 %v1254
  %v1290 = vunpack.c.l.b16 %v1255
  %v1291 = vunpack.c.h.b16 %v1255
  %v1292 = vunpack.c.l.b16 %v1256
  %v1293 = vunpack.c.h.b16 %v1256
  %v1294 = vunpack.c.l.b16 %v1257
  %v1295 = vunpack.c.h.b16 %v1257
  %v1296 = vpack.c.b16 %v1282, %v1280
  %v1297 = vpack.c.b16 %v1283, %v1281
  %v1298 = vpack.c.b16 %v1286, %v1284
  %v1299 = vpack.c.b16 %v1287, %v1285
  %v1300 = vpack.c.b16 %v1290, %v1288
  %v1301 = vpack.c.b16 %v1291, %v1289
  %v1302 = vpack.c.b16 %v1294, %v1292
  %v1303 = vpack.c.b16 %v1295, %v1293
  %v1313 = vsel %vm66, %v1258, 0
  %1315 = vmatprep.subr.bf16.mxu0 %v1297
  %1316 = vmatpush1.bf16.msra.mxu0 %v1296
  %1317 = vmatprep.subr.bf16.mxu0 %v1299
  %1318 = vmatpush1.bf16.msra.mxu0 %v1298
  %1319 = vmatprep.subr.bf16.mxu0 %v1301
  %1320 = vmatpush1.bf16.msra.mxu0 %v1300
  %1321 = vmatprep.subr.bf16.mxu0 %v1303
  %1322 = vmatpush1.bf16.msra.mxu0 %v1302
  %1323 = vmatprep.subr.bf16.mxu0 0
  %1324 = vmatpush1.bf16.msra.mxu0 0
  %1325 = vmatprep.subr.bf16.mxu0 0
  %1326 = vmatpush1.bf16.msra.mxu0 0
  %1327 = vmatprep.subr.bf16.mxu0 0
  %1328 = vmatpush1.bf16.msra.mxu0 0
  %1329 = vmatprep.subr.bf16.mxu0 0
  %1330 = vmatpush1.bf16.msra.mxu0 0
  %1331 = vmatprep.subr.bf16.mxu0 0
  %1332 = vmatpush1.bf16.msra.mxu0 0
  %1333 = vmatprep.subr.bf16.mxu0 0
  %1334 = vmatpush1.bf16.msra.mxu0 0
  %1335 = vmatprep.subr.bf16.mxu0 0
  %1336 = vmatpush1.bf16.msra.mxu0 0
  %1337 = vmatprep.subr.bf16.mxu0 0
  %1338 = vmatpush1.bf16.msra.mxu0 0
  %1339 = vmatprep.subr.bf16.mxu0 0
  %1340 = vmatpush1.bf16.msra.mxu0 0
  %1341 = vmatprep.subr.bf16.mxu0 0
  %1342 = vmatpush1.bf16.msra.mxu0 0
  %1343 = vmatprep.subr.bf16.mxu0 0
  %1344 = vmatpush1.bf16.msra.mxu0 0
  %1345 = vmatprep.subr.bf16.mxu0 0
  %1346 = vmatpush1.bf16.msra.mxu0 0
  %1347 = vmatprep.mubr.bf16.mxu0 0
  %1348 = vmatmul.mubr.bf16.gmra.mrb[0].mxu0 %v1313
  %v1349 = vpop.f32.mrb[0].mxu0
  %v1350 = vadd.f32 %v1265, %v1349
  %v1351 = vpop.f32.mrb[0].mxu0
  %v1352 = vadd.f32 %v1269, %v1351
  %v1353 = vpop.f32.mrb[0].mxu0
  %v1354 = vadd.f32 %v1265, %v1353
  %v1355 = vpop.f32.mrb[0].mxu0
  %v1356 = vadd.f32 %v1269, %v1355
  %1357 = vdwg.mxu0
  %s1358 = scalar_lea.vmem %s6, 32
  %v1359 = vld [vmem:[%s1358] sm:$0xf]
  %v1360 = vld [vmem:[%s1358 + $0x4] sm:$0xf]
  %v1361 = vld [vmem:[%s1358 + $0x8] sm:$0xf]
  %v1362 = vld [vmem:[%s1358 + $0xc] sm:$0xf]
  %v1363 = vld [vmem:[%s1358 + $0x10] sm:$0xf]
  %v1364 = vld [vmem:[%s1358 + $0x14] sm:$0xf]
  %v1365 = vld [vmem:[%s1358 + $0x18] sm:$0xf]
  %v1366 = vld [vmem:[%s1358 + $0x1c] sm:$0xf]
  %v1367 = vpack.c.bf16 %v1354, %v1350
  %1369 = vrot.lane.b32.xlu0 %v1367, 64
  %v1370 = vpop.permute.xlu0 %1369
  %v1372 = vsel %vm229, %v1367, 0
  %v1375 = vsel %vm229, %v1370, 0
  %1377 = vmatprep.subr.bf16.mxu0 0
  %1378 = vmatpush1.bf16.xpose.msra.mxu0 %v1375
  %1379 = vmatprep.subr.bf16.mxu0 0
  %1380 = vmatpush1.bf16.xpose.msra.mxu0 0
  %1381 = vmatprep.subr.bf16.mxu0 0
  %1382 = vmatpush1.bf16.xpose.msra.mxu0 0
  %1383 = vmatprep.subr.bf16.mxu0 0
  %1384 = vmatpush1.bf16.xpose.msra.mxu0 0
  %1385 = vmatprep.subr.bf16.mxu0 0
  %1386 = vmatpush1.bf16.xpose.msra.mxu0 0
  %1387 = vmatprep.subr.bf16.mxu0 0
  %1388 = vmatpush1.bf16.xpose.msra.mxu0 0
  %1389 = vmatprep.subr.bf16.mxu0 0
  %1390 = vmatpush1.bf16.xpose.msra.mxu0 0
  %1391 = vmatprep.subr.bf16.mxu0 0
  %1392 = vmatpush1.bf16.xpose.msra.mxu0 0
  %1393 = vmatprep.subr.bf16.mxu0 0
  %1394 = vmatpush1.bf16.xpose.msra.mxu0 0
  %1395 = vmatprep.subr.bf16.mxu0 0
  %1396 = vmatpush1.bf16.xpose.msra.mxu0 0
  %1397 = vmatprep.subr.bf16.mxu0 0
  %1398 = vmatpush1.bf16.xpose.msra.mxu0 0
  %1399 = vmatprep.subr.bf16.mxu0 0
  %1400 = vmatpush1.bf16.xpose.msra.mxu0 0
  %1401 = vmatprep.subr.bf16.mxu0 0
  %1402 = vmatpush1.bf16.xpose.msra.mxu0 0
  %1403 = vmatprep.subr.bf16.mxu0 0
  %1404 = vmatpush1.bf16.xpose.msra.mxu0 0
  %1405 = vmatprep.subr.bf16.mxu0 0
  %1406 = vmatpush1.bf16.xpose.msra.mxu0 0
  %1407 = vmatprep.subr.bf16.mxu0 0
  %1408 = vmatpush1.bf16.xpose.msra.mxu0 0
  %1409 = vmatprep.mubr.bf16.mxu0 0
  %1410 = vmatmul.mubr.bf16.gmra.mrb[0].mxu0 %v1372
  %v1411 = vpop.f32.mrb[0].mxu0
  %v1412 = vadd.f32 0.0, %v1411
  %v1413 = vpop.f32.mrb[0].mxu0
  %v1414 = vpop.f32.mrb[0].mxu0
  %v1415 = vadd.f32 0.0, %v1414
  %v1416 = vpop.f32.mrb[0].mxu0
  %1417 = vdwg.mxu0
  %v1418 = vmul.f32 %v1412, 0.25
  %v1419 = vmul.f32 %v1415, 0.25
  %v1420 = vadd.f32 %v1418, %v60
  %v1421 = vadd.f32 %v1419, %v61
  %v1422 = vsel %vm229, %v1420, -inf
  %1423 = vmax.xlane.f32.xlu0 %v1422
  %v1424 = vpop.xlane.xlu0 %1423
  %v1425 = vsel %vm229, %v1421, -inf
  %1426 = vmax.xlane.f32.xlu0 %v1425
  %v1427 = vpop.xlane.xlu0 %1426
  %v1428 = vsub.f32 %v1420, %v1424
  %v1429 = vsub.f32 %v1421, %v1427
  %v1430 = vmul.f32 %v1428, 1.442695
  %v1431 = vpow.pop %v1430
  %v1432 = vmul.f32 %v1429, 1.442695
  %v1433 = vpow.pop %v1432
  %v1434 = vsel %vm229, %v1431, 0.0
  %1435 = vadd.xlane.f32.xlu0 %v1434
  %v1436 = vpop.xlane.xlu0 %1435
  %v1437 = vsel %vm229, %v1433, 0.0
  %1438 = vadd.xlane.f32.xlu0 %v1437
  %v1439 = vpop.xlane.xlu0 %1438
  %v1440 = vrcp.pop %v1436
  %v1441 = vrcp.pop %v1439
  %v1442 = vmul.f32 %v1431, %v1440
  %v1443 = vmul.f32 %v1433, %v1441
  %v1444 = vpack.c.bf16 %v1443, %v1442
  %v1445 = vpack.c.bf16 %v1356, %v1352
  %v1447 = vsel %vm229, %v1444, 0
  %1449 = vmatprep.subr.bf16.mxu0 0
  %1450 = vmatpush1.bf16.msra.mxu0 %v1445
  %1451 = vmatprep.subr.bf16.mxu0 0
  %1452 = vmatpush1.bf16.msra.mxu0 0
  %1453 = vmatprep.subr.bf16.mxu0 0
  %1454 = vmatpush1.bf16.msra.mxu0 0
  %1455 = vmatprep.subr.bf16.mxu0 0
  %1456 = vmatpush1.bf16.msra.mxu0 0
  %1457 = vmatprep.subr.bf16.mxu0 0
  %1458 = vmatpush1.bf16.msra.mxu0 0
  %1459 = vmatprep.subr.bf16.mxu0 0
  %1460 = vmatpush1.bf16.msra.mxu0 0
  %1461 = vmatprep.subr.bf16.mxu0 0
  %1462 = vmatpush1.bf16.msra.mxu0 0
  %1463 = vmatprep.subr.bf16.mxu0 0
  %1464 = vmatpush1.bf16.msra.mxu0 0
  %1465 = vmatprep.subr.bf16.mxu0 0
  %1466 = vmatpush1.bf16.msra.mxu0 0
  %1467 = vmatprep.subr.bf16.mxu0 0
  %1468 = vmatpush1.bf16.msra.mxu0 0
  %1469 = vmatprep.subr.bf16.mxu0 0
  %1470 = vmatpush1.bf16.msra.mxu0 0
  %1471 = vmatprep.subr.bf16.mxu0 0
  %1472 = vmatpush1.bf16.msra.mxu0 0
  %1473 = vmatprep.subr.bf16.mxu0 0
  %1474 = vmatpush1.bf16.msra.mxu0 0
  %1475 = vmatprep.subr.bf16.mxu0 0
  %1476 = vmatpush1.bf16.msra.mxu0 0
  %1477 = vmatprep.subr.bf16.mxu0 0
  %1478 = vmatpush1.bf16.msra.mxu0 0
  %1479 = vmatprep.subr.bf16.mxu0 0
  %1480 = vmatpush1.bf16.msra.mxu0 0
  %1481 = vmatprep.mubr.bf16.mxu0 0
  %1482 = vmatmul.mubr.bf16.gmra.mrb[0].mxu0 %v1447
  %v1483 = vpop.f32.mrb[0].mxu0
  %v1484 = vadd.f32 0.0, %v1483
  %v1485 = vpop.f32.mrb[0].mxu0
  %v1486 = vpop.f32.mrb[0].mxu0
  %v1487 = vadd.f32 0.0, %v1486
  %v1488 = vpop.f32.mrb[0].mxu0
  %1489 = vdwg.mxu0
  %v1490 = vpack.c.bf16 %v1487, %v1484
  %1491 = vrot.lane.b32.xlu0 %v1367, 112
  %v1492 = vpop.permute.xlu0 %1491
  %1493 = vrot.lane.b32.xlu0 %v1367, 48
  %v1494 = vpop.permute.xlu0 %1493
  %v1496 = vsel %vm229, %v1492, 0
  %v1499 = vsel %vm229, %v1494, 0
  %1501 = vmatprep.subr.bf16.mxu0 0
  %1502 = vmatpush1.bf16.xpose.msra.mxu0 %v1499
  %1503 = vmatprep.subr.bf16.mxu0 0
  %1504 = vmatpush1.bf16.xpose.msra.mxu0 0
  %1505 = vmatprep.subr.bf16.mxu0 0
  %1506 = vmatpush1.bf16.xpose.msra.mxu0 0
  %1507 = vmatprep.subr.bf16.mxu0 0
  %1508 = vmatpush1.bf16.xpose.msra.mxu0 0
  %1509 = vmatprep.subr.bf16.mxu0 0
  %1510 = vmatpush1.bf16.xpose.msra.mxu0 0
  %1511 = vmatprep.subr.bf16.mxu0 0
  %1512 = vmatpush1.bf16.xpose.msra.mxu0 0
  %1513 = vmatprep.subr.bf16.mxu0 0
  %1514 = vmatpush1.bf16.xpose.msra.mxu0 0
  %1515 = vmatprep.subr.bf16.mxu0 0
  %1516 = vmatpush1.bf16.xpose.msra.mxu0 0
  %1517 = vmatprep.subr.bf16.mxu0 0
  %1518 = vmatpush1.bf16.xpose.msra.mxu0 0
  %1519 = vmatprep.subr.bf16.mxu0 0
  %1520 = vmatpush1.bf16.xpose.msra.mxu0 0
  %1521 = vmatprep.subr.bf16.mxu0 0
  %1522 = vmatpush1.bf16.xpose.msra.mxu0 0
  %1523 = vmatprep.subr.bf16.mxu0 0
  %1524 = vmatpush1.bf16.xpose.msra.mxu0 0
  %1525 = vmatprep.subr.bf16.mxu0 0
  %1526 = vmatpush1.bf16.xpose.msra.mxu0 0
  %1527 = vmatprep.subr.bf16.mxu0 0
  %1528 = vmatpush1.bf16.xpose.msra.mxu0 0
  %1529 = vmatprep.subr.bf16.mxu0 0
  %1530 = vmatpush1.bf16.xpose.msra.mxu0 0
  %1531 = vmatprep.subr.bf16.mxu0 0
  %1532 = vmatpush1.bf16.xpose.msra.mxu0 0
  %1533 = vmatprep.mubr.bf16.mxu0 0
  %1534 = vmatmul.mubr.bf16.gmra.mrb[0].mxu0 %v1496
  %v1535 = vpop.f32.mrb[0].mxu0
  %v1536 = vadd.f32 0.0, %v1535
  %v1537 = vpop.f32.mrb[0].mxu0
  %v1538 = vpop.f32.mrb[0].mxu0
  %v1539 = vadd.f32 0.0, %v1538
  %v1540 = vpop.f32.mrb[0].mxu0
  %1541 = vdwg.mxu0
  %v1542 = vmul.f32 %v1536, 0.25
  %v1543 = vmul.f32 %v1539, 0.25
  %v1544 = vadd.f32 %v1542, %v60
  %v1545 = vadd.f32 %v1543, %v61
  %v1546 = vsel %vm229, %v1544, -inf
  %1547 = vmax.xlane.f32.xlu0 %v1546
  %v1548 = vpop.xlane.xlu0 %1547
  %v1549 = vsel %vm229, %v1545, -inf
  %1550 = vmax.xlane.f32.xlu0 %v1549
  %v1551 = vpop.xlane.xlu0 %1550
  %v1552 = vsub.f32 %v1544, %v1548
  %v1553 = vsub.f32 %v1545, %v1551
  %v1554 = vmul.f32 %v1552, 1.442695
  %v1555 = vpow.pop %v1554
  %v1556 = vmul.f32 %v1553, 1.442695
  %v1557 = vpow.pop %v1556
  %v1558 = vsel %vm229, %v1555, 0.0
  %1559 = vadd.xlane.f32.xlu0 %v1558
  %v1560 = vpop.xlane.xlu0 %1559
  %v1561 = vsel %vm229, %v1557, 0.0
  %1562 = vadd.xlane.f32.xlu0 %v1561
  %v1563 = vpop.xlane.xlu0 %1562
  %v1564 = vrcp.pop %v1560
  %v1565 = vrcp.pop %v1563
  %v1566 = vmul.f32 %v1555, %v1564
  %v1567 = vmul.f32 %v1557, %v1565
  %v1568 = vpack.c.bf16 %v1567, %v1566
  %1570 = vrot.lane.b32.xlu0 %v1445, 112
  %v1571 = vpop.permute.xlu0 %1570
  %v1574 = vsel %vm229, %v1568, 0
  %1576 = vmatprep.subr.bf16.mxu0 0
  %1577 = vmatpush1.bf16.msra.mxu0 %v1571
  %1578 = vmatprep.subr.bf16.mxu0 0
  %1579 = vmatpush1.bf16.msra.mxu0 0
  %1580 = vmatprep.subr.bf16.mxu0 0
  %1581 = vmatpush1.bf16.msra.mxu0 0
  %1582 = vmatprep.subr.bf16.mxu0 0
  %1583 = vmatpush1.bf16.msra.mxu0 0
  %1584 = vmatprep.subr.bf16.mxu0 0
  %1585 = vmatpush1.bf16.msra.mxu0 0
  %1586 = vmatprep.subr.bf16.mxu0 0
  %1587 = vmatpush1.bf16.msra.mxu0 0
  %1588 = vmatprep.subr.bf16.mxu0 0
  %1589 = vmatpush1.bf16.msra.mxu0 0
  %1590 = vmatprep.subr.bf16.mxu0 0
  %1591 = vmatpush1.bf16.msra.mxu0 0
  %1592 = vmatprep.subr.bf16.mxu0 0
  %1593 = vmatpush1.bf16.msra.mxu0 0
  %1594 = vmatprep.subr.bf16.mxu0 0
  %1595 = vmatpush1.bf16.msra.mxu0 0
  %1596 = vmatprep.subr.bf16.mxu0 0
  %1597 = vmatpush1.bf16.msra.mxu0 0
  %1598 = vmatprep.subr.bf16.mxu0 0
  %1599 = vmatpush1.bf16.msra.mxu0 0
  %1600 = vmatprep.subr.bf16.mxu0 0
  %1601 = vmatpush1.bf16.msra.mxu0 0
  %1602 = vmatprep.subr.bf16.mxu0 0
  %1603 = vmatpush1.bf16.msra.mxu0 0
  %1604 = vmatprep.subr.bf16.mxu0 0
  %1605 = vmatpush1.bf16.msra.mxu0 0
  %1606 = vmatprep.subr.bf16.mxu0 0
  %1607 = vmatpush1.bf16.msra.mxu0 0
  %1608 = vmatprep.mubr.bf16.mxu0 0
  %1609 = vmatmul.mubr.bf16.gmra.mrb[0].mxu0 %v1574
  %v1610 = vpop.f32.mrb[0].mxu0
  %v1611 = vadd.f32 0.0, %v1610
  %v1612 = vpop.f32.mrb[0].mxu0
  %v1613 = vpop.f32.mrb[0].mxu0
  %v1614 = vadd.f32 0.0, %v1613
  %v1615 = vpop.f32.mrb[0].mxu0
  %1616 = vdwg.mxu0
  %v1617 = vpack.c.bf16 %v1614, %v1611
  %v1620 = vunpack.c.l.b16 %v1361
  %v1621 = vunpack.c.l.b16 %v1362
  %v1622 = vpack.c.b16 %v1621, %v1620
  %v1625 = vsel %vm229, %v1617, 0
  %1627 = vmatprep.subr.bf16.mxu0 0
  %1628 = vmatpush1.bf16.msra.mxu0 %v1622
  %1629 = vmatprep.subr.bf16.mxu0 0
  %1630 = vmatpush1.bf16.msra.mxu0 0
  %1631 = vmatprep.subr.bf16.mxu0 0
  %1632 = vmatpush1.bf16.msra.mxu0 0
  %1633 = vmatprep.subr.bf16.mxu0 0
  %1634 = vmatpush1.bf16.msra.mxu0 0
  %1635 = vmatprep.subr.bf16.mxu0 0
  %1636 = vmatpush1.bf16.msra.mxu0 0
  %1637 = vmatprep.subr.bf16.mxu0 0
  %1638 = vmatpush1.bf16.msra.mxu0 0
  %1639 = vmatprep.subr.bf16.mxu0 0
  %1640 = vmatpush1.bf16.msra.mxu0 0
  %1641 = vmatprep.subr.bf16.mxu0 0
  %1642 = vmatpush1.bf16.msra.mxu0 0
  %1643 = vmatprep.subr.bf16.mxu0 0
  %1644 = vmatpush1.bf16.msra.mxu0 0
  %1645 = vmatprep.subr.bf16.mxu0 0
  %1646 = vmatpush1.bf16.msra.mxu0 0
  %1647 = vmatprep.subr.bf16.mxu0 0
  %1648 = vmatpush1.bf16.msra.mxu0 0
  %1649 = vmatprep.subr.bf16.mxu0 0
  %1650 = vmatpush1.bf16.msra.mxu0 0
  %1651 = vmatprep.subr.bf16.mxu0 0
  %1652 = vmatpush1.bf16.msra.mxu0 0
  %1653 = vmatprep.subr.bf16.mxu0 0
  %1654 = vmatpush1.bf16.msra.mxu0 0
  %1655 = vmatprep.subr.bf16.mxu0 0
  %1656 = vmatpush1.bf16.msra.mxu0 0
  %1657 = vmatprep.subr.bf16.mxu0 0
  %1658 = vmatpush1.bf16.msra.mxu0 0
  %1659 = vmatprep.mubr.bf16.mxu0 0
  %1660 = vmatmul.mubr.bf16.gmra.mrb[0].mxu0 %v1625
  %v1661 = vpop.f32.mrb[0].mxu0
  %v1662 = vadd.f32 0.0, %v1661
  %v1663 = vpop.f32.mrb[0].mxu0
  %v1664 = vpop.f32.mrb[0].mxu0
  %v1665 = vadd.f32 0.0, %v1664
  %v1666 = vpop.f32.mrb[0].mxu0
  %1667 = vdwg.mxu0
  %v1670 = vunpack.c.l.b16 %v1359
  %v1671 = vunpack.c.l.b16 %v1360
  %v1672 = vpack.c.b16 %v1671, %v1670
  %v1675 = vsel %vm229, %v1490, 0
  %1677 = vmatprep.subr.bf16.mxu0 0
  %1678 = vmatpush1.bf16.msra.mxu0 %v1672
  %1679 = vmatprep.subr.bf16.mxu0 0
  %1680 = vmatpush1.bf16.msra.mxu0 0
  %1681 = vmatprep.subr.bf16.mxu0 0
  %1682 = vmatpush1.bf16.msra.mxu0 0
  %1683 = vmatprep.subr.bf16.mxu0 0
  %1684 = vmatpush1.bf16.msra.mxu0 0
  %1685 = vmatprep.subr.bf16.mxu0 0
  %1686 = vmatpush1.bf16.msra.mxu0 0
  %1687 = vmatprep.subr.bf16.mxu0 0
  %1688 = vmatpush1.bf16.msra.mxu0 0
  %1689 = vmatprep.subr.bf16.mxu0 0
  %1690 = vmatpush1.bf16.msra.mxu0 0
  %1691 = vmatprep.subr.bf16.mxu0 0
  %1692 = vmatpush1.bf16.msra.mxu0 0
  %1693 = vmatprep.subr.bf16.mxu0 0
  %1694 = vmatpush1.bf16.msra.mxu0 0
  %1695 = vmatprep.subr.bf16.mxu0 0
  %1696 = vmatpush1.bf16.msra.mxu0 0
  %1697 = vmatprep.subr.bf16.mxu0 0
  %1698 = vmatpush1.bf16.msra.mxu0 0
  %1699 = vmatprep.subr.bf16.mxu0 0
  %1700 = vmatpush1.bf16.msra.mxu0 0
  %1701 = vmatprep.subr.bf16.mxu0 0
  %1702 = vmatpush1.bf16.msra.mxu0 0
  %1703 = vmatprep.subr.bf16.mxu0 0
  %1704 = vmatpush1.bf16.msra.mxu0 0
  %1705 = vmatprep.subr.bf16.mxu0 0
  %1706 = vmatpush1.bf16.msra.mxu0 0
  %1707 = vmatprep.subr.bf16.mxu0 0
  %1708 = vmatpush1.bf16.msra.mxu0 0
  %1709 = vmatprep.mubr.bf16.mxu0 0
  %1710 = vmatmul.mubr.bf16.gmra.mrb[0].mxu0 %v1675
  %v1711 = vpop.f32.mrb[0].mxu0
  %v1712 = vadd.f32 %v1662, %v1711
  %v1713 = vpop.f32.mrb[0].mxu0
  %v1714 = vpop.f32.mrb[0].mxu0
  %v1715 = vadd.f32 %v1665, %v1714
  %v1716 = vpop.f32.mrb[0].mxu0
  %1717 = vdwg.mxu0
  %1718 = vrot.lane.b32.xlu0 %v1367, 96
  %v1719 = vpop.permute.xlu0 %1718
  %1720 = vrot.lane.b32.xlu0 %v1367, 32
  %v1721 = vpop.permute.xlu0 %1720
  %v1723 = vsel %vm229, %v1719, 0
  %v1726 = vsel %vm229, %v1721, 0
  %1728 = vmatprep.subr.bf16.mxu0 0
  %1729 = vmatpush1.bf16.xpose.msra.mxu0 %v1726
  %1730 = vmatprep.subr.bf16.mxu0 0
  %1731 = vmatpush1.bf16.xpose.msra.mxu0 0
  %1732 = vmatprep.subr.bf16.mxu0 0
  %1733 = vmatpush1.bf16.xpose.msra.mxu0 0
  %1734 = vmatprep.subr.bf16.mxu0 0
  %1735 = vmatpush1.bf16.xpose.msra.mxu0 0
  %1736 = vmatprep.subr.bf16.mxu0 0
  %1737 = vmatpush1.bf16.xpose.msra.mxu0 0
  %1738 = vmatprep.subr.bf16.mxu0 0
  %1739 = vmatpush1.bf16.xpose.msra.mxu0 0
  %1740 = vmatprep.subr.bf16.mxu0 0
  %1741 = vmatpush1.bf16.xpose.msra.mxu0 0
  %1742 = vmatprep.subr.bf16.mxu0 0
  %1743 = vmatpush1.bf16.xpose.msra.mxu0 0
  %1744 = vmatprep.subr.bf16.mxu0 0
  %1745 = vmatpush1.bf16.xpose.msra.mxu0 0
  %1746 = vmatprep.subr.bf16.mxu0 0
  %1747 = vmatpush1.bf16.xpose.msra.mxu0 0
  %1748 = vmatprep.subr.bf16.mxu0 0
  %1749 = vmatpush1.bf16.xpose.msra.mxu0 0
  %1750 = vmatprep.subr.bf16.mxu0 0
  %1751 = vmatpush1.bf16.xpose.msra.mxu0 0
  %1752 = vmatprep.subr.bf16.mxu0 0
  %1753 = vmatpush1.bf16.xpose.msra.mxu0 0
  %1754 = vmatprep.subr.bf16.mxu0 0
  %1755 = vmatpush1.bf16.xpose.msra.mxu0 0
  %1756 = vmatprep.subr.bf16.mxu0 0
  %1757 = vmatpush1.bf16.xpose.msra.mxu0 0
  %1758 = vmatprep.subr.bf16.mxu0 0
  %1759 = vmatpush1.bf16.xpose.msra.mxu0 0
  %1760 = vmatprep.mubr.bf16.mxu0 0
  %1761 = vmatmul.mubr.bf16.gmra.mrb[0].mxu0 %v1723
  %v1762 = vpop.f32.mrb[0].mxu0
  %v1763 = vadd.f32 0.0, %v1762
  %v1764 = vpop.f32.mrb[0].mxu0
  %v1765 = vpop.f32.mrb[0].mxu0
  %v1766 = vadd.f32 0.0, %v1765
  %v1767 = vpop.f32.mrb[0].mxu0
  %1768 = vdwg.mxu0
  %v1769 = vmul.f32 %v1763, 0.25
  %v1770 = vmul.f32 %v1766, 0.25
  %v1771 = vadd.f32 %v1769, %v60
  %v1772 = vadd.f32 %v1770, %v61
  %v1773 = vsel %vm229, %v1771, -inf
  %1774 = vmax.xlane.f32.xlu0 %v1773
  %v1775 = vpop.xlane.xlu0 %1774
  %v1776 = vsel %vm229, %v1772, -inf
  %1777 = vmax.xlane.f32.xlu0 %v1776
  %v1778 = vpop.xlane.xlu0 %1777
  %v1779 = vsub.f32 %v1771, %v1775
  %v1780 = vsub.f32 %v1772, %v1778
  %v1781 = vmul.f32 %v1779, 1.442695
  %v1782 = vpow.pop %v1781
  %v1783 = vmul.f32 %v1780, 1.442695
  %v1784 = vpow.pop %v1783
  %v1785 = vsel %vm229, %v1782, 0.0
  %1786 = vadd.xlane.f32.xlu0 %v1785
  %v1787 = vpop.xlane.xlu0 %1786
  %v1788 = vsel %vm229, %v1784, 0.0
  %1789 = vadd.xlane.f32.xlu0 %v1788
  %v1790 = vpop.xlane.xlu0 %1789
  %v1791 = vrcp.pop %v1787
  %v1792 = vrcp.pop %v1790
  %v1793 = vmul.f32 %v1782, %v1791
  %v1794 = vmul.f32 %v1784, %v1792
  %v1795 = vpack.c.bf16 %v1794, %v1793
  %1796 = vrot.lane.b32.xlu0 %v1445, 96
  %v1797 = vpop.permute.xlu0 %1796
  %v1800 = vsel %vm229, %v1795, 0
  %1802 = vmatprep.subr.bf16.mxu0 0
  %1803 = vmatpush1.bf16.msra.mxu0 %v1797
  %1804 = vmatprep.subr.bf16.mxu0 0
  %1805 = vmatpush1.bf16.msra.mxu0 0
  %1806 = vmatprep.subr.bf16.mxu0 0
  %1807 = vmatpush1.bf16.msra.mxu0 0
  %1808 = vmatprep.subr.bf16.mxu0 0
  %1809 = vmatpush1.bf16.msra.mxu0 0
  %1810 = vmatprep.subr.bf16.mxu0 0
  %1811 = vmatpush1.bf16.msra.mxu0 0
  %1812 = vmatprep.subr.bf16.mxu0 0
  %1813 = vmatpush1.bf16.msra.mxu0 0
  %1814 = vmatprep.subr.bf16.mxu0 0
  %1815 = vmatpush1.bf16.msra.mxu0 0
  %1816 = vmatprep.subr.bf16.mxu0 0
  %1817 = vmatpush1.bf16.msra.mxu0 0
  %1818 = vmatprep.subr.bf16.mxu0 0
  %1819 = vmatpush1.bf16.msra.mxu0 0
  %1820 = vmatprep.subr.bf16.mxu0 0
  %1821 = vmatpush1.bf16.msra.mxu0 0
  %1822 = vmatprep.subr.bf16.mxu0 0
  %1823 = vmatpush1.bf16.msra.mxu0 0
  %1824 = vmatprep.subr.bf16.mxu0 0
  %1825 = vmatpush1.bf16.msra.mxu0 0
  %1826 = vmatprep.subr.bf16.mxu0 0
  %1827 = vmatpush1.bf16.msra.mxu0 0
  %1828 = vmatprep.subr.bf16.mxu0 0
  %1829 = vmatpush1.bf16.msra.mxu0 0
  %1830 = vmatprep.subr.bf16.mxu0 0
  %1831 = vmatpush1.bf16.msra.mxu0 0
  %1832 = vmatprep.subr.bf16.mxu0 0
  %1833 = vmatpush1.bf16.msra.mxu0 0
  %1834 = vmatprep.mubr.bf16.mxu0 0
  %1835 = vmatmul.mubr.bf16.gmra.mrb[0].mxu0 %v1800
  %v1836 = vpop.f32.mrb[0].mxu0
  %v1837 = vadd.f32 0.0, %v1836
  %v1838 = vpop.f32.mrb[0].mxu0
  %v1839 = vpop.f32.mrb[0].mxu0
  %v1840 = vadd.f32 0.0, %v1839
  %v1841 = vpop.f32.mrb[0].mxu0
  %1842 = vdwg.mxu0
  %v1843 = vpack.c.bf16 %v1840, %v1837
  %v1846 = vunpack.c.l.b16 %v1363
  %v1847 = vunpack.c.l.b16 %v1364
  %v1848 = vpack.c.b16 %v1847, %v1846
  %v1851 = vsel %vm229, %v1843, 0
  %1853 = vmatprep.subr.bf16.mxu0 0
  %1854 = vmatpush1.bf16.msra.mxu0 %v1848
  %1855 = vmatprep.subr.bf16.mxu0 0
  %1856 = vmatpush1.bf16.msra.mxu0 0
  %1857 = vmatprep.subr.bf16.mxu0 0
  %1858 = vmatpush1.bf16.msra.mxu0 0
  %1859 = vmatprep.subr.bf16.mxu0 0
  %1860 = vmatpush1.bf16.msra.mxu0 0
  %1861 = vmatprep.subr.bf16.mxu0 0
  %1862 = vmatpush1.bf16.msra.mxu0 0
  %1863 = vmatprep.subr.bf16.mxu0 0
  %1864 = vmatpush1.bf16.msra.mxu0 0
  %1865 = vmatprep.subr.bf16.mxu0 0
  %1866 = vmatpush1.bf16.msra.mxu0 0
  %1867 = vmatprep.subr.bf16.mxu0 0
  %1868 = vmatpush1.bf16.msra.mxu0 0
  %1869 = vmatprep.subr.bf16.mxu0 0
  %1870 = vmatpush1.bf16.msra.mxu0 0
  %1871 = vmatprep.subr.bf16.mxu0 0
  %1872 = vmatpush1.bf16.msra.mxu0 0
  %1873 = vmatprep.subr.bf16.mxu0 0
  %1874 = vmatpush1.bf16.msra.mxu0 0
  %1875 = vmatprep.subr.bf16.mxu0 0
  %1876 = vmatpush1.bf16.msra.mxu0 0
  %1877 = vmatprep.subr.bf16.mxu0 0
  %1878 = vmatpush1.bf16.msra.mxu0 0
  %1879 = vmatprep.subr.bf16.mxu0 0
  %1880 = vmatpush1.bf16.msra.mxu0 0
  %1881 = vmatprep.subr.bf16.mxu0 0
  %1882 = vmatpush1.bf16.msra.mxu0 0
  %1883 = vmatprep.subr.bf16.mxu0 0
  %1884 = vmatpush1.bf16.msra.mxu0 0
  %1885 = vmatprep.mubr.bf16.mxu0 0
  %1886 = vmatmul.mubr.bf16.gmra.mrb[0].mxu0 %v1851
  %v1887 = vpop.f32.mrb[0].mxu0
  %v1888 = vadd.f32 0.0, %v1887
  %v1889 = vpop.f32.mrb[0].mxu0
  %v1890 = vpop.f32.mrb[0].mxu0
  %v1891 = vadd.f32 0.0, %v1890
  %v1892 = vpop.f32.mrb[0].mxu0
  %1893 = vdwg.mxu0
  %v1894 = vadd.f32 %v1712, %v1888
  %v1895 = vadd.f32 %v1715, %v1891
  %1896 = vrot.lane.b32.xlu0 %v1367, 80
  %v1897 = vpop.permute.xlu0 %1896
  %1898 = vrot.lane.b32.xlu0 %v1367, 16
  %v1899 = vpop.permute.xlu0 %1898
  %v1901 = vsel %vm229, %v1897, 0
  %v1904 = vsel %vm229, %v1899, 0
  %1906 = vmatprep.subr.bf16.mxu0 0
  %1907 = vmatpush1.bf16.xpose.msra.mxu0 %v1904
  %1908 = vmatprep.subr.bf16.mxu0 0
  %1909 = vmatpush1.bf16.xpose.msra.mxu0 0
  %1910 = vmatprep.subr.bf16.mxu0 0
  %1911 = vmatpush1.bf16.xpose.msra.mxu0 0
  %1912 = vmatprep.subr.bf16.mxu0 0
  %1913 = vmatpush1.bf16.xpose.msra.mxu0 0
  %1914 = vmatprep.subr.bf16.mxu0 0
  %1915 = vmatpush1.bf16.xpose.msra.mxu0 0
  %1916 = vmatprep.subr.bf16.mxu0 0
  %1917 = vmatpush1.bf16.xpose.msra.mxu0 0
  %1918 = vmatprep.subr.bf16.mxu0 0
  %1919 = vmatpush1.bf16.xpose.msra.mxu0 0
  %1920 = vmatprep.subr.bf16.mxu0 0
  %1921 = vmatpush1.bf16.xpose.msra.mxu0 0
  %1922 = vmatprep.subr.bf16.mxu0 0
  %1923 = vmatpush1.bf16.xpose.msra.mxu0 0
  %1924 = vmatprep.subr.bf16.mxu0 0
  %1925 = vmatpush1.bf16.xpose.msra.mxu0 0
  %1926 = vmatprep.subr.bf16.mxu0 0
  %1927 = vmatpush1.bf16.xpose.msra.mxu0 0
  %1928 = vmatprep.subr.bf16.mxu0 0
  %1929 = vmatpush1.bf16.xpose.msra.mxu0 0
  %1930 = vmatprep.subr.bf16.mxu0 0
  %1931 = vmatpush1.bf16.xpose.msra.mxu0 0
  %1932 = vmatprep.subr.bf16.mxu0 0
  %1933 = vmatpush1.bf16.xpose.msra.mxu0 0
  %1934 = vmatprep.subr.bf16.mxu0 0
  %1935 = vmatpush1.bf16.xpose.msra.mxu0 0
  %1936 = vmatprep.subr.bf16.mxu0 0
  %1937 = vmatpush1.bf16.xpose.msra.mxu0 0
  %1938 = vmatprep.mubr.bf16.mxu0 0
  %1939 = vmatmul.mubr.bf16.gmra.mrb[0].mxu0 %v1901
  %v1940 = vpop.f32.mrb[0].mxu0
  %v1941 = vadd.f32 0.0, %v1940
  %v1942 = vpop.f32.mrb[0].mxu0
  %v1943 = vpop.f32.mrb[0].mxu0
  %v1944 = vadd.f32 0.0, %v1943
  %v1945 = vpop.f32.mrb[0].mxu0
  %1946 = vdwg.mxu0
  %v1947 = vmul.f32 %v1941, 0.25
  %v1948 = vmul.f32 %v1944, 0.25
  %v1949 = vadd.f32 %v1947, %v60
  %v1950 = vadd.f32 %v1948, %v61
  %v1951 = vsel %vm229, %v1949, -inf
  %1952 = vmax.xlane.f32.xlu0 %v1951
  %v1953 = vpop.xlane.xlu0 %1952
  %v1954 = vsel %vm229, %v1950, -inf
  %1955 = vmax.xlane.f32.xlu0 %v1954
  %v1956 = vpop.xlane.xlu0 %1955
  %v1957 = vsub.f32 %v1949, %v1953
  %v1958 = vsub.f32 %v1950, %v1956
  %v1959 = vmul.f32 %v1957, 1.442695
  %v1960 = vpow.pop %v1959
  %v1961 = vmul.f32 %v1958, 1.442695
  %v1962 = vpow.pop %v1961
  %v1963 = vsel %vm229, %v1960, 0.0
  %1964 = vadd.xlane.f32.xlu0 %v1963
  %v1965 = vpop.xlane.xlu0 %1964
  %v1966 = vsel %vm229, %v1962, 0.0
  %1967 = vadd.xlane.f32.xlu0 %v1966
  %v1968 = vpop.xlane.xlu0 %1967
  %v1969 = vrcp.pop %v1965
  %v1970 = vrcp.pop %v1968
  %v1971 = vmul.f32 %v1960, %v1969
  %v1972 = vmul.f32 %v1962, %v1970
  %v1973 = vpack.c.bf16 %v1972, %v1971
  %1974 = vrot.lane.b32.xlu0 %v1445, 80
  %v1975 = vpop.permute.xlu0 %1974
  %v1978 = vsel %vm229, %v1973, 0
  %1980 = vmatprep.subr.bf16.mxu0 0
  %1981 = vmatpush1.bf16.msra.mxu0 %v1975
  %1982 = vmatprep.subr.bf16.mxu0 0
  %1983 = vmatpush1.bf16.msra.mxu0 0
  %1984 = vmatprep.subr.bf16.mxu0 0
  %1985 = vmatpush1.bf16.msra.mxu0 0
  %1986 = vmatprep.subr.bf16.mxu0 0
  %1987 = vmatpush1.bf16.msra.mxu0 0
  %1988 = vmatprep.subr.bf16.mxu0 0
  %1989 = vmatpush1.bf16.msra.mxu0 0
  %1990 = vmatprep.subr.bf16.mxu0 0
  %1991 = vmatpush1.bf16.msra.mxu0 0
  %1992 = vmatprep.subr.bf16.mxu0 0
  %1993 = vmatpush1.bf16.msra.mxu0 0
  %1994 = vmatprep.subr.bf16.mxu0 0
  %1995 = vmatpush1.bf16.msra.mxu0 0
  %1996 = vmatprep.subr.bf16.mxu0 0
  %1997 = vmatpush1.bf16.msra.mxu0 0
  %1998 = vmatprep.subr.bf16.mxu0 0
  %1999 = vmatpush1.bf16.msra.mxu0 0
  %2000 = vmatprep.subr.bf16.mxu0 0
  %2001 = vmatpush1.bf16.msra.mxu0 0
  %2002 = vmatprep.subr.bf16.mxu0 0
  %2003 = vmatpush1.bf16.msra.mxu0 0
  %2004 = vmatprep.subr.bf16.mxu0 0
  %2005 = vmatpush1.bf16.msra.mxu0 0
  %2006 = vmatprep.subr.bf16.mxu0 0
  %2007 = vmatpush1.bf16.msra.mxu0 0
  %2008 = vmatprep.subr.bf16.mxu0 0
  %2009 = vmatpush1.bf16.msra.mxu0 0
  %2010 = vmatprep.subr.bf16.mxu0 0
  %2011 = vmatpush1.bf16.msra.mxu0 0
  %2012 = vmatprep.mubr.bf16.mxu0 0
  %2013 = vmatmul.mubr.bf16.gmra.mrb[0].mxu0 %v1978
  %v2014 = vpop.f32.mrb[0].mxu0
  %v2015 = vadd.f32 0.0, %v2014
  %v2016 = vpop.f32.mrb[0].mxu0
  %v2017 = vpop.f32.mrb[0].mxu0
  %v2018 = vadd.f32 0.0, %v2017
  %v2019 = vpop.f32.mrb[0].mxu0
  %2020 = vdwg.mxu0
  %v2021 = vpack.c.bf16 %v2018, %v2015
  %v2024 = vunpack.c.l.b16 %v1365
  %v2025 = vunpack.c.l.b16 %v1366
  %v2026 = vpack.c.b16 %v2025, %v2024
  %v2029 = vsel %vm229, %v2021, 0
  %2031 = vmatprep.subr.bf16.mxu0 0
  %2032 = vmatpush1.bf16.msra.mxu0 %v2026
  %2033 = vmatprep.subr.bf16.mxu0 0
  %2034 = vmatpush1.bf16.msra.mxu0 0
  %2035 = vmatprep.subr.bf16.mxu0 0
  %2036 = vmatpush1.bf16.msra.mxu0 0
  %2037 = vmatprep.subr.bf16.mxu0 0
  %2038 = vmatpush1.bf16.msra.mxu0 0
  %2039 = vmatprep.subr.bf16.mxu0 0
  %2040 = vmatpush1.bf16.msra.mxu0 0
  %2041 = vmatprep.subr.bf16.mxu0 0
  %2042 = vmatpush1.bf16.msra.mxu0 0
  %2043 = vmatprep.subr.bf16.mxu0 0
  %2044 = vmatpush1.bf16.msra.mxu0 0
  %2045 = vmatprep.subr.bf16.mxu0 0
  %2046 = vmatpush1.bf16.msra.mxu0 0
  %2047 = vmatprep.subr.bf16.mxu0 0
  %2048 = vmatpush1.bf16.msra.mxu0 0
  %2049 = vmatprep.subr.bf16.mxu0 0
  %2050 = vmatpush1.bf16.msra.mxu0 0
  %2051 = vmatprep.subr.bf16.mxu0 0
  %2052 = vmatpush1.bf16.msra.mxu0 0
  %2053 = vmatprep.subr.bf16.mxu0 0
  %2054 = vmatpush1.bf16.msra.mxu0 0
  %2055 = vmatprep.subr.bf16.mxu0 0
  %2056 = vmatpush1.bf16.msra.mxu0 0
  %2057 = vmatprep.subr.bf16.mxu0 0
  %2058 = vmatpush1.bf16.msra.mxu0 0
  %2059 = vmatprep.subr.bf16.mxu0 0
  %2060 = vmatpush1.bf16.msra.mxu0 0
  %2061 = vmatprep.subr.bf16.mxu0 0
  %2062 = vmatpush1.bf16.msra.mxu0 0
  %2063 = vmatprep.mubr.bf16.mxu0 0
  %2064 = vmatmul.mubr.bf16.gmra.mrb[0].mxu0 %v2029
  %v2065 = vpop.f32.mrb[0].mxu0
  %v2066 = vadd.f32 0.0, %v2065
  %v2067 = vpop.f32.mrb[0].mxu0
  %v2068 = vpop.f32.mrb[0].mxu0
  %v2069 = vadd.f32 0.0, %v2068
  %v2070 = vpop.f32.mrb[0].mxu0
  %2071 = vdwg.mxu0
  %v2072 = vadd.f32 %v1894, %v2066
  %v2073 = vadd.f32 %v1895, %v2069
  %s2074 = scalar_lea.vmem %s7, 1
  %v2075 = vld [vmem:[%s2074] sm:$0x1]
  %v2077 = vlaneseq
  %v2078 = vshrl.u32 %v2077, 7
  %v2079 = vsub.s32 0, %v2078
  %v2080 = vrot.slane %v2075, %v2079
  %v2082 = vadd.f32 %v2072, %v2080
  %v2083 = vadd.f32 %v2073, %v2080
  %v2084 = vadd.f32 %v2082, %v1247
  %v2085 = vadd.f32 %v2083, %v1248
  %s2086 = scalar_lea.vmem %s8, 1
  %v2087 = vld [vmem:[%s2086] sm:$0x1]
  %s2088 = scalar_lea.vmem %s9, 1
  %v2089 = vld [vmem:[%s2088] sm:$0x1]
  %v2090 = vsel %vm66, %v2084, 0.0
  %2091 = vadd.xlane.f32.xlu0 %v2090
  %v2092 = vpop.xlane.xlu0 %2091
  %v2093 = vsel %vm66, %v2085, 0.0
  %2094 = vadd.xlane.f32.xlu0 %v2093
  %v2095 = vpop.xlane.xlu0 %2094
  %v2096 = vmul.f32 %v2092, %v73
  %v2097 = vmul.f32 %v2095, %v73
  %v2098 = vsub.f32 %v2084, %v2096
  %v2099 = vsub.f32 %v2085, %v2097
  %v2100 = vmul.f32 %v2098, %v2098
  %v2101 = vmul.f32 %v2099, %v2099
  %v2102 = vsel %vm66, %v2100, 0.0
  %2103 = vadd.xlane.f32.xlu0 %v2102
  %v2104 = vpop.xlane.xlu0 %2103
  %v2105 = vsel %vm66, %v2101, 0.0
  %2106 = vadd.xlane.f32.xlu0 %v2105
  %v2107 = vpop.xlane.xlu0 %2106
  %v2108 = vmul.f32 %v2104, %v73
  %v2109 = vmul.f32 %v2107, %v73
  %v2110 = vadd.f32 %v2108, 1e-12
  %v2111 = vadd.f32 %v2109, 1e-12
  %v2112 = vrsqrt.pop %v2110
  %v2113 = vrsqrt.pop %v2111
  %v2114 = vmul.f32 %v2098, %v2112
  %v2115 = vmul.f32 %v2099, %v2113
  %v2117 = vlaneseq
  %v2118 = vshrl.u32 %v2117, 7
  %v2119 = vsub.s32 0, %v2118
  %v2120 = vrot.slane %v2087, %v2119
  %v2122 = vmul.f32 %v2114, %v2120
  %v2123 = vmul.f32 %v2115, %v2120
  %v2125 = vlaneseq
  %v2126 = vshrl.u32 %v2125, 7
  %v2127 = vsub.s32 0, %v2126
  %v2128 = vrot.slane %v2089, %v2127
  %v2130 = vadd.f32 %v2122, %v2128
  %v2131 = vadd.f32 %v2123, %v2128
  %s2132 = scalar_lea.vmem %s10, 32
  %v2133 = vld [vmem:[%s2132] sm:$0xf]
  %v2134 = vld [vmem:[%s2132 + $0x4] sm:$0xf]
  %v2135 = vld [vmem:[%s2132 + $0x8] sm:$0xf]
  %v2136 = vld [vmem:[%s2132 + $0xc] sm:$0xf]
  %v2137 = vld [vmem:[%s2132 + $0x10] sm:$0xf]
  %v2138 = vld [vmem:[%s2132 + $0x14] sm:$0xf]
  %v2139 = vld [vmem:[%s2132 + $0x18] sm:$0xf]
  %v2140 = vld [vmem:[%s2132 + $0x1c] sm:$0xf]
  %v2141 = vpack.c.bf16 %v2131, %v2130
  %s2142 = scalar_lea.vmem %s11, 1
  %v2143 = vld [vmem:[%s2142] sm:$0x1]
  %v2145 = vlaneseq
  %v2146 = vshrl.u32 %v2145, 7
  %v2147 = vsub.s32 0, %v2146
  %v2148 = vrot.slane %v2143, %v2147
  %v2158 = vunpack.c.l.b16 %v2133
  %v2159 = vunpack.c.l.b16 %v2134
  %v2160 = vunpack.c.l.b16 %v2135
  %v2161 = vunpack.c.l.b16 %v2136
  %v2162 = vunpack.c.l.b16 %v2137
  %v2163 = vunpack.c.l.b16 %v2138
  %v2164 = vunpack.c.l.b16 %v2139
  %v2165 = vunpack.c.l.b16 %v2140
  %v2166 = vpack.c.b16 %v2159, %v2158
  %v2167 = vpack.c.b16 %v2161, %v2160
  %v2168 = vpack.c.b16 %v2163, %v2162
  %v2169 = vpack.c.b16 %v2165, %v2164
  %v2175 = vsel %vm66, %v2141, 0
  %2177 = vmatprep.subr.bf16.mxu0 0
  %2178 = vmatpush1.bf16.msra.mxu0 %v2166
  %2179 = vmatprep.subr.bf16.mxu0 0
  %2180 = vmatpush1.bf16.msra.mxu0 %v2167
  %2181 = vmatprep.subr.bf16.mxu0 0
  %2182 = vmatpush1.bf16.msra.mxu0 %v2168
  %2183 = vmatprep.subr.bf16.mxu0 0
  %2184 = vmatpush1.bf16.msra.mxu0 %v2169
  %2185 = vmatprep.subr.bf16.mxu0 0
  %2186 = vmatpush1.bf16.msra.mxu0 0
  %2187 = vmatprep.subr.bf16.mxu0 0
  %2188 = vmatpush1.bf16.msra.mxu0 0
  %2189 = vmatprep.subr.bf16.mxu0 0
  %2190 = vmatpush1.bf16.msra.mxu0 0
  %2191 = vmatprep.subr.bf16.mxu0 0
  %2192 = vmatpush1.bf16.msra.mxu0 0
  %2193 = vmatprep.subr.bf16.mxu0 0
  %2194 = vmatpush1.bf16.msra.mxu0 0
  %2195 = vmatprep.subr.bf16.mxu0 0
  %2196 = vmatpush1.bf16.msra.mxu0 0
  %2197 = vmatprep.subr.bf16.mxu0 0
  %2198 = vmatpush1.bf16.msra.mxu0 0
  %2199 = vmatprep.subr.bf16.mxu0 0
  %2200 = vmatpush1.bf16.msra.mxu0 0
  %2201 = vmatprep.subr.bf16.mxu0 0
  %2202 = vmatpush1.bf16.msra.mxu0 0
  %2203 = vmatprep.subr.bf16.mxu0 0
  %2204 = vmatpush1.bf16.msra.mxu0 0
  %2205 = vmatprep.subr.bf16.mxu0 0
  %2206 = vmatpush1.bf16.msra.mxu0 0
  %2207 = vmatprep.subr.bf16.mxu0 0
  %2208 = vmatpush1.bf16.msra.mxu0 0
  %2209 = vmatprep.mubr.bf16.mxu0 0
  %2210 = vmatmul.mubr.bf16.gmra.mrb[0].mxu0 %v2175
  %v2211 = vpop.f32.mrb[0].mxu0
  %v2212 = vadd.f32 %v2148, %v2211
  %v2213 = vpop.f32.mrb[0].mxu0
  %v2214 = vpop.f32.mrb[0].mxu0
  %v2215 = vadd.f32 %v2148, %v2214
  %v2216 = vpop.f32.mrb[0].mxu0
  %2217 = vdwg.mxu0
  %v2218 = vmul.f32 %v2212, 0.5
  %v2219 = vmul.f32 %v2215, 0.5
  %v2220 = vmul.f32 %v2212, 0.044715
  %v2221 = vmul.f32 %v2215, 0.044715
  %v2222 = vmul.f32 %v2220, %v2212
  %v2223 = vmul.f32 %v2221, %v2215
  %v2224 = vmul.f32 %v2222, %v2212
  %v2225 = vmul.f32 %v2223, %v2215
  %v2226 = vadd.f32 %v2212, %v2224
  %v2227 = vadd.f32 %v2215, %v2225
  %v2228 = vmul.f32 %v2226, 0.7978846
  %v2229 = vmul.f32 %v2227, 0.7978846
  %v2230 = vtanh.pop %v2228
  %v2231 = vtanh.pop %v2229
  %v2232 = vadd.f32 %v2230, 1.0
  %v2233 = vadd.f32 %v2231, 1.0
  %v2234 = vmul.f32 %v2218, %v2232
  %v2235 = vmul.f32 %v2219, %v2233
  %s2236 = scalar_lea.vmem %s12, 64
  %v2237 = vld [vmem:[%s2236] sm:$0xf]
  %v2238 = vld [vmem:[%s2236 + $0x4] sm:$0xf]
  %v2239 = vld [vmem:[%s2236 + $0x8] sm:$0xf]
  %v2240 = vld [vmem:[%s2236 + $0xc] sm:$0xf]
  %v2241 = vld [vmem:[%s2236 + $0x10] sm:$0xf]
  %v2242 = vld [vmem:[%s2236 + $0x14] sm:$0xf]
  %v2243 = vld [vmem:[%s2236 + $0x18] sm:$0xf]
  %v2244 = vld [vmem:[%s2236 + $0x1c] sm:$0xf]
  %v2245 = vld [vmem:[%s2236 + $0x20] sm:$0xf]
  %v2246 = vld [vmem:[%s2236 + $0x24] sm:$0xf]
  %v2247 = vld [vmem:[%s2236 + $0x28] sm:$0xf]
  %v2248 = vld [vmem:[%s2236 + $0x2c] sm:$0xf]
  %v2249 = vld [vmem:[%s2236 + $0x30] sm:$0xf]
  %v2250 = vld [vmem:[%s2236 + $0x34] sm:$0xf]
  %v2251 = vld [vmem:[%s2236 + $0x38] sm:$0xf]
  %v2252 = vld [vmem:[%s2236 + $0x3c] sm:$0xf]
  %v2253 = vpack.c.bf16 %v2235, %v2234
  %s2254 = scalar_lea.vmem %s13, 1
  %v2255 = vld [vmem:[%s2254] sm:$0x1]
  %v2257 = vlaneseq
  %v2258 = vshrl.u32 %v2257, 7
  %v2259 = vsub.s32 0, %v2258
  %v2260 = vrot.slane %v2255, %v2259
  %v2278 = vunpack.c.l.b16 %v2237
  %v2279 = vunpack.c.l.b16 %v2238
  %v2280 = vunpack.c.l.b16 %v2239
  %v2281 = vunpack.c.l.b16 %v2240
  %v2282 = vunpack.c.l.b16 %v2241
  %v2283 = vunpack.c.l.b16 %v2242
  %v2284 = vunpack.c.l.b16 %v2243
  %v2285 = vunpack.c.l.b16 %v2244
  %v2286 = vunpack.c.l.b16 %v2245
  %v2287 = vunpack.c.l.b16 %v2246
  %v2288 = vunpack.c.l.b16 %v2247
  %v2289 = vunpack.c.l.b16 %v2248
  %v2290 = vunpack.c.l.b16 %v2249
  %v2291 = vunpack.c.l.b16 %v2250
  %v2292 = vunpack.c.l.b16 %v2251
  %v2293 = vunpack.c.l.b16 %v2252
  %v2294 = vpack.c.b16 %v2279, %v2278
  %v2295 = vpack.c.b16 %v2281, %v2280
  %v2296 = vpack.c.b16 %v2283, %v2282
  %v2297 = vpack.c.b16 %v2285, %v2284
  %v2298 = vpack.c.b16 %v2287, %v2286
  %v2299 = vpack.c.b16 %v2289, %v2288
  %v2300 = vpack.c.b16 %v2291, %v2290
  %v2301 = vpack.c.b16 %v2293, %v2292
  %2310 = vmatprep.subr.bf16.mxu0 0
  %2311 = vmatpush1.bf16.msra.mxu0 %v2294
  %2312 = vmatprep.subr.bf16.mxu0 0
  %2313 = vmatpush1.bf16.msra.mxu0 %v2295
  %2314 = vmatprep.subr.bf16.mxu0 0
  %2315 = vmatpush1.bf16.msra.mxu0 %v2296
  %2316 = vmatprep.subr.bf16.mxu0 0
  %2317 = vmatpush1.bf16.msra.mxu0 %v2297
  %2318 = vmatprep.subr.bf16.mxu0 0
  %2319 = vmatpush1.bf16.msra.mxu0 %v2298
  %2320 = vmatprep.subr.bf16.mxu0 0
  %2321 = vmatpush1.bf16.msra.mxu0 %v2299
  %2322 = vmatprep.subr.bf16.mxu0 0
  %2323 = vmatpush1.bf16.msra.mxu0 %v2300
  %2324 = vmatprep.subr.bf16.mxu0 0
  %2325 = vmatpush1.bf16.msra.mxu0 %v2301
  %2326 = vmatprep.subr.bf16.mxu0 0
  %2327 = vmatpush1.bf16.msra.mxu0 0
  %2328 = vmatprep.subr.bf16.mxu0 0
  %2329 = vmatpush1.bf16.msra.mxu0 0
  %2330 = vmatprep.subr.bf16.mxu0 0
  %2331 = vmatpush1.bf16.msra.mxu0 0
  %2332 = vmatprep.subr.bf16.mxu0 0
  %2333 = vmatpush1.bf16.msra.mxu0 0
  %2334 = vmatprep.subr.bf16.mxu0 0
  %2335 = vmatpush1.bf16.msra.mxu0 0
  %2336 = vmatprep.subr.bf16.mxu0 0
  %2337 = vmatpush1.bf16.msra.mxu0 0
  %2338 = vmatprep.subr.bf16.mxu0 0
  %2339 = vmatpush1.bf16.msra.mxu0 0
  %2340 = vmatprep.subr.bf16.mxu0 0
  %2341 = vmatpush1.bf16.msra.mxu0 0
  %2342 = vmatprep.mubr.bf16.mxu0 0
  %2343 = vmatmul.mubr.bf16.gmra.mrb[0].mxu0 %v2253
  %v2344 = vpop.f32.mrb[0].mxu0
  %v2345 = vadd.f32 %v2260, %v2344
  %v2346 = vpop.f32.mrb[0].mxu0
  %v2347 = vpop.f32.mrb[0].mxu0
  %v2348 = vadd.f32 %v2260, %v2347
  %v2349 = vpop.f32.mrb[0].mxu0
  %2350 = vdwg.mxu0
  %v2351 = vadd.f32 %v2345, %v2130
  %v2352 = vadd.f32 %v2348, %v2131
  %s2353 = scalar_lea.vmem %s14, 1
  %v2354 = vld [vmem:[%s2353] sm:$0x1]
  %s2355 = scalar_lea.vmem %s15, 1
  %v2356 = vld [vmem:[%s2355] sm:$0x1]
  %v2357 = vsel %vm66, %v2351, 0.0
  %2358 = vadd.xlane.f32.xlu0 %v2357
  %v2359 = vpop.xlane.xlu0 %2358
  %v2360 = vsel %vm66, %v2352, 0.0
  %2361 = vadd.xlane.f32.xlu0 %v2360
  %v2362 = vpop.xlane.xlu0 %2361
  %v2363 = vmul.f32 %v2359, %v73
  %v2364 = vmul.f32 %v2362, %v73
  %v2365 = vsub.f32 %v2351, %v2363
  %v2366 = vsub.f32 %v2352, %v2364
  %v2367 = vmul.f32 %v2365, %v2365
  %v2368 = vmul.f32 %v2366, %v2366
  %v2369 = vsel %vm66, %v2367, 0.0
  %2370 = vadd.xlane.f32.xlu0 %v2369
  %v2371 = vpop.xlane.xlu0 %2370
  %v2372 = vsel %vm66, %v2368, 0.0
  %2373 = vadd.xlane.f32.xlu0 %v2372
  %v2374 = vpop.xlane.xlu0 %2373
  %v2375 = vmul.f32 %v2371, %v73
  %v2376 = vmul.f32 %v2374, %v73
  %v2377 = vadd.f32 %v2375, 1e-12
  %v2378 = vadd.f32 %v2376, 1e-12
  %v2379 = vrsqrt.pop %v2377
  %v2380 = vrsqrt.pop %v2378
  %v2381 = vmul.f32 %v2365, %v2379
  %v2382 = vmul.f32 %v2366, %v2380
  %v2384 = vlaneseq
  %v2385 = vshrl.u32 %v2384, 7
  %v2386 = vsub.s32 0, %v2385
  %v2387 = vrot.slane %v2354, %v2386
  %v2389 = vmul.f32 %v2381, %v2387
  %v2390 = vmul.f32 %v2382, %v2387
  %v2392 = vlaneseq
  %v2393 = vshrl.u32 %v2392, 7
  %v2394 = vsub.s32 0, %v2393
  %v2395 = vrot.slane %v2356, %v2394
  %v2397 = vadd.f32 %v2389, %v2395
  %v2398 = vadd.f32 %v2390, %v2395
  %v2399 = vld [vmem:[%s16] sm:$0xf]
  %v2400 = vld [vmem:[%s16 + $0x4] sm:$0xf]
  %v2401 = vld [vmem:[%s16 + $0x8] sm:$0xf]
  %v2402 = vld [vmem:[%s16 + $0xc] sm:$0xf]
  %v2403 = vld [vmem:[%s16 + $0x10] sm:$0xf]
  %v2404 = vld [vmem:[%s16 + $0x14] sm:$0xf]
  %v2405 = vld [vmem:[%s16 + $0x18] sm:$0xf]
  %v2406 = vld [vmem:[%s16 + $0x1c] sm:$0xf]
  %v2407 = vpack.c.bf16 %v2398, %v2397
  %v2408 = vld [vmem:[%s17] sm:$0x1]
  %v2410 = vlaneseq
  %v2411 = vshrl.u32 %v2410, 7
  %v2412 = vsub.s32 0, %v2411
  %v2413 = vrot.slane %v2408, %v2412
  %v2423 = vunpack.c.l.b16 %v2399
  %v2424 = vunpack.c.l.b16 %v2400
  %v2425 = vunpack.c.l.b16 %v2401
  %v2426 = vunpack.c.l.b16 %v2402
  %v2427 = vunpack.c.l.b16 %v2403
  %v2428 = vunpack.c.l.b16 %v2404
  %v2429 = vunpack.c.l.b16 %v2405
  %v2430 = vunpack.c.l.b16 %v2406
  %v2431 = vpack.c.b16 %v2424, %v2423
  %v2432 = vpack.c.b16 %v2426, %v2425
  %v2433 = vpack.c.b16 %v2428, %v2427
  %v2434 = vpack.c.b16 %v2430, %v2429
  %v2440 = vsel %vm66, %v2407, 0
  %2442 = vmatprep.subr.bf16.mxu0 0
  %2443 = vmatpush1.bf16.msra.mxu0 %v2431
  %2444 = vmatprep.subr.bf16.mxu0 0
  %2445 = vmatpush1.bf16.msra.mxu0 %v2432
  %2446 = vmatprep.subr.bf16.mxu0 0
  %2447 = vmatpush1.bf16.msra.mxu0 %v2433
  %2448 = vmatprep.subr.bf16.mxu0 0
  %2449 = vmatpush1.bf16.msra.mxu0 %v2434
  %2450 = vmatprep.subr.bf16.mxu0 0
  %2451 = vmatpush1.bf16.msra.mxu0 0
  %2452 = vmatprep.subr.bf16.mxu0 0
  %2453 = vmatpush1.bf16.msra.mxu0 0
  %2454 = vmatprep.subr.bf16.mxu0 0
  %2455 = vmatpush1.bf16.msra.mxu0 0
  %2456 = vmatprep.subr.bf16.mxu0 0
  %2457 = vmatpush1.bf16.msra.mxu0 0
  %2458 = vmatprep.subr.bf16.mxu0 0
  %2459 = vmatpush1.bf16.msra.mxu0 0
  %2460 = vmatprep.subr.bf16.mxu0 0
  %2461 = vmatpush1.bf16.msra.mxu0 0
  %2462 = vmatprep.subr.bf16.mxu0 0
  %2463 = vmatpush1.bf16.msra.mxu0 0
  %2464 = vmatprep.subr.bf16.mxu0 0
  %2465 = vmatpush1.bf16.msra.mxu0 0
  %2466 = vmatprep.subr.bf16.mxu0 0
  %2467 = vmatpush1.bf16.msra.mxu0 0
  %2468 = vmatprep.subr.bf16.mxu0 0
  %2469 = vmatpush1.bf16.msra.mxu0 0
  %2470 = vmatprep.subr.bf16.mxu0 0
  %2471 = vmatpush1.bf16.msra.mxu0 0
  %2472 = vmatprep.subr.bf16.mxu0 0
  %2473 = vmatpush1.bf16.msra.mxu0 0
  %2474 = vmatprep.mubr.bf16.mxu0 0
  %2475 = vmatmul.mubr.bf16.gmra.mrb[0].mxu0 %v2440
  %v2476 = vpop.f32.mrb[0].mxu0
  %v2477 = vadd.f32 %v2413, %v2476
  %v2478 = vpop.f32.mrb[0].mxu0
  %v2479 = vpop.f32.mrb[0].mxu0
  %v2480 = vadd.f32 %v2413, %v2479
  %v2481 = vpop.f32.mrb[0].mxu0
  %2482 = vdwg.mxu0
  %2483 = vst [vmem:[%s18] sm:$0xff] %v2477
  %2484 = vst [vmem:[%s18 + $0x8] sm:$0xff] %v2480
  // Predicated region
  $region74: #{baseline_forward.1} parent=0 // pred_check
    _
  $region75: #{baseline_forward.1} parent=0 // pred_check_branch
    %2486 = sbr.rel (0) target = $region77
  $region76: #{baseline_forward.1} parent=0 // pred_region
    _
  $region77: #{baseline_forward.1} parent=0 // pred_fallthru
    _
  // Predicated region
  $region78: #{baseline_forward.1} parent=0 // pred_check
    _
  $region79: #{baseline_forward.1} parent=0 // pred_check_branch
    %2488 = sbr.rel (0) target = $region81
  $region80: #{baseline_forward.1} parent=0 // pred_region
    _
  $region81: #{baseline_forward.1} parent=0 // pred_fallthru
    _

</llo_original>
